<compile_context>
chip_gen: v5e
topology: v5e:2x2
jax: 0.10.0
libtpu: 0.0.40
codegen_flags: <defaults>
</compile_context>

<pallas_src>
import jax
import jax.numpy as jnp
from jax.experimental import pallas as pl
from jax.experimental.pallas import tpu as pltpu

# ---- small model config (BERT-like, scaled down) ----------------------------
B, S = 2, 8            # batch, seq
H = 32                 # hidden size
NH = 4                 # attention heads
HD = H // NH           # head dim
I = 64                 # FFN intermediate size
V = 128                # vocab size
L = 2                  # transformer layers
MAX_POS = 512
LN_EPS = 1e-12
ATT_SCALE = 1.0 / float(HD) ** 0.5

N_KERNEL_INPUTS = 25


# ---- in-kernel helpers --------------------------------------------------------
def _gelu(x):
    # tanh-approx GELU
    # TODO(synk): HF BERT uses erf-GELU; tanh approximation may flip argmax on near-ties.
    return 0.5 * x * (1.0 + jnp.tanh(0.7978845608028654 * (x + 0.044715 * x * x * x)))


def _ln(x, g, b):
    mu = jnp.mean(x, axis=-1, keepdims=True)
    xc = x - mu
    var = jnp.mean(xc * xc, axis=-1, keepdims=True)
    return xc * jax.lax.rsqrt(var + LN_EPS) * g + b


def _mm(x, w):
    # bf16 MXU matmul with f32 accumulation
    return jnp.dot(x.astype(jnp.bfloat16), w.astype(jnp.bfloat16),
                   preferred_element_type=jnp.float32)


# ---- the single fused kernel --------------------------------------------------
def _fused_forward_kernel(
    ids_ref, tt_ref, amask_ref,
    word_emb_ref, pos_ref, type_emb_ref, emb_ln_g_ref, emb_ln_b_ref,
    w_att_ref, b_att_ref, wo_ref, bo_ref, ln1_g_ref, ln1_b_ref,
    wff1_ref, bff1_ref, wff2_ref, bff2_ref, ln2_g_ref, ln2_b_ref,
    head_w_ref, head_b_ref, head_ln_g_ref, head_ln_b_ref, dec_b_ref,
    out_ref,
    ctx_scr,
):
    # ---- embeddings: word via one-hot MXU matmul (V == 128 lanes), type via select,
    #      position via precomputed [B*S, H] slab.
    ids = ids_ref[...]                                               # [B*S, 1] int32
    vocab_iota = jax.lax.broadcasted_iota(jnp.int32, (B * S, V), 1)
    onehot = (ids == vocab_iota).astype(jnp.bfloat16)                # [B*S, V]
    word = jnp.dot(onehot, word_emb_ref[...].astype(jnp.bfloat16),
                   preferred_element_type=jnp.float32)               # [B*S, H]
    tt = tt_ref[...]                                                 # [B*S, 1] int32
    type_e = jnp.where(tt == 0, type_emb_ref[0], type_emb_ref[1])    # [B*S, H]
    x = word + pos_ref[...] + type_e
    x = _ln(x, emb_ln_g_ref[...], emb_ln_b_ref[...])

    # additive attention mask rows (0 where attended, -1e9 where padded), hoisted
    mask_rows = [jnp.where(amask_ref[b] > 0, 0.0, -1e9) for b in range(B)]   # each [1, S]

    # ---- transformer layers (static Python loops; everything stays in VMEM/vregs)
    for l in range(L):
        attn = jnp.zeros((B * S, H), jnp.float32)
        for h in range(NH):
            qh = _mm(x, w_att_ref[l, h]) + b_att_ref[l, h]                   # [B*S, HD]
            kh = _mm(x, w_att_ref[l, NH + h]) + b_att_ref[l, NH + h]
            vh = _mm(x, w_att_ref[l, 2 * NH + h]) + b_att_ref[l, 2 * NH + h]
            for b in range(B):
                r0 = b * S
                q = qh[r0:r0 + S, :]
                k = kh[r0:r0 + S, :]
                v = vh[r0:r0 + S, :]
                s = jax.lax.dot_general(q, k, (((1,), (1,)), ((), ())),
                                        preferred_element_type=jnp.float32)
                s = s * ATT_SCALE + mask_rows[b]
                smax = jnp.max(s, axis=-1, keepdims=True)
                p = jnp.exp(s - smax)
                p = p * pl.reciprocal(jnp.sum(p, axis=-1, keepdims=True), approx=True)
                ctx_scr[r0:r0 + S, :] = jnp.dot(p, v, preferred_element_type=jnp.float32)
            # fold this head's output projection into the accumulator
            attn = attn + _mm(ctx_scr[...], wo_ref[l, h])                    # [B*S, H]
        attn = attn + bo_ref[l]
        x = _ln(attn + x, ln1_g_ref[l], ln1_b_ref[l])

        ff = _gelu(_mm(x, wff1_ref[l]) + bff1_ref[l])
        ff = _mm(ff, wff2_ref[l]) + bff2_ref[l]
        x = _ln(ff + x, ln2_g_ref[l], ln2_b_ref[l])

    # ---- MLM head: transform -> gelu -> LN -> tied decoder -> fused argmax
    hh = _gelu(_mm(x, head_w_ref[...]) + head_b_ref[...])
    hh = _ln(hh, head_ln_g_ref[...], head_ln_b_ref[...])
    # tied decoder: contract hidden axis of word_emb directly (no transpose materialized)
    logits = jax.lax.dot_general(
        hh.astype(jnp.bfloat16), word_emb_ref[...].astype(jnp.bfloat16),
        (((1,), (1,)), ((), ())), preferred_element_type=jnp.float32) + dec_b_ref[...]
    mmax = jnp.max(logits, axis=-1, keepdims=True)
    lane = jax.lax.broadcasted_iota(jnp.int32, logits.shape, 1)
    cand = jnp.where(logits == mmax, lane, jnp.int32(V))
    out_ref[...] = jnp.min(cand, axis=-1, keepdims=True)   # first-max index (torch semantics)
    # TODO(synk): torch.argmax returns int64; int32 used here (JAX TPU default).


_fused_forward = pl.pallas_call(
    _fused_forward_kernel,
    out_shape=jax.ShapeDtypeStruct((B * S, 1), jnp.int32),
    in_specs=[pl.BlockSpec(memory_space=pltpu.MemorySpace.VMEM)] * N_KERNEL_INPUTS,
    out_specs=pl.BlockSpec(memory_space=pltpu.MemorySpace.VMEM),
    scratch_shapes=[pltpu.VMEM((B * S, HD), jnp.float32)],   # per-head context buffer
)
# NOTE(scale): at real MacBERT size (H=768, S=512, V~21128) this single-block
# design would need a vocab grid axis ("arbitrary"), streamed argmax and a
# row-parallel axis for v7x dual-TC, plus vmem_limit_bytes — not needed at toy size.


# ---- parameters (deterministic synthetic init) -------------------------------
def init_params(key):
    keys = iter(jax.random.split(key, 64))

    def p(*shape):
        return (0.02 * jax.random.normal(next(keys), shape)).astype(jnp.float32)

    def ones(*shape):
        return jnp.ones(shape, jnp.float32)

    def zeros(*shape):
        return jnp.zeros(shape, jnp.float32)

    def head_major(w):                 # [H, H] -> [NH, H, HD]
        return w.reshape(H, NH, HD).transpose(1, 0, 2)

    w_att, b_att, wo, bo = [], [], [], []
    ln1_g, ln1_b, ln2_g, ln2_b = [], [], [], []
    wff1, bff1, wff2, bff2 = [], [], [], []
    for _ in range(L):
        wq, wk, wv = p(H, H), p(H, H), p(H, H)
        w_att.append(jnp.concatenate(
            [head_major(wq), head_major(wk), head_major(wv)], axis=0))   # [3*NH, H, HD]
        b_att.append(zeros(3 * NH, 1, HD))
        wo.append(p(H, H).reshape(NH, HD, H))                            # head-major output proj
        bo.append(zeros(1, H))
        ln1_g.append(ones(1, H)); ln1_b.append(zeros(1, H))
        wff1.append(p(H, I)); bff1.append(zeros(1, I))
        wff2.append(p(I, H)); bff2.append(zeros(1, H))
        ln2_g.append(ones(1, H)); ln2_b.append(zeros(1, H))

    stk = lambda xs: jnp.stack(xs, axis=0)

    word_emb = p(V, H)
    pos_emb = p(MAX_POS, H)
    type_emb = p(2, H)

    return dict(
        word_emb=word_emb,                                   # also the tied decoder weight
        pos_slab=jnp.tile(pos_emb[:S], (B, 1)),              # [B*S, H], built once at init
        type_emb=type_emb.reshape(2, 1, H),
        emb_ln_g=ones(1, H), emb_ln_b=zeros(1, H),
        w_att=stk(w_att), b_att=stk(b_att),
        wo=stk(wo), bo=stk(bo),
        ln1_g=stk(ln1_g), ln1_b=stk(ln1_b),
        wff1=stk(wff1), bff1=stk(bff1),
        wff2=stk(wff2), bff2=stk(bff2),
        ln2_g=stk(ln2_g), ln2_b=stk(ln2_b),
        head_w=p(H, H), head_b=zeros(1, H),
        head_ln_g=ones(1, H), head_ln_b=zeros(1, H),
        decoder_b=zeros(1, V),
    )


# ---- forward (mirrors macbert4cscExport.forward) ------------------------------
def forward(params, input_ids, token_type_ids, attention_mask):
    ids = input_ids.astype(jnp.int32).reshape(B * S, 1)
    tt = token_type_ids.astype(jnp.int32).reshape(B * S, 1)
    am = attention_mask.astype(jnp.int32).reshape(B, 1, S)
    out = _fused_forward(
        ids, tt, am,
        params["word_emb"], params["pos_slab"], params["type_emb"],
        params["emb_ln_g"], params["emb_ln_b"],
        params["w_att"], params["b_att"], params["wo"], params["bo"],
        params["ln1_g"], params["ln1_b"],
        params["wff1"], params["bff1"], params["wff2"], params["bff2"],
        params["ln2_g"], params["ln2_b"],
        params["head_w"], params["head_b"],
        params["head_ln_g"], params["head_ln_b"],
        params["decoder_b"],
    )
    return out.reshape(B, S)


# ---- main ---------------------------------------------------------------------
if __name__ == "__main__":
    key = jax.random.PRNGKey(0)
    pkey, ikey = jax.random.split(key)
    params = init_params(pkey)

    input_ids = jax.random.randint(ikey, (B, S), 0, V, dtype=jnp.int32)
    token_type_ids = jnp.zeros((B, S), dtype=jnp.int32)
    attention_mask = jnp.array([[1] * S, [1] * (S - 2) + [0] * 2], dtype=jnp.int32)

    out = jax.jit(forward)(params, input_ids, token_type_ids, attention_mask)
    jax.block_until_ready(out)
    assert out.shape == (B, S)
    print("KERNEL_OK")
</pallas_src>

<mosaic_0001>
module attributes {stable_mosaic.version = 11 : i64} {
  func.func @_fused_forward_kernel(%arg0: memref<16x1xi32, #tpu.memory_space<vmem>>, %arg1: memref<16x1xi32, #tpu.memory_space<vmem>>, %arg2: memref<2x1x8xi32, #tpu.memory_space<vmem>>, %arg3: memref<128x32xf32, #tpu.memory_space<vmem>>, %arg4: memref<16x32xf32, #tpu.memory_space<vmem>>, %arg5: memref<2x1x32xf32, #tpu.memory_space<vmem>>, %arg6: memref<1x32xf32, #tpu.memory_space<vmem>>, %arg7: memref<1x32xf32, #tpu.memory_space<vmem>>, %arg8: memref<2x12x32x8xf32, #tpu.memory_space<vmem>>, %arg9: memref<2x12x1x8xf32, #tpu.memory_space<vmem>>, %arg10: memref<2x4x8x32xf32, #tpu.memory_space<vmem>>, %arg11: memref<2x1x32xf32, #tpu.memory_space<vmem>>, %arg12: memref<2x1x32xf32, #tpu.memory_space<vmem>>, %arg13: memref<2x1x32xf32, #tpu.memory_space<vmem>>, %arg14: memref<2x32x64xf32, #tpu.memory_space<vmem>>, %arg15: memref<2x1x64xf32, #tpu.memory_space<vmem>>, %arg16: memref<2x64x32xf32, #tpu.memory_space<vmem>>, %arg17: memref<2x1x32xf32, #tpu.memory_space<vmem>>, %arg18: memref<2x1x32xf32, #tpu.memory_space<vmem>>, %arg19: memref<2x1x32xf32, #tpu.memory_space<vmem>>, %arg20: memref<32x32xf32, #tpu.memory_space<vmem>>, %arg21: memref<1x32xf32, #tpu.memory_space<vmem>>, %arg22: memref<1x32xf32, #tpu.memory_space<vmem>>, %arg23: memref<1x32xf32, #tpu.memory_space<vmem>>, %arg24: memref<1x128xf32, #tpu.memory_space<vmem>>, %arg25: memref<16x1xi32, #tpu.memory_space<vmem>>, %arg26: memref<16x8xf32, #tpu.memory_space<vmem>>) attributes {dimension_semantics = [], scalar_prefetch = 0 : i64, scratch_operands = 1 : i64, tpu.core_type = #tpu.core_type<tc>} {
    %c0 = arith.constant 0 : index
    %c0_0 = arith.constant 0 : index
    %0 = vector.load %arg0[%c0, %c0_0] : memref<16x1xi32, #tpu.memory_space<vmem>>, vector<16x1xi32>
    %1 = tpu.iota {dimensions = array<i32: 1>} : vector<16x128xi32>
    %2 = vector.broadcast %0 : vector<16x1xi32> to vector<16x128xi32>
    %3 = arith.cmpi eq, %2, %1 : vector<16x128xi32>
    %4 = arith.extui %3 : vector<16x128xi1> to vector<16x128xi32>
    %5 = arith.sitofp %4 : vector<16x128xi32> to vector<16x128xf32>
    %6 = arith.truncf %5 : vector<16x128xf32> to vector<16x128xbf16>
    %c0_1 = arith.constant 0 : index
    %c0_2 = arith.constant 0 : index
    %7 = vector.load %arg3[%c0_1, %c0_2] : memref<128x32xf32, #tpu.memory_space<vmem>>, vector<128x32xf32>
    %8 = arith.truncf %7 : vector<128x32xf32> to vector<128x32xbf16>
    %cst = arith.constant dense<0.000000e+00> : vector<16x32xf32>
    %9 = tpu.matmul %6, %8, %cst {dimension_numbers = #tpu.dot_dimension_numbers<[1], [0], [0], [1], [0, 0, 1, 1], [], []>} : vector<16x128xbf16>, vector<128x32xbf16>, vector<16x32xf32> -> vector<16x32xf32>
    %c0_3 = arith.constant 0 : index
    %c0_4 = arith.constant 0 : index
    %10 = vector.load %arg1[%c0_3, %c0_4] : memref<16x1xi32, #tpu.memory_space<vmem>>, vector<16x1xi32>
    %c0_i32 = arith.constant 0 : i32
    %11 = vector.broadcast %c0_i32 : i32 to vector<16x1xi32>
    %12 = arith.cmpi eq, %10, %11 : vector<16x1xi32>
    %c0_5 = arith.constant 0 : index
    %c0_6 = arith.constant 0 : index
    %c0_7 = arith.constant 0 : index
    %13 = vector.load %arg5[%c0_5, %c0_6, %c0_7] : memref<2x1x32xf32, #tpu.memory_space<vmem>>, vector<1x1x32xf32>
    %14 = vector.shape_cast %13 : vector<1x1x32xf32> to vector<1x32xf32>
    %c1 = arith.constant 1 : index
    %c0_8 = arith.constant 0 : index
    %c0_9 = arith.constant 0 : index
    %15 = vector.load %arg5[%c1, %c0_8, %c0_9] : memref<2x1x32xf32, #tpu.memory_space<vmem>>, vector<1x1x32xf32>
    %16 = vector.shape_cast %15 : vector<1x1x32xf32> to vector<1x32xf32>
    %17 = vector.shape_cast %12 : vector<16x1xi1> to vector<16x1xi1>
    %18 = vector.broadcast %17 : vector<16x1xi1> to vector<16x32xi1>
    %19 = vector.shape_cast %14 : vector<1x32xf32> to vector<1x32xf32>
    %20 = vector.broadcast %19 : vector<1x32xf32> to vector<16x32xf32>
    %21 = vector.shape_cast %16 : vector<1x32xf32> to vector<1x32xf32>
    %22 = vector.broadcast %21 : vector<1x32xf32> to vector<16x32xf32>
    %23 = arith.select %18, %20, %22 : vector<16x32xi1>, vector<16x32xf32>
    %c0_10 = arith.constant 0 : index
    %c0_11 = arith.constant 0 : index
    %24 = vector.load %arg4[%c0_10, %c0_11] : memref<16x32xf32, #tpu.memory_space<vmem>>, vector<16x32xf32>
    %25 = arith.addf %9, %24 : vector<16x32xf32>
    %26 = arith.addf %25, %23 : vector<16x32xf32>
    %c0_12 = arith.constant 0 : index
    %c0_13 = arith.constant 0 : index
    %27 = vector.load %arg6[%c0_12, %c0_13] : memref<1x32xf32, #tpu.memory_space<vmem>>, vector<1x32xf32>
    %c0_14 = arith.constant 0 : index
    %c0_15 = arith.constant 0 : index
    %28 = vector.load %arg7[%c0_14, %c0_15] : memref<1x32xf32, #tpu.memory_space<vmem>>, vector<1x32xf32>
    %cst_16 = arith.constant dense<0.000000e+00> : vector<16xf32>
    %29 = vector.multi_reduction <add>, %26, %cst_16 [1] : vector<16x32xf32> to vector<16xf32>
    %30 = vector.shape_cast %29 : vector<16xf32> to vector<16x1xf32>
    %cst_17 = arith.constant 3.200000e+01 : f32
    %31 = vector.broadcast %cst_17 : f32 to vector<16x1xf32>
    %32 = arith.divf %30, %31 : vector<16x1xf32>
    %33 = vector.broadcast %32 : vector<16x1xf32> to vector<16x32xf32>
    %34 = arith.subf %26, %33 : vector<16x32xf32>
    %35 = arith.mulf %34, %34 : vector<16x32xf32>
    %cst_18 = arith.constant dense<0.000000e+00> : vector<16xf32>
    %36 = vector.multi_reduction <add>, %35, %cst_18 [1] : vector<16x32xf32> to vector<16xf32>
    %37 = vector.shape_cast %36 : vector<16xf32> to vector<16x1xf32>
    %cst_19 = arith.constant 3.200000e+01 : f32
    %38 = vector.broadcast %cst_19 : f32 to vector<16x1xf32>
    %39 = arith.divf %37, %38 : vector<16x1xf32>
    %cst_20 = arith.constant 9.99999996E-13 : f32
    %40 = vector.broadcast %cst_20 : f32 to vector<16x1xf32>
    %41 = arith.addf %39, %40 : vector<16x1xf32>
    %42 = math.rsqrt %41 : vector<16x1xf32>
    %43 = vector.broadcast %42 : vector<16x1xf32> to vector<16x32xf32>
    %44 = arith.mulf %34, %43 : vector<16x32xf32>
    %45 = vector.broadcast %27 : vector<1x32xf32> to vector<16x32xf32>
    %46 = arith.mulf %44, %45 : vector<16x32xf32>
    %47 = vector.broadcast %28 : vector<1x32xf32> to vector<16x32xf32>
    %48 = arith.addf %46, %47 : vector<16x32xf32>
    %c0_21 = arith.constant 0 : index
    %c0_22 = arith.constant 0 : index
    %c0_23 = arith.constant 0 : index
    %49 = vector.load %arg2[%c0_21, %c0_22, %c0_23] : memref<2x1x8xi32, #tpu.memory_space<vmem>>, vector<1x1x8xi32>
    %50 = vector.shape_cast %49 : vector<1x1x8xi32> to vector<1x8xi32>
    %c0_i32_24 = arith.constant 0 : i32
    %51 = vector.broadcast %c0_i32_24 : i32 to vector<1x8xi32>
    %52 = arith.cmpi sgt, %50, %51 : vector<1x8xi32>
    %cst_25 = arith.constant 0.000000e+00 : f32
    %cst_26 = arith.constant -1.000000e+09 : f32
    %53 = vector.broadcast %cst_25 : f32 to vector<1x8xf32>
    %54 = vector.broadcast %cst_26 : f32 to vector<1x8xf32>
    %55 = arith.select %52, %53, %54 : vector<1x8xi1>, vector<1x8xf32>
    %c1_27 = arith.constant 1 : index
    %c0_28 = arith.constant 0 : index
    %c0_29 = arith.constant 0 : index
    %56 = vector.load %arg2[%c1_27, %c0_28, %c0_29] : memref<2x1x8xi32, #tpu.memory_space<vmem>>, vector<1x1x8xi32>
    %57 = vector.shape_cast %56 : vector<1x1x8xi32> to vector<1x8xi32>
    %c0_i32_30 = arith.constant 0 : i32
    %58 = vector.broadcast %c0_i32_30 : i32 to vector<1x8xi32>
    %59 = arith.cmpi sgt, %57, %58 : vector<1x8xi32>
    %cst_31 = arith.constant 0.000000e+00 : f32
    %cst_32 = arith.constant -1.000000e+09 : f32
    %60 = vector.broadcast %cst_31 : f32 to vector<1x8xf32>
    %61 = vector.broadcast %cst_32 : f32 to vector<1x8xf32>
    %62 = arith.select %59, %60, %61 : vector<1x8xi1>, vector<1x8xf32>
    %cst_33 = arith.constant 0.000000e+00 : f32
    %63 = vector.broadcast %cst_33 : f32 to vector<16x32xf32>
    %c0_34 = arith.constant 0 : index
    %c0_35 = arith.constant 0 : index
    %c0_36 = arith.constant 0 : index
    %c0_37 = arith.constant 0 : index
    %64 = vector.load %arg8[%c0_34, %c0_35, %c0_36, %c0_37] : memref<2x12x32x8xf32, #tpu.memory_space<vmem>>, vector<1x1x32x8xf32>
    %65 = vector.shape_cast %64 : vector<1x1x32x8xf32> to vector<32x8xf32>
    %66 = arith.truncf %48 : vector<16x32xf32> to vector<16x32xbf16>
    %67 = arith.truncf %65 : vector<32x8xf32> to vector<32x8xbf16>
    %cst_38 = arith.constant dense<0.000000e+00> : vector<16x8xf32>
    %68 = tpu.matmul %66, %67, %cst_38 {dimension_numbers = #tpu.dot_dimension_numbers<[1], [0], [0], [1], [0, 0, 1, 1], [], []>} : vector<16x32xbf16>, vector<32x8xbf16>, vector<16x8xf32> -> vector<16x8xf32>
    %c0_39 = arith.constant 0 : index
    %c0_40 = arith.constant 0 : index
    %c0_41 = arith.constant 0 : index
    %c0_42 = arith.constant 0 : index
    %69 = vector.load %arg9[%c0_39, %c0_40, %c0_41, %c0_42] : memref<2x12x1x8xf32, #tpu.memory_space<vmem>>, vector<1x1x1x8xf32>
    %70 = vector.shape_cast %69 : vector<1x1x1x8xf32> to vector<1x8xf32>
    %71 = vector.broadcast %70 : vector<1x8xf32> to vector<16x8xf32>
    %72 = arith.addf %68, %71 : vector<16x8xf32>
    %c0_43 = arith.constant 0 : index
    %c4 = arith.constant 4 : index
    %c0_44 = arith.constant 0 : index
    %c0_45 = arith.constant 0 : index
    %73 = vector.load %arg8[%c0_43, %c4, %c0_44, %c0_45] : memref<2x12x32x8xf32, #tpu.memory_space<vmem>>, vector<1x1x32x8xf32>
    %74 = vector.shape_cast %73 : vector<1x1x32x8xf32> to vector<32x8xf32>
    %75 = arith.truncf %48 : vector<16x32xf32> to vector<16x32xbf16>
    %76 = arith.truncf %74 : vector<32x8xf32> to vector<32x8xbf16>
    %cst_46 = arith.constant dense<0.000000e+00> : vector<16x8xf32>
    %77 = tpu.matmul %75, %76, %cst_46 {dimension_numbers = #tpu.dot_dimension_numbers<[1], [0], [0], [1], [0, 0, 1, 1], [], []>} : vector<16x32xbf16>, vector<32x8xbf16>, vector<16x8xf32> -> vector<16x8xf32>
    %c0_47 = arith.constant 0 : index
    %c4_48 = arith.constant 4 : index
    %c0_49 = arith.constant 0 : index
    %c0_50 = arith.constant 0 : index
    %78 = vector.load %arg9[%c0_47, %c4_48, %c0_49, %c0_50] : memref<2x12x1x8xf32, #tpu.memory_space<vmem>>, vector<1x1x1x8xf32>
    %79 = vector.shape_cast %78 : vector<1x1x1x8xf32> to vector<1x8xf32>
    %80 = vector.broadcast %79 : vector<1x8xf32> to vector<16x8xf32>
    %81 = arith.addf %77, %80 : vector<16x8xf32>
    %c0_51 = arith.constant 0 : index
    %c8 = arith.constant 8 : index
    %c0_52 = arith.constant 0 : index
    %c0_53 = arith.constant 0 : index
    %82 = vector.load %arg8[%c0_51, %c8, %c0_52, %c0_53] : memref<2x12x32x8xf32, #tpu.memory_space<vmem>>, vector<1x1x32x8xf32>
    %83 = vector.shape_cast %82 : vector<1x1x32x8xf32> to vector<32x8xf32>
    %84 = arith.truncf %48 : vector<16x32xf32> to vector<16x32xbf16>
    %85 = arith.truncf %83 : vector<32x8xf32> to vector<32x8xbf16>
    %cst_54 = arith.constant dense<0.000000e+00> : vector<16x8xf32>
    %86 = tpu.matmul %84, %85, %cst_54 {dimension_numbers = #tpu.dot_dimension_numbers<[1], [0], [0], [1], [0, 0, 1, 1], [], []>} : vector<16x32xbf16>, vector<32x8xbf16>, vector<16x8xf32> -> vector<16x8xf32>
    %c0_55 = arith.constant 0 : index
    %c8_56 = arith.constant 8 : index
    %c0_57 = arith.constant 0 : index
    %c0_58 = arith.constant 0 : index
    %87 = vector.load %arg9[%c0_55, %c8_56, %c0_57, %c0_58] : memref<2x12x1x8xf32, #tpu.memory_space<vmem>>, vector<1x1x1x8xf32>
    %88 = vector.shape_cast %87 : vector<1x1x1x8xf32> to vector<1x8xf32>
    %89 = vector.broadcast %88 : vector<1x8xf32> to vector<16x8xf32>
    %90 = arith.addf %86, %89 : vector<16x8xf32>
    %91 = vector.extract_strided_slice %72 {offsets = [0, 0], sizes = [8, 8], strides = [1, 1]} : vector<16x8xf32> to vector<8x8xf32>
    %92 = vector.extract_strided_slice %81 {offsets = [0, 0], sizes = [8, 8], strides = [1, 1]} : vector<16x8xf32> to vector<8x8xf32>
    %93 = vector.extract_strided_slice %90 {offsets = [0, 0], sizes = [8, 8], strides = [1, 1]} : vector<16x8xf32> to vector<8x8xf32>
    %cst_59 = arith.constant dense<0.000000e+00> : vector<8x8xf32>
    %94 = tpu.matmul %91, %92, %cst_59 {dimension_numbers = #tpu.dot_dimension_numbers<[1], [1], [0], [0], [0, 0, 1, 0], [], []>} : vector<8x8xf32>, vector<8x8xf32>, vector<8x8xf32> -> vector<8x8xf32>
    %cst_60 = arith.constant 0.353553385 : f32
    %95 = vector.broadcast %cst_60 : f32 to vector<8x8xf32>
    %96 = arith.mulf %94, %95 : vector<8x8xf32>
    %97 = vector.broadcast %55 : vector<1x8xf32> to vector<8x8xf32>
    %98 = arith.addf %96, %97 : vector<8x8xf32>
    %cst_61 = arith.constant dense<0xFF800000> : vector<8xf32>
    %99 = vector.multi_reduction <maximumf>, %98, %cst_61 [1] : vector<8x8xf32> to vector<8xf32>
    %100 = vector.shape_cast %99 : vector<8xf32> to vector<8x1xf32>
    %101 = vector.broadcast %100 : vector<8x1xf32> to vector<8x8xf32>
    %102 = arith.subf %98, %101 : vector<8x8xf32>
    %103 = math.exp %102 : vector<8x8xf32>
    %cst_62 = arith.constant dense<0.000000e+00> : vector<8xf32>
    %104 = vector.multi_reduction <add>, %103, %cst_62 [1] : vector<8x8xf32> to vector<8xf32>
    %105 = vector.shape_cast %104 : vector<8xf32> to vector<8x1xf32>
    %106 = tpu.reciprocal %105 {approx = true} : vector<8x1xf32> -> vector<8x1xf32>
    %107 = vector.broadcast %106 : vector<8x1xf32> to vector<8x8xf32>
    %108 = arith.mulf %103, %107 : vector<8x8xf32>
    %cst_63 = arith.constant dense<0.000000e+00> : vector<8x8xf32>
    %109 = tpu.matmul %108, %93, %cst_63 {dimension_numbers = #tpu.dot_dimension_numbers<[1], [0], [0], [1], [0, 0, 1, 1], [], []>} : vector<8x8xf32>, vector<8x8xf32>, vector<8x8xf32> -> vector<8x8xf32>
    %c0_64 = arith.constant 0 : index
    %c0_65 = arith.constant 0 : index
    %110 = vector.load %arg26[%c0_64, %c0_65] : memref<16x8xf32, #tpu.memory_space<vmem>>, vector<8x8xf32>
    tpu.vector_store %arg26[%c0_64, %c0_65], %109 {strides = array<i32>} : memref<16x8xf32, #tpu.memory_space<vmem>>, vector<8x8xf32>,
    %111 = vector.extract_strided_slice %72 {offsets = [8, 0], sizes = [8, 8], strides = [1, 1]} : vector<16x8xf32> to vector<8x8xf32>
    %112 = vector.extract_strided_slice %81 {offsets = [8, 0], sizes = [8, 8], strides = [1, 1]} : vector<16x8xf32> to vector<8x8xf32>
    %113 = vector.extract_strided_slice %90 {offsets = [8, 0], sizes = [8, 8], strides = [1, 1]} : vector<16x8xf32> to vector<8x8xf32>
    %cst_66 = arith.constant dense<0.000000e+00> : vector<8x8xf32>
    %114 = tpu.matmul %111, %112, %cst_66 {dimension_numbers = #tpu.dot_dimension_numbers<[1], [1], [0], [0], [0, 0, 1, 0], [], []>} : vector<8x8xf32>, vector<8x8xf32>, vector<8x8xf32> -> vector<8x8xf32>
    %cst_67 = arith.constant 0.353553385 : f32
    %115 = vector.broadcast %cst_67 : f32 to vector<8x8xf32>
    %116 = arith.mulf %114, %115 : vector<8x8xf32>
    %117 = vector.broadcast %62 : vector<1x8xf32> to vector<8x8xf32>
    %118 = arith.addf %116, %117 : vector<8x8xf32>
    %cst_68 = arith.constant dense<0xFF800000> : vector<8xf32>
    %119 = vector.multi_reduction <maximumf>, %118, %cst_68 [1] : vector<8x8xf32> to vector<8xf32>
    %120 = vector.shape_cast %119 : vector<8xf32> to vector<8x1xf32>
    %121 = vector.broadcast %120 : vector<8x1xf32> to vector<8x8xf32>
    %122 = arith.subf %118, %121 : vector<8x8xf32>
    %123 = math.exp %122 : vector<8x8xf32>
    %cst_69 = arith.constant dense<0.000000e+00> : vector<8xf32>
    %124 = vector.multi_reduction <add>, %123, %cst_69 [1] : vector<8x8xf32> to vector<8xf32>
    %125 = vector.shape_cast %124 : vector<8xf32> to vector<8x1xf32>
    %126 = tpu.reciprocal %125 {approx = true} : vector<8x1xf32> -> vector<8x1xf32>
    %127 = vector.broadcast %126 : vector<8x1xf32> to vector<8x8xf32>
    %128 = arith.mulf %123, %127 : vector<8x8xf32>
    %cst_70 = arith.constant dense<0.000000e+00> : vector<8x8xf32>
    %129 = tpu.matmul %128, %113, %cst_70 {dimension_numbers = #tpu.dot_dimension_numbers<[1], [0], [0], [1], [0, 0, 1, 1], [], []>} : vector<8x8xf32>, vector<8x8xf32>, vector<8x8xf32> -> vector<8x8xf32>
    %c8_71 = arith.constant 8 : index
    %c0_72 = arith.constant 0 : index
    %130 = vector.load %arg26[%c8_71, %c0_72] : memref<16x8xf32, #tpu.memory_space<vmem>>, vector<8x8xf32>
    tpu.vector_store %arg26[%c8_71, %c0_72], %129 {strides = array<i32>} : memref<16x8xf32, #tpu.memory_space<vmem>>, vector<8x8xf32>,
    %c0_73 = arith.constant 0 : index
    %c0_74 = arith.constant 0 : index
    %131 = vector.load %arg26[%c0_73, %c0_74] : memref<16x8xf32, #tpu.memory_space<vmem>>, vector<16x8xf32>
    %c0_75 = arith.constant 0 : index
    %c0_76 = arith.constant 0 : index
    %c0_77 = arith.constant 0 : index
    %c0_78 = arith.constant 0 : index
    %132 = vector.load %arg10[%c0_75, %c0_76, %c0_77, %c0_78] : memref<2x4x8x32xf32, #tpu.memory_space<vmem>>, vector<1x1x8x32xf32>
    %133 = vector.shape_cast %132 : vector<1x1x8x32xf32> to vector<8x32xf32>
    %134 = arith.truncf %131 : vector<16x8xf32> to vector<16x8xbf16>
    %135 = arith.truncf %133 : vector<8x32xf32> to vector<8x32xbf16>
    %cst_79 = arith.constant dense<0.000000e+00> : vector<16x32xf32>
    %136 = tpu.matmul %134, %135, %cst_79 {dimension_numbers = #tpu.dot_dimension_numbers<[1], [0], [0], [1], [0, 0, 1, 1], [], []>} : vector<16x8xbf16>, vector<8x32xbf16>, vector<16x32xf32> -> vector<16x32xf32>
    %137 = arith.addf %63, %136 : vector<16x32xf32>
    %c0_80 = arith.constant 0 : index
    %c1_81 = arith.constant 1 : index
    %c0_82 = arith.constant 0 : index
    %c0_83 = arith.constant 0 : index
    %138 = vector.load %arg8[%c0_80, %c1_81, %c0_82, %c0_83] : memref<2x12x32x8xf32, #tpu.memory_space<vmem>>, vector<1x1x32x8xf32>
    %139 = vector.shape_cast %138 : vector<1x1x32x8xf32> to vector<32x8xf32>
    %140 = arith.truncf %48 : vector<16x32xf32> to vector<16x32xbf16>
    %141 = arith.truncf %139 : vector<32x8xf32> to vector<32x8xbf16>
    %cst_84 = arith.constant dense<0.000000e+00> : vector<16x8xf32>
    %142 = tpu.matmul %140, %141, %cst_84 {dimension_numbers = #tpu.dot_dimension_numbers<[1], [0], [0], [1], [0, 0, 1, 1], [], []>} : vector<16x32xbf16>, vector<32x8xbf16>, vector<16x8xf32> -> vector<16x8xf32>
    %c0_85 = arith.constant 0 : index
    %c1_86 = arith.constant 1 : index
    %c0_87 = arith.constant 0 : index
    %c0_88 = arith.constant 0 : index
    %143 = vector.load %arg9[%c0_85, %c1_86, %c0_87, %c0_88] : memref<2x12x1x8xf32, #tpu.memory_space<vmem>>, vector<1x1x1x8xf32>
    %144 = vector.shape_cast %143 : vector<1x1x1x8xf32> to vector<1x8xf32>
    %145 = vector.broadcast %144 : vector<1x8xf32> to vector<16x8xf32>
    %146 = arith.addf %142, %145 : vector<16x8xf32>
    %c0_89 = arith.constant 0 : index
    %c5 = arith.constant 5 : index
    %c0_90 = arith.constant 0 : index
    %c0_91 = arith.constant 0 : index
    %147 = vector.load %arg8[%c0_89, %c5, %c0_90, %c0_91] : memref<2x12x32x8xf32, #tpu.memory_space<vmem>>, vector<1x1x32x8xf32>
    %148 = vector.shape_cast %147 : vector<1x1x32x8xf32> to vector<32x8xf32>
    %149 = arith.truncf %48 : vector<16x32xf32> to vector<16x32xbf16>
    %150 = arith.truncf %148 : vector<32x8xf32> to vector<32x8xbf16>
    %cst_92 = arith.constant dense<0.000000e+00> : vector<16x8xf32>
    %151 = tpu.matmul %149, %150, %cst_92 {dimension_numbers = #tpu.dot_dimension_numbers<[1], [0], [0], [1], [0, 0, 1, 1], [], []>} : vector<16x32xbf16>, vector<32x8xbf16>, vector<16x8xf32> -> vector<16x8xf32>
    %c0_93 = arith.constant 0 : index
    %c5_94 = arith.constant 5 : index
    %c0_95 = arith.constant 0 : index
    %c0_96 = arith.constant 0 : index
    %152 = vector.load %arg9[%c0_93, %c5_94, %c0_95, %c0_96] : memref<2x12x1x8xf32, #tpu.memory_space<vmem>>, vector<1x1x1x8xf32>
    %153 = vector.shape_cast %152 : vector<1x1x1x8xf32> to vector<1x8xf32>
    %154 = vector.broadcast %153 : vector<1x8xf32> to vector<16x8xf32>
    %155 = arith.addf %151, %154 : vector<16x8xf32>
    %c0_97 = arith.constant 0 : index
    %c9 = arith.constant 9 : index
    %c0_98 = arith.constant 0 : index
    %c0_99 = arith.constant 0 : index
    %156 = vector.load %arg8[%c0_97, %c9, %c0_98, %c0_99] : memref<2x12x32x8xf32, #tpu.memory_space<vmem>>, vector<1x1x32x8xf32>
    %157 = vector.shape_cast %156 : vector<1x1x32x8xf32> to vector<32x8xf32>
    %158 = arith.truncf %48 : vector<16x32xf32> to vector<16x32xbf16>
    %159 = arith.truncf %157 : vector<32x8xf32> to vector<32x8xbf16>
    %cst_100 = arith.constant dense<0.000000e+00> : vector<16x8xf32>
    %160 = tpu.matmul %158, %159, %cst_100 {dimension_numbers = #tpu.dot_dimension_numbers<[1], [0], [0], [1], [0, 0, 1, 1], [], []>} : vector<16x32xbf16>, vector<32x8xbf16>, vector<16x8xf32> -> vector<16x8xf32>
    %c0_101 = arith.constant 0 : index
    %c9_102 = arith.constant 9 : index
    %c0_103 = arith.constant 0 : index
    %c0_104 = arith.constant 0 : index
    %161 = vector.load %arg9[%c0_101, %c9_102, %c0_103, %c0_104] : memref<2x12x1x8xf32, #tpu.memory_space<vmem>>, vector<1x1x1x8xf32>
    %162 = vector.shape_cast %161 : vector<1x1x1x8xf32> to vector<1x8xf32>
    %163 = vector.broadcast %162 : vector<1x8xf32> to vector<16x8xf32>
    %164 = arith.addf %160, %163 : vector<16x8xf32>
    %165 = vector.extract_strided_slice %146 {offsets = [0, 0], sizes = [8, 8], strides = [1, 1]} : vector<16x8xf32> to vector<8x8xf32>
    %166 = vector.extract_strided_slice %155 {offsets = [0, 0], sizes = [8, 8], strides = [1, 1]} : vector<16x8xf32> to vector<8x8xf32>
    %167 = vector.extract_strided_slice %164 {offsets = [0, 0], sizes = [8, 8], strides = [1, 1]} : vector<16x8xf32> to vector<8x8xf32>
    %cst_105 = arith.constant dense<0.000000e+00> : vector<8x8xf32>
    %168 = tpu.matmul %165, %166, %cst_105 {dimension_numbers = #tpu.dot_dimension_numbers<[1], [1], [0], [0], [0, 0, 1, 0], [], []>} : vector<8x8xf32>, vector<8x8xf32>, vector<8x8xf32> -> vector<8x8xf32>
    %cst_106 = arith.constant 0.353553385 : f32
    %169 = vector.broadcast %cst_106 : f32 to vector<8x8xf32>
    %170 = arith.mulf %168, %169 : vector<8x8xf32>
    %171 = vector.broadcast %55 : vector<1x8xf32> to vector<8x8xf32>
    %172 = arith.addf %170, %171 : vector<8x8xf32>
    %cst_107 = arith.constant dense<0xFF800000> : vector<8xf32>
    %173 = vector.multi_reduction <maximumf>, %172, %cst_107 [1] : vector<8x8xf32> to vector<8xf32>
    %174 = vector.shape_cast %173 : vector<8xf32> to vector<8x1xf32>
    %175 = vector.broadcast %174 : vector<8x1xf32> to vector<8x8xf32>
    %176 = arith.subf %172, %175 : vector<8x8xf32>
    %177 = math.exp %176 : vector<8x8xf32>
    %cst_108 = arith.constant dense<0.000000e+00> : vector<8xf32>
    %178 = vector.multi_reduction <add>, %177, %cst_108 [1] : vector<8x8xf32> to vector<8xf32>
    %179 = vector.shape_cast %178 : vector<8xf32> to vector<8x1xf32>
    %180 = tpu.reciprocal %179 {approx = true} : vector<8x1xf32> -> vector<8x1xf32>
    %181 = vector.broadcast %180 : vector<8x1xf32> to vector<8x8xf32>
    %182 = arith.mulf %177, %181 : vector<8x8xf32>
    %cst_109 = arith.constant dense<0.000000e+00> : vector<8x8xf32>
    %183 = tpu.matmul %182, %167, %cst_109 {dimension_numbers = #tpu.dot_dimension_numbers<[1], [0], [0], [1], [0, 0, 1, 1], [], []>} : vector<8x8xf32>, vector<8x8xf32>, vector<8x8xf32> -> vector<8x8xf32>
    %c0_110 = arith.constant 0 : index
    %c0_111 = arith.constant 0 : index
    %184 = vector.load %arg26[%c0_110, %c0_111] : memref<16x8xf32, #tpu.memory_space<vmem>>, vector<8x8xf32>
    tpu.vector_store %arg26[%c0_110, %c0_111], %183 {strides = array<i32>} : memref<16x8xf32, #tpu.memory_space<vmem>>, vector<8x8xf32>,
    %185 = vector.extract_strided_slice %146 {offsets = [8, 0], sizes = [8, 8], strides = [1, 1]} : vector<16x8xf32> to vector<8x8xf32>
    %186 = vector.extract_strided_slice %155 {offsets = [8, 0], sizes = [8, 8], strides = [1, 1]} : vector<16x8xf32> to vector<8x8xf32>
    %187 = vector.extract_strided_slice %164 {offsets = [8, 0], sizes = [8, 8], strides = [1, 1]} : vector<16x8xf32> to vector<8x8xf32>
    %cst_112 = arith.constant dense<0.000000e+00> : vector<8x8xf32>
    %188 = tpu.matmul %185, %186, %cst_112 {dimension_numbers = #tpu.dot_dimension_numbers<[1], [1], [0], [0], [0, 0, 1, 0], [], []>} : vector<8x8xf32>, vector<8x8xf32>, vector<8x8xf32> -> vector<8x8xf32>
    %cst_113 = arith.constant 0.353553385 : f32
    %189 = vector.broadcast %cst_113 : f32 to vector<8x8xf32>
    %190 = arith.mulf %188, %189 : vector<8x8xf32>
    %191 = vector.broadcast %62 : vector<1x8xf32> to vector<8x8xf32>
    %192 = arith.addf %190, %191 : vector<8x8xf32>
    %cst_114 = arith.constant dense<0xFF800000> : vector<8xf32>
    %193 = vector.multi_reduction <maximumf>, %192, %cst_114 [1] : vector<8x8xf32> to vector<8xf32>
    %194 = vector.shape_cast %193 : vector<8xf32> to vector<8x1xf32>
    %195 = vector.broadcast %194 : vector<8x1xf32> to vector<8x8xf32>
    %196 = arith.subf %192, %195 : vector<8x8xf32>
    %197 = math.exp %196 : vector<8x8xf32>
    %cst_115 = arith.constant dense<0.000000e+00> : vector<8xf32>
    %198 = vector.multi_reduction <add>, %197, %cst_115 [1] : vector<8x8xf32> to vector<8xf32>
    %199 = vector.shape_cast %198 : vector<8xf32> to vector<8x1xf32>
    %200 = tpu.reciprocal %199 {approx = true} : vector<8x1xf32> -> vector<8x1xf32>
    %201 = vector.broadcast %200 : vector<8x1xf32> to vector<8x8xf32>
    %202 = arith.mulf %197, %201 : vector<8x8xf32>
    %cst_116 = arith.constant dense<0.000000e+00> : vector<8x8xf32>
    %203 = tpu.matmul %202, %187, %cst_116 {dimension_numbers = #tpu.dot_dimension_numbers<[1], [0], [0], [1], [0, 0, 1, 1], [], []>} : vector<8x8xf32>, vector<8x8xf32>, vector<8x8xf32> -> vector<8x8xf32>
    %c8_117 = arith.constant 8 : index
    %c0_118 = arith.constant 0 : index
    %204 = vector.load %arg26[%c8_117, %c0_118] : memref<16x8xf32, #tpu.memory_space<vmem>>, vector<8x8xf32>
    tpu.vector_store %arg26[%c8_117, %c0_118], %203 {strides = array<i32>} : memref<16x8xf32, #tpu.memory_space<vmem>>, vector<8x8xf32>,
    %c0_119 = arith.constant 0 : index
    %c0_120 = arith.constant 0 : index
    %205 = vector.load %arg26[%c0_119, %c0_120] : memref<16x8xf32, #tpu.memory_space<vmem>>, vector<16x8xf32>
    %c0_121 = arith.constant 0 : index
    %c1_122 = arith.constant 1 : index
    %c0_123 = arith.constant 0 : index
    %c0_124 = arith.constant 0 : index
    %206 = vector.load %arg10[%c0_121, %c1_122, %c0_123, %c0_124] : memref<2x4x8x32xf32, #tpu.memory_space<vmem>>, vector<1x1x8x32xf32>
    %207 = vector.shape_cast %206 : vector<1x1x8x32xf32> to vector<8x32xf32>
    %208 = arith.truncf %205 : vector<16x8xf32> to vector<16x8xbf16>
    %209 = arith.truncf %207 : vector<8x32xf32> to vector<8x32xbf16>
    %cst_125 = arith.constant dense<0.000000e+00> : vector<16x32xf32>
    %210 = tpu.matmul %208, %209, %cst_125 {dimension_numbers = #tpu.dot_dimension_numbers<[1], [0], [0], [1], [0, 0, 1, 1], [], []>} : vector<16x8xbf16>, vector<8x32xbf16>, vector<16x32xf32> -> vector<16x32xf32>
    %211 = arith.addf %137, %210 : vector<16x32xf32>
    %c0_126 = arith.constant 0 : index
    %c2 = arith.constant 2 : index
    %c0_127 = arith.constant 0 : index
    %c0_128 = arith.constant 0 : index
    %212 = vector.load %arg8[%c0_126, %c2, %c0_127, %c0_128] : memref<2x12x32x8xf32, #tpu.memory_space<vmem>>, vector<1x1x32x8xf32>
    %213 = vector.shape_cast %212 : vector<1x1x32x8xf32> to vector<32x8xf32>
    %214 = arith.truncf %48 : vector<16x32xf32> to vector<16x32xbf16>
    %215 = arith.truncf %213 : vector<32x8xf32> to vector<32x8xbf16>
    %cst_129 = arith.constant dense<0.000000e+00> : vector<16x8xf32>
    %216 = tpu.matmul %214, %215, %cst_129 {dimension_numbers = #tpu.dot_dimension_numbers<[1], [0], [0], [1], [0, 0, 1, 1], [], []>} : vector<16x32xbf16>, vector<32x8xbf16>, vector<16x8xf32> -> vector<16x8xf32>
    %c0_130 = arith.constant 0 : index
    %c2_131 = arith.constant 2 : index
    %c0_132 = arith.constant 0 : index
    %c0_133 = arith.constant 0 : index
    %217 = vector.load %arg9[%c0_130, %c2_131, %c0_132, %c0_133] : memref<2x12x1x8xf32, #tpu.memory_space<vmem>>, vector<1x1x1x8xf32>
    %218 = vector.shape_cast %217 : vector<1x1x1x8xf32> to vector<1x8xf32>
    %219 = vector.broadcast %218 : vector<1x8xf32> to vector<16x8xf32>
    %220 = arith.addf %216, %219 : vector<16x8xf32>
    %c0_134 = arith.constant 0 : index
    %c6 = arith.constant 6 : index
    %c0_135 = arith.constant 0 : index
    %c0_136 = arith.constant 0 : index
    %221 = vector.load %arg8[%c0_134, %c6, %c0_135, %c0_136] : memref<2x12x32x8xf32, #tpu.memory_space<vmem>>, vector<1x1x32x8xf32>
    %222 = vector.shape_cast %221 : vector<1x1x32x8xf32> to vector<32x8xf32>
    %223 = arith.truncf %48 : vector<16x32xf32> to vector<16x32xbf16>
    %224 = arith.truncf %222 : vector<32x8xf32> to vector<32x8xbf16>
    %cst_137 = arith.constant dense<0.000000e+00> : vector<16x8xf32>
    %225 = tpu.matmul %223, %224, %cst_137 {dimension_numbers = #tpu.dot_dimension_numbers<[1], [0], [0], [1], [0, 0, 1, 1], [], []>} : vector<16x32xbf16>, vector<32x8xbf16>, vector<16x8xf32> -> vector<16x8xf32>
    %c0_138 = arith.constant 0 : index
    %c6_139 = arith.constant 6 : index
    %c0_140 = arith.constant 0 : index
    %c0_141 = arith.constant 0 : index
    %226 = vector.load %arg9[%c0_138, %c6_139, %c0_140, %c0_141] : memref<2x12x1x8xf32, #tpu.memory_space<vmem>>, vector<1x1x1x8xf32>
    %227 = vector.shape_cast %226 : vector<1x1x1x8xf32> to vector<1x8xf32>
    %228 = vector.broadcast %227 : vector<1x8xf32> to vector<16x8xf32>
    %229 = arith.addf %225, %228 : vector<16x8xf32>
    %c0_142 = arith.constant 0 : index
    %c10 = arith.constant 10 : index
    %c0_143 = arith.constant 0 : index
    %c0_144 = arith.constant 0 : index
    %230 = vector.load %arg8[%c0_142, %c10, %c0_143, %c0_144] : memref<2x12x32x8xf32, #tpu.memory_space<vmem>>, vector<1x1x32x8xf32>
    %231 = vector.shape_cast %230 : vector<1x1x32x8xf32> to vector<32x8xf32>
    %232 = arith.truncf %48 : vector<16x32xf32> to vector<16x32xbf16>
    %233 = arith.truncf %231 : vector<32x8xf32> to vector<32x8xbf16>
    %cst_145 = arith.constant dense<0.000000e+00> : vector<16x8xf32>
    %234 = tpu.matmul %232, %233, %cst_145 {dimension_numbers = #tpu.dot_dimension_numbers<[1], [0], [0], [1], [0, 0, 1, 1], [], []>} : vector<16x32xbf16>, vector<32x8xbf16>, vector<16x8xf32> -> vector<16x8xf32>
    %c0_146 = arith.constant 0 : index
    %c10_147 = arith.constant 10 : index
    %c0_148 = arith.constant 0 : index
    %c0_149 = arith.constant 0 : index
    %235 = vector.load %arg9[%c0_146, %c10_147, %c0_148, %c0_149] : memref<2x12x1x8xf32, #tpu.memory_space<vmem>>, vector<1x1x1x8xf32>
    %236 = vector.shape_cast %235 : vector<1x1x1x8xf32> to vector<1x8xf32>
    %237 = vector.broadcast %236 : vector<1x8xf32> to vector<16x8xf32>
    %238 = arith.addf %234, %237 : vector<16x8xf32>
    %239 = vector.extract_strided_slice %220 {offsets = [0, 0], sizes = [8, 8], strides = [1, 1]} : vector<16x8xf32> to vector<8x8xf32>
    %240 = vector.extract_strided_slice %229 {offsets = [0, 0], sizes = [8, 8], strides = [1, 1]} : vector<16x8xf32> to vector<8x8xf32>
    %241 = vector.extract_strided_slice %238 {offsets = [0, 0], sizes = [8, 8], strides = [1, 1]} : vector<16x8xf32> to vector<8x8xf32>
    %cst_150 = arith.constant dense<0.000000e+00> : vector<8x8xf32>
    %242 = tpu.matmul %239, %240, %cst_150 {dimension_numbers = #tpu.dot_dimension_numbers<[1], [1], [0], [0], [0, 0, 1, 0], [], []>} : vector<8x8xf32>, vector<8x8xf32>, vector<8x8xf32> -> vector<8x8xf32>
    %cst_151 = arith.constant 0.353553385 : f32
    %243 = vector.broadcast %cst_151 : f32 to vector<8x8xf32>
    %244 = arith.mulf %242, %243 : vector<8x8xf32>
    %245 = vector.broadcast %55 : vector<1x8xf32> to vector<8x8xf32>
    %246 = arith.addf %244, %245 : vector<8x8xf32>
    %cst_152 = arith.constant dense<0xFF800000> : vector<8xf32>
    %247 = vector.multi_reduction <maximumf>, %246, %cst_152 [1] : vector<8x8xf32> to vector<8xf32>
    %248 = vector.shape_cast %247 : vector<8xf32> to vector<8x1xf32>
    %249 = vector.broadcast %248 : vector<8x1xf32> to vector<8x8xf32>
    %250 = arith.subf %246, %249 : vector<8x8xf32>
    %251 = math.exp %250 : vector<8x8xf32>
    %cst_153 = arith.constant dense<0.000000e+00> : vector<8xf32>
    %252 = vector.multi_reduction <add>, %251, %cst_153 [1] : vector<8x8xf32> to vector<8xf32>
    %253 = vector.shape_cast %252 : vector<8xf32> to vector<8x1xf32>
    %254 = tpu.reciprocal %253 {approx = true} : vector<8x1xf32> -> vector<8x1xf32>
    %255 = vector.broadcast %254 : vector<8x1xf32> to vector<8x8xf32>
    %256 = arith.mulf %251, %255 : vector<8x8xf32>
    %cst_154 = arith.constant dense<0.000000e+00> : vector<8x8xf32>
    %257 = tpu.matmul %256, %241, %cst_154 {dimension_numbers = #tpu.dot_dimension_numbers<[1], [0], [0], [1], [0, 0, 1, 1], [], []>} : vector<8x8xf32>, vector<8x8xf32>, vector<8x8xf32> -> vector<8x8xf32>
    %c0_155 = arith.constant 0 : index
    %c0_156 = arith.constant 0 : index
    %258 = vector.load %arg26[%c0_155, %c0_156] : memref<16x8xf32, #tpu.memory_space<vmem>>, vector<8x8xf32>
    tpu.vector_store %arg26[%c0_155, %c0_156], %257 {strides = array<i32>} : memref<16x8xf32, #tpu.memory_space<vmem>>, vector<8x8xf32>,
    %259 = vector.extract_strided_slice %220 {offsets = [8, 0], sizes = [8, 8], strides = [1, 1]} : vector<16x8xf32> to vector<8x8xf32>
    %260 = vector.extract_strided_slice %229 {offsets = [8, 0], sizes = [8, 8], strides = [1, 1]} : vector<16x8xf32> to vector<8x8xf32>
    %261 = vector.extract_strided_slice %238 {offsets = [8, 0], sizes = [8, 8], strides = [1, 1]} : vector<16x8xf32> to vector<8x8xf32>
    %cst_157 = arith.constant dense<0.000000e+00> : vector<8x8xf32>
    %262 = tpu.matmul %259, %260, %cst_157 {dimension_numbers = #tpu.dot_dimension_numbers<[1], [1], [0], [0], [0, 0, 1, 0], [], []>} : vector<8x8xf32>, vector<8x8xf32>, vector<8x8xf32> -> vector<8x8xf32>
    %cst_158 = arith.constant 0.353553385 : f32
    %263 = vector.broadcast %cst_158 : f32 to vector<8x8xf32>
    %264 = arith.mulf %262, %263 : vector<8x8xf32>
    %265 = vector.broadcast %62 : vector<1x8xf32> to vector<8x8xf32>
    %266 = arith.addf %264, %265 : vector<8x8xf32>
    %cst_159 = arith.constant dense<0xFF800000> : vector<8xf32>
    %267 = vector.multi_reduction <maximumf>, %266, %cst_159 [1] : vector<8x8xf32> to vector<8xf32>
    %268 = vector.shape_cast %267 : vector<8xf32> to vector<8x1xf32>
    %269 = vector.broadcast %268 : vector<8x1xf32> to vector<8x8xf32>
    %270 = arith.subf %266, %269 : vector<8x8xf32>
    %271 = math.exp %270 : vector<8x8xf32>
    %cst_160 = arith.constant dense<0.000000e+00> : vector<8xf32>
    %272 = vector.multi_reduction <add>, %271, %cst_160 [1] : vector<8x8xf32> to vector<8xf32>
    %273 = vector.shape_cast %272 : vector<8xf32> to vector<8x1xf32>
    %274 = tpu.reciprocal %273 {approx = true} : vector<8x1xf32> -> vector<8x1xf32>
    %275 = vector.broadcast %274 : vector<8x1xf32> to vector<8x8xf32>
    %276 = arith.mulf %271, %275 : vector<8x8xf32>
    %cst_161 = arith.constant dense<0.000000e+00> : vector<8x8xf32>
    %277 = tpu.matmul %276, %261, %cst_161 {dimension_numbers = #tpu.dot_dimension_numbers<[1], [0], [0], [1], [0, 0, 1, 1], [], []>} : vector<8x8xf32>, vector<8x8xf32>, vector<8x8xf32> -> vector<8x8xf32>
    %c8_162 = arith.constant 8 : index
    %c0_163 = arith.constant 0 : index
    %278 = vector.load %arg26[%c8_162, %c0_163] : memref<16x8xf32, #tpu.memory_space<vmem>>, vector<8x8xf32>
    tpu.vector_store %arg26[%c8_162, %c0_163], %277 {strides = array<i32>} : memref<16x8xf32, #tpu.memory_space<vmem>>, vector<8x8xf32>,
    %c0_164 = arith.constant 0 : index
    %c0_165 = arith.constant 0 : index
    %279 = vector.load %arg26[%c0_164, %c0_165] : memref<16x8xf32, #tpu.memory_space<vmem>>, vector<16x8xf32>
    %c0_166 = arith.constant 0 : index
    %c2_167 = arith.constant 2 : index
    %c0_168 = arith.constant 0 : index
    %c0_169 = arith.constant 0 : index
    %280 = vector.load %arg10[%c0_166, %c2_167, %c0_168, %c0_169] : memref<2x4x8x32xf32, #tpu.memory_space<vmem>>, vector<1x1x8x32xf32>
    %281 = vector.shape_cast %280 : vector<1x1x8x32xf32> to vector<8x32xf32>
    %282 = arith.truncf %279 : vector<16x8xf32> to vector<16x8xbf16>
    %283 = arith.truncf %281 : vector<8x32xf32> to vector<8x32xbf16>
    %cst_170 = arith.constant dense<0.000000e+00> : vector<16x32xf32>
    %284 = tpu.matmul %282, %283, %cst_170 {dimension_numbers = #tpu.dot_dimension_numbers<[1], [0], [0], [1], [0, 0, 1, 1], [], []>} : vector<16x8xbf16>, vector<8x32xbf16>, vector<16x32xf32> -> vector<16x32xf32>
    %285 = arith.addf %211, %284 : vector<16x32xf32>
    %c0_171 = arith.constant 0 : index
    %c3 = arith.constant 3 : index
    %c0_172 = arith.constant 0 : index
    %c0_173 = arith.constant 0 : index
    %286 = vector.load %arg8[%c0_171, %c3, %c0_172, %c0_173] : memref<2x12x32x8xf32, #tpu.memory_space<vmem>>, vector<1x1x32x8xf32>
    %287 = vector.shape_cast %286 : vector<1x1x32x8xf32> to vector<32x8xf32>
    %288 = arith.truncf %48 : vector<16x32xf32> to vector<16x32xbf16>
    %289 = arith.truncf %287 : vector<32x8xf32> to vector<32x8xbf16>
    %cst_174 = arith.constant dense<0.000000e+00> : vector<16x8xf32>
    %290 = tpu.matmul %288, %289, %cst_174 {dimension_numbers = #tpu.dot_dimension_numbers<[1], [0], [0], [1], [0, 0, 1, 1], [], []>} : vector<16x32xbf16>, vector<32x8xbf16>, vector<16x8xf32> -> vector<16x8xf32>
    %c0_175 = arith.constant 0 : index
    %c3_176 = arith.constant 3 : index
    %c0_177 = arith.constant 0 : index
    %c0_178 = arith.constant 0 : index
    %291 = vector.load %arg9[%c0_175, %c3_176, %c0_177, %c0_178] : memref<2x12x1x8xf32, #tpu.memory_space<vmem>>, vector<1x1x1x8xf32>
    %292 = vector.shape_cast %291 : vector<1x1x1x8xf32> to vector<1x8xf32>
    %293 = vector.broadcast %292 : vector<1x8xf32> to vector<16x8xf32>
    %294 = arith.addf %290, %293 : vector<16x8xf32>
    %c0_179 = arith.constant 0 : index
    %c7 = arith.constant 7 : index
    %c0_180 = arith.constant 0 : index
    %c0_181 = arith.constant 0 : index
    %295 = vector.load %arg8[%c0_179, %c7, %c0_180, %c0_181] : memref<2x12x32x8xf32, #tpu.memory_space<vmem>>, vector<1x1x32x8xf32>
    %296 = vector.shape_cast %295 : vector<1x1x32x8xf32> to vector<32x8xf32>
    %297 = arith.truncf %48 : vector<16x32xf32> to vector<16x32xbf16>
    %298 = arith.truncf %296 : vector<32x8xf32> to vector<32x8xbf16>
    %cst_182 = arith.constant dense<0.000000e+00> : vector<16x8xf32>
    %299 = tpu.matmul %297, %298, %cst_182 {dimension_numbers = #tpu.dot_dimension_numbers<[1], [0], [0], [1], [0, 0, 1, 1], [], []>} : vector<16x32xbf16>, vector<32x8xbf16>, vector<16x8xf32> -> vector<16x8xf32>
    %c0_183 = arith.constant 0 : index
    %c7_184 = arith.constant 7 : index
    %c0_185 = arith.constant 0 : index
    %c0_186 = arith.constant 0 : index
    %300 = vector.load %arg9[%c0_183, %c7_184, %c0_185, %c0_186] : memref<2x12x1x8xf32, #tpu.memory_space<vmem>>, vector<1x1x1x8xf32>
    %301 = vector.shape_cast %300 : vector<1x1x1x8xf32> to vector<1x8xf32>
    %302 = vector.broadcast %301 : vector<1x8xf32> to vector<16x8xf32>
    %303 = arith.addf %299, %302 : vector<16x8xf32>
    %c0_187 = arith.constant 0 : index
    %c11 = arith.constant 11 : index
    %c0_188 = arith.constant 0 : index
    %c0_189 = arith.constant 0 : index
    %304 = vector.load %arg8[%c0_187, %c11, %c0_188, %c0_189] : memref<2x12x32x8xf32, #tpu.memory_space<vmem>>, vector<1x1x32x8xf32>
    %305 = vector.shape_cast %304 : vector<1x1x32x8xf32> to vector<32x8xf32>
    %306 = arith.truncf %48 : vector<16x32xf32> to vector<16x32xbf16>
    %307 = arith.truncf %305 : vector<32x8xf32> to vector<32x8xbf16>
    %cst_190 = arith.constant dense<0.000000e+00> : vector<16x8xf32>
    %308 = tpu.matmul %306, %307, %cst_190 {dimension_numbers = #tpu.dot_dimension_numbers<[1], [0], [0], [1], [0, 0, 1, 1], [], []>} : vector<16x32xbf16>, vector<32x8xbf16>, vector<16x8xf32> -> vector<16x8xf32>
    %c0_191 = arith.constant 0 : index
    %c11_192 = arith.constant 11 : index
    %c0_193 = arith.constant 0 : index
    %c0_194 = arith.constant 0 : index
    %309 = vector.load %arg9[%c0_191, %c11_192, %c0_193, %c0_194] : memref<2x12x1x8xf32, #tpu.memory_space<vmem>>, vector<1x1x1x8xf32>
    %310 = vector.shape_cast %309 : vector<1x1x1x8xf32> to vector<1x8xf32>
    %311 = vector.broadcast %310 : vector<1x8xf32> to vector<16x8xf32>
    %312 = arith.addf %308, %311 : vector<16x8xf32>
    %313 = vector.extract_strided_slice %294 {offsets = [0, 0], sizes = [8, 8], strides = [1, 1]} : vector<16x8xf32> to vector<8x8xf32>
    %314 = vector.extract_strided_slice %303 {offsets = [0, 0], sizes = [8, 8], strides = [1, 1]} : vector<16x8xf32> to vector<8x8xf32>
    %315 = vector.extract_strided_slice %312 {offsets = [0, 0], sizes = [8, 8], strides = [1, 1]} : vector<16x8xf32> to vector<8x8xf32>
    %cst_195 = arith.constant dense<0.000000e+00> : vector<8x8xf32>
    %316 = tpu.matmul %313, %314, %cst_195 {dimension_numbers = #tpu.dot_dimension_numbers<[1], [1], [0], [0], [0, 0, 1, 0], [], []>} : vector<8x8xf32>, vector<8x8xf32>, vector<8x8xf32> -> vector<8x8xf32>
    %cst_196 = arith.constant 0.353553385 : f32
    %317 = vector.broadcast %cst_196 : f32 to vector<8x8xf32>
    %318 = arith.mulf %316, %317 : vector<8x8xf32>
    %319 = vector.broadcast %55 : vector<1x8xf32> to vector<8x8xf32>
    %320 = arith.addf %318, %319 : vector<8x8xf32>
    %cst_197 = arith.constant dense<0xFF800000> : vector<8xf32>
    %321 = vector.multi_reduction <maximumf>, %320, %cst_197 [1] : vector<8x8xf32> to vector<8xf32>
    %322 = vector.shape_cast %321 : vector<8xf32> to vector<8x1xf32>
    %323 = vector.broadcast %322 : vector<8x1xf32> to vector<8x8xf32>
    %324 = arith.subf %320, %323 : vector<8x8xf32>
    %325 = math.exp %324 : vector<8x8xf32>
    %cst_198 = arith.constant dense<0.000000e+00> : vector<8xf32>
    %326 = vector.multi_reduction <add>, %325, %cst_198 [1] : vector<8x8xf32> to vector<8xf32>
    %327 = vector.shape_cast %326 : vector<8xf32> to vector<8x1xf32>
    %328 = tpu.reciprocal %327 {approx = true} : vector<8x1xf32> -> vector<8x1xf32>
    %329 = vector.broadcast %328 : vector<8x1xf32> to vector<8x8xf32>
    %330 = arith.mulf %325, %329 : vector<8x8xf32>
    %cst_199 = arith.constant dense<0.000000e+00> : vector<8x8xf32>
    %331 = tpu.matmul %330, %315, %cst_199 {dimension_numbers = #tpu.dot_dimension_numbers<[1], [0], [0], [1], [0, 0, 1, 1], [], []>} : vector<8x8xf32>, vector<8x8xf32>, vector<8x8xf32> -> vector<8x8xf32>
    %c0_200 = arith.constant 0 : index
    %c0_201 = arith.constant 0 : index
    %332 = vector.load %arg26[%c0_200, %c0_201] : memref<16x8xf32, #tpu.memory_space<vmem>>, vector<8x8xf32>
    tpu.vector_store %arg26[%c0_200, %c0_201], %331 {strides = array<i32>} : memref<16x8xf32, #tpu.memory_space<vmem>>, vector<8x8xf32>,
    %333 = vector.extract_strided_slice %294 {offsets = [8, 0], sizes = [8, 8], strides = [1, 1]} : vector<16x8xf32> to vector<8x8xf32>
    %334 = vector.extract_strided_slice %303 {offsets = [8, 0], sizes = [8, 8], strides = [1, 1]} : vector<16x8xf32> to vector<8x8xf32>
    %335 = vector.extract_strided_slice %312 {offsets = [8, 0], sizes = [8, 8], strides = [1, 1]} : vector<16x8xf32> to vector<8x8xf32>
    %cst_202 = arith.constant dense<0.000000e+00> : vector<8x8xf32>
    %336 = tpu.matmul %333, %334, %cst_202 {dimension_numbers = #tpu.dot_dimension_numbers<[1], [1], [0], [0], [0, 0, 1, 0], [], []>} : vector<8x8xf32>, vector<8x8xf32>, vector<8x8xf32> -> vector<8x8xf32>
    %cst_203 = arith.constant 0.353553385 : f32
    %337 = vector.broadcast %cst_203 : f32 to vector<8x8xf32>
    %338 = arith.mulf %336, %337 : vector<8x8xf32>
    %339 = vector.broadcast %62 : vector<1x8xf32> to vector<8x8xf32>
    %340 = arith.addf %338, %339 : vector<8x8xf32>
    %cst_204 = arith.constant dense<0xFF800000> : vector<8xf32>
    %341 = vector.multi_reduction <maximumf>, %340, %cst_204 [1] : vector<8x8xf32> to vector<8xf32>
    %342 = vector.shape_cast %341 : vector<8xf32> to vector<8x1xf32>
    %343 = vector.broadcast %342 : vector<8x1xf32> to vector<8x8xf32>
    %344 = arith.subf %340, %343 : vector<8x8xf32>
    %345 = math.exp %344 : vector<8x8xf32>
    %cst_205 = arith.constant dense<0.000000e+00> : vector<8xf32>
    %346 = vector.multi_reduction <add>, %345, %cst_205 [1] : vector<8x8xf32> to vector<8xf32>
    %347 = vector.shape_cast %346 : vector<8xf32> to vector<8x1xf32>
    %348 = tpu.reciprocal %347 {approx = true} : vector<8x1xf32> -> vector<8x1xf32>
    %349 = vector.broadcast %348 : vector<8x1xf32> to vector<8x8xf32>
    %350 = arith.mulf %345, %349 : vector<8x8xf32>
    %cst_206 = arith.constant dense<0.000000e+00> : vector<8x8xf32>
    %351 = tpu.matmul %350, %335, %cst_206 {dimension_numbers = #tpu.dot_dimension_numbers<[1], [0], [0], [1], [0, 0, 1, 1], [], []>} : vector<8x8xf32>, vector<8x8xf32>, vector<8x8xf32> -> vector<8x8xf32>
    %c8_207 = arith.constant 8 : index
    %c0_208 = arith.constant 0 : index
    %352 = vector.load %arg26[%c8_207, %c0_208] : memref<16x8xf32, #tpu.memory_space<vmem>>, vector<8x8xf32>
    tpu.vector_store %arg26[%c8_207, %c0_208], %351 {strides = array<i32>} : memref<16x8xf32, #tpu.memory_space<vmem>>, vector<8x8xf32>,
    %c0_209 = arith.constant 0 : index
    %c0_210 = arith.constant 0 : index
    %353 = vector.load %arg26[%c0_209, %c0_210] : memref<16x8xf32, #tpu.memory_space<vmem>>, vector<16x8xf32>
    %c0_211 = arith.constant 0 : index
    %c3_212 = arith.constant 3 : index
    %c0_213 = arith.constant 0 : index
    %c0_214 = arith.constant 0 : index
    %354 = vector.load %arg10[%c0_211, %c3_212, %c0_213, %c0_214] : memref<2x4x8x32xf32, #tpu.memory_space<vmem>>, vector<1x1x8x32xf32>
    %355 = vector.shape_cast %354 : vector<1x1x8x32xf32> to vector<8x32xf32>
    %356 = arith.truncf %353 : vector<16x8xf32> to vector<16x8xbf16>
    %357 = arith.truncf %355 : vector<8x32xf32> to vector<8x32xbf16>
    %cst_215 = arith.constant dense<0.000000e+00> : vector<16x32xf32>
    %358 = tpu.matmul %356, %357, %cst_215 {dimension_numbers = #tpu.dot_dimension_numbers<[1], [0], [0], [1], [0, 0, 1, 1], [], []>} : vector<16x8xbf16>, vector<8x32xbf16>, vector<16x32xf32> -> vector<16x32xf32>
    %359 = arith.addf %285, %358 : vector<16x32xf32>
    %c0_216 = arith.constant 0 : index
    %c0_217 = arith.constant 0 : index
    %c0_218 = arith.constant 0 : index
    %360 = vector.load %arg11[%c0_216, %c0_217, %c0_218] : memref<2x1x32xf32, #tpu.memory_space<vmem>>, vector<1x1x32xf32>
    %361 = vector.shape_cast %360 : vector<1x1x32xf32> to vector<1x32xf32>
    %362 = vector.broadcast %361 : vector<1x32xf32> to vector<16x32xf32>
    %363 = arith.addf %359, %362 : vector<16x32xf32>
    %364 = arith.addf %363, %48 : vector<16x32xf32>
    %c0_219 = arith.constant 0 : index
    %c0_220 = arith.constant 0 : index
    %c0_221 = arith.constant 0 : index
    %365 = vector.load %arg12[%c0_219, %c0_220, %c0_221] : memref<2x1x32xf32, #tpu.memory_space<vmem>>, vector<1x1x32xf32>
    %366 = vector.shape_cast %365 : vector<1x1x32xf32> to vector<1x32xf32>
    %c0_222 = arith.constant 0 : index
    %c0_223 = arith.constant 0 : index
    %c0_224 = arith.constant 0 : index
    %367 = vector.load %arg13[%c0_222, %c0_223, %c0_224] : memref<2x1x32xf32, #tpu.memory_space<vmem>>, vector<1x1x32xf32>
    %368 = vector.shape_cast %367 : vector<1x1x32xf32> to vector<1x32xf32>
    %cst_225 = arith.constant dense<0.000000e+00> : vector<16xf32>
    %369 = vector.multi_reduction <add>, %364, %cst_225 [1] : vector<16x32xf32> to vector<16xf32>
    %370 = vector.shape_cast %369 : vector<16xf32> to vector<16x1xf32>
    %cst_226 = arith.constant 3.200000e+01 : f32
    %371 = vector.broadcast %cst_226 : f32 to vector<16x1xf32>
    %372 = arith.divf %370, %371 : vector<16x1xf32>
    %373 = vector.broadcast %372 : vector<16x1xf32> to vector<16x32xf32>
    %374 = arith.subf %364, %373 : vector<16x32xf32>
    %375 = arith.mulf %374, %374 : vector<16x32xf32>
    %cst_227 = arith.constant dense<0.000000e+00> : vector<16xf32>
    %376 = vector.multi_reduction <add>, %375, %cst_227 [1] : vector<16x32xf32> to vector<16xf32>
    %377 = vector.shape_cast %376 : vector<16xf32> to vector<16x1xf32>
    %cst_228 = arith.constant 3.200000e+01 : f32
    %378 = vector.broadcast %cst_228 : f32 to vector<16x1xf32>
    %379 = arith.divf %377, %378 : vector<16x1xf32>
    %cst_229 = arith.constant 9.99999996E-13 : f32
    %380 = vector.broadcast %cst_229 : f32 to vector<16x1xf32>
    %381 = arith.addf %379, %380 : vector<16x1xf32>
    %382 = math.rsqrt %381 : vector<16x1xf32>
    %383 = vector.broadcast %382 : vector<16x1xf32> to vector<16x32xf32>
    %384 = arith.mulf %374, %383 : vector<16x32xf32>
    %385 = vector.broadcast %366 : vector<1x32xf32> to vector<16x32xf32>
    %386 = arith.mulf %384, %385 : vector<16x32xf32>
    %387 = vector.broadcast %368 : vector<1x32xf32> to vector<16x32xf32>
    %388 = arith.addf %386, %387 : vector<16x32xf32>
    %c0_230 = arith.constant 0 : index
    %c0_231 = arith.constant 0 : index
    %c0_232 = arith.constant 0 : index
    %389 = vector.load %arg14[%c0_230, %c0_231, %c0_232] : memref<2x32x64xf32, #tpu.memory_space<vmem>>, vector<1x32x64xf32>
    %390 = vector.shape_cast %389 : vector<1x32x64xf32> to vector<32x64xf32>
    %391 = arith.truncf %388 : vector<16x32xf32> to vector<16x32xbf16>
    %392 = arith.truncf %390 : vector<32x64xf32> to vector<32x64xbf16>
    %cst_233 = arith.constant dense<0.000000e+00> : vector<16x64xf32>
    %393 = tpu.matmul %391, %392, %cst_233 {dimension_numbers = #tpu.dot_dimension_numbers<[1], [0], [0], [1], [0, 0, 1, 1], [], []>} : vector<16x32xbf16>, vector<32x64xbf16>, vector<16x64xf32> -> vector<16x64xf32>
    %c0_234 = arith.constant 0 : index
    %c0_235 = arith.constant 0 : index
    %c0_236 = arith.constant 0 : index
    %394 = vector.load %arg15[%c0_234, %c0_235, %c0_236] : memref<2x1x64xf32, #tpu.memory_space<vmem>>, vector<1x1x64xf32>
    %395 = vector.shape_cast %394 : vector<1x1x64xf32> to vector<1x64xf32>
    %396 = vector.broadcast %395 : vector<1x64xf32> to vector<16x64xf32>
    %397 = arith.addf %393, %396 : vector<16x64xf32>
    %cst_237 = arith.constant 5.000000e-01 : f32
    %398 = vector.broadcast %cst_237 : f32 to vector<16x64xf32>
    %399 = arith.mulf %398, %397 : vector<16x64xf32>
    %cst_238 = arith.constant 4.471500e-02 : f32
    %400 = vector.broadcast %cst_238 : f32 to vector<16x64xf32>
    %401 = arith.mulf %400, %397 : vector<16x64xf32>
    %402 = arith.mulf %401, %397 : vector<16x64xf32>
    %403 = arith.mulf %402, %397 : vector<16x64xf32>
    %404 = arith.addf %397, %403 : vector<16x64xf32>
    %cst_239 = arith.constant 0.797884583 : f32
    %405 = vector.broadcast %cst_239 : f32 to vector<16x64xf32>
    %406 = arith.mulf %405, %404 : vector<16x64xf32>
    %407 = math.tanh %406 : vector<16x64xf32>
    %cst_240 = arith.constant 1.000000e+00 : f32
    %408 = vector.broadcast %cst_240 : f32 to vector<16x64xf32>
    %409 = arith.addf %408, %407 : vector<16x64xf32>
    %410 = arith.mulf %399, %409 : vector<16x64xf32>
    %c0_241 = arith.constant 0 : index
    %c0_242 = arith.constant 0 : index
    %c0_243 = arith.constant 0 : index
    %411 = vector.load %arg16[%c0_241, %c0_242, %c0_243] : memref<2x64x32xf32, #tpu.memory_space<vmem>>, vector<1x64x32xf32>
    %412 = vector.shape_cast %411 : vector<1x64x32xf32> to vector<64x32xf32>
    %413 = arith.truncf %410 : vector<16x64xf32> to vector<16x64xbf16>
    %414 = arith.truncf %412 : vector<64x32xf32> to vector<64x32xbf16>
    %cst_244 = arith.constant dense<0.000000e+00> : vector<16x32xf32>
    %415 = tpu.matmul %413, %414, %cst_244 {dimension_numbers = #tpu.dot_dimension_numbers<[1], [0], [0], [1], [0, 0, 1, 1], [], []>} : vector<16x64xbf16>, vector<64x32xbf16>, vector<16x32xf32> -> vector<16x32xf32>
    %c0_245 = arith.constant 0 : index
    %c0_246 = arith.constant 0 : index
    %c0_247 = arith.constant 0 : index
    %416 = vector.load %arg17[%c0_245, %c0_246, %c0_247] : memref<2x1x32xf32, #tpu.memory_space<vmem>>, vector<1x1x32xf32>
    %417 = vector.shape_cast %416 : vector<1x1x32xf32> to vector<1x32xf32>
    %418 = vector.broadcast %417 : vector<1x32xf32> to vector<16x32xf32>
    %419 = arith.addf %415, %418 : vector<16x32xf32>
    %420 = arith.addf %419, %388 : vector<16x32xf32>
    %c0_248 = arith.constant 0 : index
    %c0_249 = arith.constant 0 : index
    %c0_250 = arith.constant 0 : index
    %421 = vector.load %arg18[%c0_248, %c0_249, %c0_250] : memref<2x1x32xf32, #tpu.memory_space<vmem>>, vector<1x1x32xf32>
    %422 = vector.shape_cast %421 : vector<1x1x32xf32> to vector<1x32xf32>
    %c0_251 = arith.constant 0 : index
    %c0_252 = arith.constant 0 : index
    %c0_253 = arith.constant 0 : index
    %423 = vector.load %arg19[%c0_251, %c0_252, %c0_253] : memref<2x1x32xf32, #tpu.memory_space<vmem>>, vector<1x1x32xf32>
    %424 = vector.shape_cast %423 : vector<1x1x32xf32> to vector<1x32xf32>
    %cst_254 = arith.constant dense<0.000000e+00> : vector<16xf32>
    %425 = vector.multi_reduction <add>, %420, %cst_254 [1] : vector<16x32xf32> to vector<16xf32>
    %426 = vector.shape_cast %425 : vector<16xf32> to vector<16x1xf32>
    %cst_255 = arith.constant 3.200000e+01 : f32
    %427 = vector.broadcast %cst_255 : f32 to vector<16x1xf32>
    %428 = arith.divf %426, %427 : vector<16x1xf32>
    %429 = vector.broadcast %428 : vector<16x1xf32> to vector<16x32xf32>
    %430 = arith.subf %420, %429 : vector<16x32xf32>
    %431 = arith.mulf %430, %430 : vector<16x32xf32>
    %cst_256 = arith.constant dense<0.000000e+00> : vector<16xf32>
    %432 = vector.multi_reduction <add>, %431, %cst_256 [1] : vector<16x32xf32> to vector<16xf32>
    %433 = vector.shape_cast %432 : vector<16xf32> to vector<16x1xf32>
    %cst_257 = arith.constant 3.200000e+01 : f32
    %434 = vector.broadcast %cst_257 : f32 to vector<16x1xf32>
    %435 = arith.divf %433, %434 : vector<16x1xf32>
    %cst_258 = arith.constant 9.99999996E-13 : f32
    %436 = vector.broadcast %cst_258 : f32 to vector<16x1xf32>
    %437 = arith.addf %435, %436 : vector<16x1xf32>
    %438 = math.rsqrt %437 : vector<16x1xf32>
    %439 = vector.broadcast %438 : vector<16x1xf32> to vector<16x32xf32>
    %440 = arith.mulf %430, %439 : vector<16x32xf32>
    %441 = vector.broadcast %422 : vector<1x32xf32> to vector<16x32xf32>
    %442 = arith.mulf %440, %441 : vector<16x32xf32>
    %443 = vector.broadcast %424 : vector<1x32xf32> to vector<16x32xf32>
    %444 = arith.addf %442, %443 : vector<16x32xf32>
    %cst_259 = arith.constant 0.000000e+00 : f32
    %445 = vector.broadcast %cst_259 : f32 to vector<16x32xf32>
    %c1_260 = arith.constant 1 : index
    %c0_261 = arith.constant 0 : index
    %c0_262 = arith.constant 0 : index
    %c0_263 = arith.constant 0 : index
    %446 = vector.load %arg8[%c1_260, %c0_261, %c0_262, %c0_263] : memref<2x12x32x8xf32, #tpu.memory_space<vmem>>, vector<1x1x32x8xf32>
    %447 = vector.shape_cast %446 : vector<1x1x32x8xf32> to vector<32x8xf32>
    %448 = arith.truncf %444 : vector<16x32xf32> to vector<16x32xbf16>
    %449 = arith.truncf %447 : vector<32x8xf32> to vector<32x8xbf16>
    %cst_264 = arith.constant dense<0.000000e+00> : vector<16x8xf32>
    %450 = tpu.matmul %448, %449, %cst_264 {dimension_numbers = #tpu.dot_dimension_numbers<[1], [0], [0], [1], [0, 0, 1, 1], [], []>} : vector<16x32xbf16>, vector<32x8xbf16>, vector<16x8xf32> -> vector<16x8xf32>
    %c1_265 = arith.constant 1 : index
    %c0_266 = arith.constant 0 : index
    %c0_267 = arith.constant 0 : index
    %c0_268 = arith.constant 0 : index
    %451 = vector.load %arg9[%c1_265, %c0_266, %c0_267, %c0_268] : memref<2x12x1x8xf32, #tpu.memory_space<vmem>>, vector<1x1x1x8xf32>
    %452 = vector.shape_cast %451 : vector<1x1x1x8xf32> to vector<1x8xf32>
    %453 = vector.broadcast %452 : vector<1x8xf32> to vector<16x8xf32>
    %454 = arith.addf %450, %453 : vector<16x8xf32>
    %c1_269 = arith.constant 1 : index
    %c4_270 = arith.constant 4 : index
    %c0_271 = arith.constant 0 : index
    %c0_272 = arith.constant 0 : index
    %455 = vector.load %arg8[%c1_269, %c4_270, %c0_271, %c0_272] : memref<2x12x32x8xf32, #tpu.memory_space<vmem>>, vector<1x1x32x8xf32>
    %456 = vector.shape_cast %455 : vector<1x1x32x8xf32> to vector<32x8xf32>
    %457 = arith.truncf %444 : vector<16x32xf32> to vector<16x32xbf16>
    %458 = arith.truncf %456 : vector<32x8xf32> to vector<32x8xbf16>
    %cst_273 = arith.constant dense<0.000000e+00> : vector<16x8xf32>
    %459 = tpu.matmul %457, %458, %cst_273 {dimension_numbers = #tpu.dot_dimension_numbers<[1], [0], [0], [1], [0, 0, 1, 1], [], []>} : vector<16x32xbf16>, vector<32x8xbf16>, vector<16x8xf32> -> vector<16x8xf32>
    %c1_274 = arith.constant 1 : index
    %c4_275 = arith.constant 4 : index
    %c0_276 = arith.constant 0 : index
    %c0_277 = arith.constant 0 : index
    %460 = vector.load %arg9[%c1_274, %c4_275, %c0_276, %c0_277] : memref<2x12x1x8xf32, #tpu.memory_space<vmem>>, vector<1x1x1x8xf32>
    %461 = vector.shape_cast %460 : vector<1x1x1x8xf32> to vector<1x8xf32>
    %462 = vector.broadcast %461 : vector<1x8xf32> to vector<16x8xf32>
    %463 = arith.addf %459, %462 : vector<16x8xf32>
    %c1_278 = arith.constant 1 : index
    %c8_279 = arith.constant 8 : index
    %c0_280 = arith.constant 0 : index
    %c0_281 = arith.constant 0 : index
    %464 = vector.load %arg8[%c1_278, %c8_279, %c0_280, %c0_281] : memref<2x12x32x8xf32, #tpu.memory_space<vmem>>, vector<1x1x32x8xf32>
    %465 = vector.shape_cast %464 : vector<1x1x32x8xf32> to vector<32x8xf32>
    %466 = arith.truncf %444 : vector<16x32xf32> to vector<16x32xbf16>
    %467 = arith.truncf %465 : vector<32x8xf32> to vector<32x8xbf16>
    %cst_282 = arith.constant dense<0.000000e+00> : vector<16x8xf32>
    %468 = tpu.matmul %466, %467, %cst_282 {dimension_numbers = #tpu.dot_dimension_numbers<[1], [0], [0], [1], [0, 0, 1, 1], [], []>} : vector<16x32xbf16>, vector<32x8xbf16>, vector<16x8xf32> -> vector<16x8xf32>
    %c1_283 = arith.constant 1 : index
    %c8_284 = arith.constant 8 : index
    %c0_285 = arith.constant 0 : index
    %c0_286 = arith.constant 0 : index
    %469 = vector.load %arg9[%c1_283, %c8_284, %c0_285, %c0_286] : memref<2x12x1x8xf32, #tpu.memory_space<vmem>>, vector<1x1x1x8xf32>
    %470 = vector.shape_cast %469 : vector<1x1x1x8xf32> to vector<1x8xf32>
    %471 = vector.broadcast %470 : vector<1x8xf32> to vector<16x8xf32>
    %472 = arith.addf %468, %471 : vector<16x8xf32>
    %473 = vector.extract_strided_slice %454 {offsets = [0, 0], sizes = [8, 8], strides = [1, 1]} : vector<16x8xf32> to vector<8x8xf32>
    %474 = vector.extract_strided_slice %463 {offsets = [0, 0], sizes = [8, 8], strides = [1, 1]} : vector<16x8xf32> to vector<8x8xf32>
    %475 = vector.extract_strided_slice %472 {offsets = [0, 0], sizes = [8, 8], strides = [1, 1]} : vector<16x8xf32> to vector<8x8xf32>
    %cst_287 = arith.constant dense<0.000000e+00> : vector<8x8xf32>
    %476 = tpu.matmul %473, %474, %cst_287 {dimension_numbers = #tpu.dot_dimension_numbers<[1], [1], [0], [0], [0, 0, 1, 0], [], []>} : vector<8x8xf32>, vector<8x8xf32>, vector<8x8xf32> -> vector<8x8xf32>
    %cst_288 = arith.constant 0.353553385 : f32
    %477 = vector.broadcast %cst_288 : f32 to vector<8x8xf32>
    %478 = arith.mulf %476, %477 : vector<8x8xf32>
    %479 = vector.broadcast %55 : vector<1x8xf32> to vector<8x8xf32>
    %480 = arith.addf %478, %479 : vector<8x8xf32>
    %cst_289 = arith.constant dense<0xFF800000> : vector<8xf32>
    %481 = vector.multi_reduction <maximumf>, %480, %cst_289 [1] : vector<8x8xf32> to vector<8xf32>
    %482 = vector.shape_cast %481 : vector<8xf32> to vector<8x1xf32>
    %483 = vector.broadcast %482 : vector<8x1xf32> to vector<8x8xf32>
    %484 = arith.subf %480, %483 : vector<8x8xf32>
    %485 = math.exp %484 : vector<8x8xf32>
    %cst_290 = arith.constant dense<0.000000e+00> : vector<8xf32>
    %486 = vector.multi_reduction <add>, %485, %cst_290 [1] : vector<8x8xf32> to vector<8xf32>
    %487 = vector.shape_cast %486 : vector<8xf32> to vector<8x1xf32>
    %488 = tpu.reciprocal %487 {approx = true} : vector<8x1xf32> -> vector<8x1xf32>
    %489 = vector.broadcast %488 : vector<8x1xf32> to vector<8x8xf32>
    %490 = arith.mulf %485, %489 : vector<8x8xf32>
    %cst_291 = arith.constant dense<0.000000e+00> : vector<8x8xf32>
    %491 = tpu.matmul %490, %475, %cst_291 {dimension_numbers = #tpu.dot_dimension_numbers<[1], [0], [0], [1], [0, 0, 1, 1], [], []>} : vector<8x8xf32>, vector<8x8xf32>, vector<8x8xf32> -> vector<8x8xf32>
    %c0_292 = arith.constant 0 : index
    %c0_293 = arith.constant 0 : index
    %492 = vector.load %arg26[%c0_292, %c0_293] : memref<16x8xf32, #tpu.memory_space<vmem>>, vector<8x8xf32>
    tpu.vector_store %arg26[%c0_292, %c0_293], %491 {strides = array<i32>} : memref<16x8xf32, #tpu.memory_space<vmem>>, vector<8x8xf32>,
    %493 = vector.extract_strided_slice %454 {offsets = [8, 0], sizes = [8, 8], strides = [1, 1]} : vector<16x8xf32> to vector<8x8xf32>
    %494 = vector.extract_strided_slice %463 {offsets = [8, 0], sizes = [8, 8], strides = [1, 1]} : vector<16x8xf32> to vector<8x8xf32>
    %495 = vector.extract_strided_slice %472 {offsets = [8, 0], sizes = [8, 8], strides = [1, 1]} : vector<16x8xf32> to vector<8x8xf32>
    %cst_294 = arith.constant dense<0.000000e+00> : vector<8x8xf32>
    %496 = tpu.matmul %493, %494, %cst_294 {dimension_numbers = #tpu.dot_dimension_numbers<[1], [1], [0], [0], [0, 0, 1, 0], [], []>} : vector<8x8xf32>, vector<8x8xf32>, vector<8x8xf32> -> vector<8x8xf32>
    %cst_295 = arith.constant 0.353553385 : f32
    %497 = vector.broadcast %cst_295 : f32 to vector<8x8xf32>
    %498 = arith.mulf %496, %497 : vector<8x8xf32>
    %499 = vector.broadcast %62 : vector<1x8xf32> to vector<8x8xf32>
    %500 = arith.addf %498, %499 : vector<8x8xf32>
    %cst_296 = arith.constant dense<0xFF800000> : vector<8xf32>
    %501 = vector.multi_reduction <maximumf>, %500, %cst_296 [1] : vector<8x8xf32> to vector<8xf32>
    %502 = vector.shape_cast %501 : vector<8xf32> to vector<8x1xf32>
    %503 = vector.broadcast %502 : vector<8x1xf32> to vector<8x8xf32>
    %504 = arith.subf %500, %503 : vector<8x8xf32>
    %505 = math.exp %504 : vector<8x8xf32>
    %cst_297 = arith.constant dense<0.000000e+00> : vector<8xf32>
    %506 = vector.multi_reduction <add>, %505, %cst_297 [1] : vector<8x8xf32> to vector<8xf32>
    %507 = vector.shape_cast %506 : vector<8xf32> to vector<8x1xf32>
    %508 = tpu.reciprocal %507 {approx = true} : vector<8x1xf32> -> vector<8x1xf32>
    %509 = vector.broadcast %508 : vector<8x1xf32> to vector<8x8xf32>
    %510 = arith.mulf %505, %509 : vector<8x8xf32>
    %cst_298 = arith.constant dense<0.000000e+00> : vector<8x8xf32>
    %511 = tpu.matmul %510, %495, %cst_298 {dimension_numbers = #tpu.dot_dimension_numbers<[1], [0], [0], [1], [0, 0, 1, 1], [], []>} : vector<8x8xf32>, vector<8x8xf32>, vector<8x8xf32> -> vector<8x8xf32>
    %c8_299 = arith.constant 8 : index
    %c0_300 = arith.constant 0 : index
    %512 = vector.load %arg26[%c8_299, %c0_300] : memref<16x8xf32, #tpu.memory_space<vmem>>, vector<8x8xf32>
    tpu.vector_store %arg26[%c8_299, %c0_300], %511 {strides = array<i32>} : memref<16x8xf32, #tpu.memory_space<vmem>>, vector<8x8xf32>,
    %c0_301 = arith.constant 0 : index
    %c0_302 = arith.constant 0 : index
    %513 = vector.load %arg26[%c0_301, %c0_302] : memref<16x8xf32, #tpu.memory_space<vmem>>, vector<16x8xf32>
    %c1_303 = arith.constant 1 : index
    %c0_304 = arith.constant 0 : index
    %c0_305 = arith.constant 0 : index
    %c0_306 = arith.constant 0 : index
    %514 = vector.load %arg10[%c1_303, %c0_304, %c0_305, %c0_306] : memref<2x4x8x32xf32, #tpu.memory_space<vmem>>, vector<1x1x8x32xf32>
    %515 = vector.shape_cast %514 : vector<1x1x8x32xf32> to vector<8x32xf32>
    %516 = arith.truncf %513 : vector<16x8xf32> to vector<16x8xbf16>
    %517 = arith.truncf %515 : vector<8x32xf32> to vector<8x32xbf16>
    %cst_307 = arith.constant dense<0.000000e+00> : vector<16x32xf32>
    %518 = tpu.matmul %516, %517, %cst_307 {dimension_numbers = #tpu.dot_dimension_numbers<[1], [0], [0], [1], [0, 0, 1, 1], [], []>} : vector<16x8xbf16>, vector<8x32xbf16>, vector<16x32xf32> -> vector<16x32xf32>
    %519 = arith.addf %445, %518 : vector<16x32xf32>
    %c1_308 = arith.constant 1 : index
    %c1_309 = arith.constant 1 : index
    %c0_310 = arith.constant 0 : index
    %c0_311 = arith.constant 0 : index
    %520 = vector.load %arg8[%c1_308, %c1_309, %c0_310, %c0_311] : memref<2x12x32x8xf32, #tpu.memory_space<vmem>>, vector<1x1x32x8xf32>
    %521 = vector.shape_cast %520 : vector<1x1x32x8xf32> to vector<32x8xf32>
    %522 = arith.truncf %444 : vector<16x32xf32> to vector<16x32xbf16>
    %523 = arith.truncf %521 : vector<32x8xf32> to vector<32x8xbf16>
    %cst_312 = arith.constant dense<0.000000e+00> : vector<16x8xf32>
    %524 = tpu.matmul %522, %523, %cst_312 {dimension_numbers = #tpu.dot_dimension_numbers<[1], [0], [0], [1], [0, 0, 1, 1], [], []>} : vector<16x32xbf16>, vector<32x8xbf16>, vector<16x8xf32> -> vector<16x8xf32>
    %c1_313 = arith.constant 1 : index
    %c1_314 = arith.constant 1 : index
    %c0_315 = arith.constant 0 : index
    %c0_316 = arith.constant 0 : index
    %525 = vector.load %arg9[%c1_313, %c1_314, %c0_315, %c0_316] : memref<2x12x1x8xf32, #tpu.memory_space<vmem>>, vector<1x1x1x8xf32>
    %526 = vector.shape_cast %525 : vector<1x1x1x8xf32> to vector<1x8xf32>
    %527 = vector.broadcast %526 : vector<1x8xf32> to vector<16x8xf32>
    %528 = arith.addf %524, %527 : vector<16x8xf32>
    %c1_317 = arith.constant 1 : index
    %c5_318 = arith.constant 5 : index
    %c0_319 = arith.constant 0 : index
    %c0_320 = arith.constant 0 : index
    %529 = vector.load %arg8[%c1_317, %c5_318, %c0_319, %c0_320] : memref<2x12x32x8xf32, #tpu.memory_space<vmem>>, vector<1x1x32x8xf32>
    %530 = vector.shape_cast %529 : vector<1x1x32x8xf32> to vector<32x8xf32>
    %531 = arith.truncf %444 : vector<16x32xf32> to vector<16x32xbf16>
    %532 = arith.truncf %530 : vector<32x8xf32> to vector<32x8xbf16>
    %cst_321 = arith.constant dense<0.000000e+00> : vector<16x8xf32>
    %533 = tpu.matmul %531, %532, %cst_321 {dimension_numbers = #tpu.dot_dimension_numbers<[1], [0], [0], [1], [0, 0, 1, 1], [], []>} : vector<16x32xbf16>, vector<32x8xbf16>, vector<16x8xf32> -> vector<16x8xf32>
    %c1_322 = arith.constant 1 : index
    %c5_323 = arith.constant 5 : index
    %c0_324 = arith.constant 0 : index
    %c0_325 = arith.constant 0 : index
    %534 = vector.load %arg9[%c1_322, %c5_323, %c0_324, %c0_325] : memref<2x12x1x8xf32, #tpu.memory_space<vmem>>, vector<1x1x1x8xf32>
    %535 = vector.shape_cast %534 : vector<1x1x1x8xf32> to vector<1x8xf32>
    %536 = vector.broadcast %535 : vector<1x8xf32> to vector<16x8xf32>
    %537 = arith.addf %533, %536 : vector<16x8xf32>
    %c1_326 = arith.constant 1 : index
    %c9_327 = arith.constant 9 : index
    %c0_328 = arith.constant 0 : index
    %c0_329 = arith.constant 0 : index
    %538 = vector.load %arg8[%c1_326, %c9_327, %c0_328, %c0_329] : memref<2x12x32x8xf32, #tpu.memory_space<vmem>>, vector<1x1x32x8xf32>
    %539 = vector.shape_cast %538 : vector<1x1x32x8xf32> to vector<32x8xf32>
    %540 = arith.truncf %444 : vector<16x32xf32> to vector<16x32xbf16>
    %541 = arith.truncf %539 : vector<32x8xf32> to vector<32x8xbf16>
    %cst_330 = arith.constant dense<0.000000e+00> : vector<16x8xf32>
    %542 = tpu.matmul %540, %541, %cst_330 {dimension_numbers = #tpu.dot_dimension_numbers<[1], [0], [0], [1], [0, 0, 1, 1], [], []>} : vector<16x32xbf16>, vector<32x8xbf16>, vector<16x8xf32> -> vector<16x8xf32>
    %c1_331 = arith.constant 1 : index
    %c9_332 = arith.constant 9 : index
    %c0_333 = arith.constant 0 : index
    %c0_334 = arith.constant 0 : index
    %543 = vector.load %arg9[%c1_331, %c9_332, %c0_333, %c0_334] : memref<2x12x1x8xf32, #tpu.memory_space<vmem>>, vector<1x1x1x8xf32>
    %544 = vector.shape_cast %543 : vector<1x1x1x8xf32> to vector<1x8xf32>
    %545 = vector.broadcast %544 : vector<1x8xf32> to vector<16x8xf32>
    %546 = arith.addf %542, %545 : vector<16x8xf32>
    %547 = vector.extract_strided_slice %528 {offsets = [0, 0], sizes = [8, 8], strides = [1, 1]} : vector<16x8xf32> to vector<8x8xf32>
    %548 = vector.extract_strided_slice %537 {offsets = [0, 0], sizes = [8, 8], strides = [1, 1]} : vector<16x8xf32> to vector<8x8xf32>
    %549 = vector.extract_strided_slice %546 {offsets = [0, 0], sizes = [8, 8], strides = [1, 1]} : vector<16x8xf32> to vector<8x8xf32>
    %cst_335 = arith.constant dense<0.000000e+00> : vector<8x8xf32>
    %550 = tpu.matmul %547, %548, %cst_335 {dimension_numbers = #tpu.dot_dimension_numbers<[1], [1], [0], [0], [0, 0, 1, 0], [], []>} : vector<8x8xf32>, vector<8x8xf32>, vector<8x8xf32> -> vector<8x8xf32>
    %cst_336 = arith.constant 0.353553385 : f32
    %551 = vector.broadcast %cst_336 : f32 to vector<8x8xf32>
    %552 = arith.mulf %550, %551 : vector<8x8xf32>
    %553 = vector.broadcast %55 : vector<1x8xf32> to vector<8x8xf32>
    %554 = arith.addf %552, %553 : vector<8x8xf32>
    %cst_337 = arith.constant dense<0xFF800000> : vector<8xf32>
    %555 = vector.multi_reduction <maximumf>, %554, %cst_337 [1] : vector<8x8xf32> to vector<8xf32>
    %556 = vector.shape_cast %555 : vector<8xf32> to vector<8x1xf32>
    %557 = vector.broadcast %556 : vector<8x1xf32> to vector<8x8xf32>
    %558 = arith.subf %554, %557 : vector<8x8xf32>
    %559 = math.exp %558 : vector<8x8xf32>
    %cst_338 = arith.constant dense<0.000000e+00> : vector<8xf32>
    %560 = vector.multi_reduction <add>, %559, %cst_338 [1] : vector<8x8xf32> to vector<8xf32>
    %561 = vector.shape_cast %560 : vector<8xf32> to vector<8x1xf32>
    %562 = tpu.reciprocal %561 {approx = true} : vector<8x1xf32> -> vector<8x1xf32>
    %563 = vector.broadcast %562 : vector<8x1xf32> to vector<8x8xf32>
    %564 = arith.mulf %559, %563 : vector<8x8xf32>
    %cst_339 = arith.constant dense<0.000000e+00> : vector<8x8xf32>
    %565 = tpu.matmul %564, %549, %cst_339 {dimension_numbers = #tpu.dot_dimension_numbers<[1], [0], [0], [1], [0, 0, 1, 1], [], []>} : vector<8x8xf32>, vector<8x8xf32>, vector<8x8xf32> -> vector<8x8xf32>
    %c0_340 = arith.constant 0 : index
    %c0_341 = arith.constant 0 : index
    %566 = vector.load %arg26[%c0_340, %c0_341] : memref<16x8xf32, #tpu.memory_space<vmem>>, vector<8x8xf32>
    tpu.vector_store %arg26[%c0_340, %c0_341], %565 {strides = array<i32>} : memref<16x8xf32, #tpu.memory_space<vmem>>, vector<8x8xf32>,
    %567 = vector.extract_strided_slice %528 {offsets = [8, 0], sizes = [8, 8], strides = [1, 1]} : vector<16x8xf32> to vector<8x8xf32>
    %568 = vector.extract_strided_slice %537 {offsets = [8, 0], sizes = [8, 8], strides = [1, 1]} : vector<16x8xf32> to vector<8x8xf32>
    %569 = vector.extract_strided_slice %546 {offsets = [8, 0], sizes = [8, 8], strides = [1, 1]} : vector<16x8xf32> to vector<8x8xf32>
    %cst_342 = arith.constant dense<0.000000e+00> : vector<8x8xf32>
    %570 = tpu.matmul %567, %568, %cst_342 {dimension_numbers = #tpu.dot_dimension_numbers<[1], [1], [0], [0], [0, 0, 1, 0], [], []>} : vector<8x8xf32>, vector<8x8xf32>, vector<8x8xf32> -> vector<8x8xf32>
    %cst_343 = arith.constant 0.353553385 : f32
    %571 = vector.broadcast %cst_343 : f32 to vector<8x8xf32>
    %572 = arith.mulf %570, %571 : vector<8x8xf32>
    %573 = vector.broadcast %62 : vector<1x8xf32> to vector<8x8xf32>
    %574 = arith.addf %572, %573 : vector<8x8xf32>
    %cst_344 = arith.constant dense<0xFF800000> : vector<8xf32>
    %575 = vector.multi_reduction <maximumf>, %574, %cst_344 [1] : vector<8x8xf32> to vector<8xf32>
    %576 = vector.shape_cast %575 : vector<8xf32> to vector<8x1xf32>
    %577 = vector.broadcast %576 : vector<8x1xf32> to vector<8x8xf32>
    %578 = arith.subf %574, %577 : vector<8x8xf32>
    %579 = math.exp %578 : vector<8x8xf32>
    %cst_345 = arith.constant dense<0.000000e+00> : vector<8xf32>
    %580 = vector.multi_reduction <add>, %579, %cst_345 [1] : vector<8x8xf32> to vector<8xf32>
    %581 = vector.shape_cast %580 : vector<8xf32> to vector<8x1xf32>
    %582 = tpu.reciprocal %581 {approx = true} : vector<8x1xf32> -> vector<8x1xf32>
    %583 = vector.broadcast %582 : vector<8x1xf32> to vector<8x8xf32>
    %584 = arith.mulf %579, %583 : vector<8x8xf32>
    %cst_346 = arith.constant dense<0.000000e+00> : vector<8x8xf32>
    %585 = tpu.matmul %584, %569, %cst_346 {dimension_numbers = #tpu.dot_dimension_numbers<[1], [0], [0], [1], [0, 0, 1, 1], [], []>} : vector<8x8xf32>, vector<8x8xf32>, vector<8x8xf32> -> vector<8x8xf32>
    %c8_347 = arith.constant 8 : index
    %c0_348 = arith.constant 0 : index
    %586 = vector.load %arg26[%c8_347, %c0_348] : memref<16x8xf32, #tpu.memory_space<vmem>>, vector<8x8xf32>
    tpu.vector_store %arg26[%c8_347, %c0_348], %585 {strides = array<i32>} : memref<16x8xf32, #tpu.memory_space<vmem>>, vector<8x8xf32>,
    %c0_349 = arith.constant 0 : index
    %c0_350 = arith.constant 0 : index
    %587 = vector.load %arg26[%c0_349, %c0_350] : memref<16x8xf32, #tpu.memory_space<vmem>>, vector<16x8xf32>
    %c1_351 = arith.constant 1 : index
    %c1_352 = arith.constant 1 : index
    %c0_353 = arith.constant 0 : index
    %c0_354 = arith.constant 0 : index
    %588 = vector.load %arg10[%c1_351, %c1_352, %c0_353, %c0_354] : memref<2x4x8x32xf32, #tpu.memory_space<vmem>>, vector<1x1x8x32xf32>
    %589 = vector.shape_cast %588 : vector<1x1x8x32xf32> to vector<8x32xf32>
    %590 = arith.truncf %587 : vector<16x8xf32> to vector<16x8xbf16>
    %591 = arith.truncf %589 : vector<8x32xf32> to vector<8x32xbf16>
    %cst_355 = arith.constant dense<0.000000e+00> : vector<16x32xf32>
    %592 = tpu.matmul %590, %591, %cst_355 {dimension_numbers = #tpu.dot_dimension_numbers<[1], [0], [0], [1], [0, 0, 1, 1], [], []>} : vector<16x8xbf16>, vector<8x32xbf16>, vector<16x32xf32> -> vector<16x32xf32>
    %593 = arith.addf %519, %592 : vector<16x32xf32>
    %c1_356 = arith.constant 1 : index
    %c2_357 = arith.constant 2 : index
    %c0_358 = arith.constant 0 : index
    %c0_359 = arith.constant 0 : index
    %594 = vector.load %arg8[%c1_356, %c2_357, %c0_358, %c0_359] : memref<2x12x32x8xf32, #tpu.memory_space<vmem>>, vector<1x1x32x8xf32>
    %595 = vector.shape_cast %594 : vector<1x1x32x8xf32> to vector<32x8xf32>
    %596 = arith.truncf %444 : vector<16x32xf32> to vector<16x32xbf16>
    %597 = arith.truncf %595 : vector<32x8xf32> to vector<32x8xbf16>
    %cst_360 = arith.constant dense<0.000000e+00> : vector<16x8xf32>
    %598 = tpu.matmul %596, %597, %cst_360 {dimension_numbers = #tpu.dot_dimension_numbers<[1], [0], [0], [1], [0, 0, 1, 1], [], []>} : vector<16x32xbf16>, vector<32x8xbf16>, vector<16x8xf32> -> vector<16x8xf32>
    %c1_361 = arith.constant 1 : index
    %c2_362 = arith.constant 2 : index
    %c0_363 = arith.constant 0 : index
    %c0_364 = arith.constant 0 : index
    %599 = vector.load %arg9[%c1_361, %c2_362, %c0_363, %c0_364] : memref<2x12x1x8xf32, #tpu.memory_space<vmem>>, vector<1x1x1x8xf32>
    %600 = vector.shape_cast %599 : vector<1x1x1x8xf32> to vector<1x8xf32>
    %601 = vector.broadcast %600 : vector<1x8xf32> to vector<16x8xf32>
    %602 = arith.addf %598, %601 : vector<16x8xf32>
    %c1_365 = arith.constant 1 : index
    %c6_366 = arith.constant 6 : index
    %c0_367 = arith.constant 0 : index
    %c0_368 = arith.constant 0 : index
    %603 = vector.load %arg8[%c1_365, %c6_366, %c0_367, %c0_368] : memref<2x12x32x8xf32, #tpu.memory_space<vmem>>, vector<1x1x32x8xf32>
    %604 = vector.shape_cast %603 : vector<1x1x32x8xf32> to vector<32x8xf32>
    %605 = arith.truncf %444 : vector<16x32xf32> to vector<16x32xbf16>
    %606 = arith.truncf %604 : vector<32x8xf32> to vector<32x8xbf16>
    %cst_369 = arith.constant dense<0.000000e+00> : vector<16x8xf32>
    %607 = tpu.matmul %605, %606, %cst_369 {dimension_numbers = #tpu.dot_dimension_numbers<[1], [0], [0], [1], [0, 0, 1, 1], [], []>} : vector<16x32xbf16>, vector<32x8xbf16>, vector<16x8xf32> -> vector<16x8xf32>
    %c1_370 = arith.constant 1 : index
    %c6_371 = arith.constant 6 : index
    %c0_372 = arith.constant 0 : index
    %c0_373 = arith.constant 0 : index
    %608 = vector.load %arg9[%c1_370, %c6_371, %c0_372, %c0_373] : memref<2x12x1x8xf32, #tpu.memory_space<vmem>>, vector<1x1x1x8xf32>
    %609 = vector.shape_cast %608 : vector<1x1x1x8xf32> to vector<1x8xf32>
    %610 = vector.broadcast %609 : vector<1x8xf32> to vector<16x8xf32>
    %611 = arith.addf %607, %610 : vector<16x8xf32>
    %c1_374 = arith.constant 1 : index
    %c10_375 = arith.constant 10 : index
    %c0_376 = arith.constant 0 : index
    %c0_377 = arith.constant 0 : index
    %612 = vector.load %arg8[%c1_374, %c10_375, %c0_376, %c0_377] : memref<2x12x32x8xf32, #tpu.memory_space<vmem>>, vector<1x1x32x8xf32>
    %613 = vector.shape_cast %612 : vector<1x1x32x8xf32> to vector<32x8xf32>
    %614 = arith.truncf %444 : vector<16x32xf32> to vector<16x32xbf16>
    %615 = arith.truncf %613 : vector<32x8xf32> to vector<32x8xbf16>
    %cst_378 = arith.constant dense<0.000000e+00> : vector<16x8xf32>
    %616 = tpu.matmul %614, %615, %cst_378 {dimension_numbers = #tpu.dot_dimension_numbers<[1], [0], [0], [1], [0, 0, 1, 1], [], []>} : vector<16x32xbf16>, vector<32x8xbf16>, vector<16x8xf32> -> vector<16x8xf32>
    %c1_379 = arith.constant 1 : index
    %c10_380 = arith.constant 10 : index
    %c0_381 = arith.constant 0 : index
    %c0_382 = arith.constant 0 : index
    %617 = vector.load %arg9[%c1_379, %c10_380, %c0_381, %c0_382] : memref<2x12x1x8xf32, #tpu.memory_space<vmem>>, vector<1x1x1x8xf32>
    %618 = vector.shape_cast %617 : vector<1x1x1x8xf32> to vector<1x8xf32>
    %619 = vector.broadcast %618 : vector<1x8xf32> to vector<16x8xf32>
    %620 = arith.addf %616, %619 : vector<16x8xf32>
    %621 = vector.extract_strided_slice %602 {offsets = [0, 0], sizes = [8, 8], strides = [1, 1]} : vector<16x8xf32> to vector<8x8xf32>
    %622 = vector.extract_strided_slice %611 {offsets = [0, 0], sizes = [8, 8], strides = [1, 1]} : vector<16x8xf32> to vector<8x8xf32>
    %623 = vector.extract_strided_slice %620 {offsets = [0, 0], sizes = [8, 8], strides = [1, 1]} : vector<16x8xf32> to vector<8x8xf32>
    %cst_383 = arith.constant dense<0.000000e+00> : vector<8x8xf32>
    %624 = tpu.matmul %621, %622, %cst_383 {dimension_numbers = #tpu.dot_dimension_numbers<[1], [1], [0], [0], [0, 0, 1, 0], [], []>} : vector<8x8xf32>, vector<8x8xf32>, vector<8x8xf32> -> vector<8x8xf32>
    %cst_384 = arith.constant 0.353553385 : f32
    %625 = vector.broadcast %cst_384 : f32 to vector<8x8xf32>
    %626 = arith.mulf %624, %625 : vector<8x8xf32>
    %627 = vector.broadcast %55 : vector<1x8xf32> to vector<8x8xf32>
    %628 = arith.addf %626, %627 : vector<8x8xf32>
    %cst_385 = arith.constant dense<0xFF800000> : vector<8xf32>
    %629 = vector.multi_reduction <maximumf>, %628, %cst_385 [1] : vector<8x8xf32> to vector<8xf32>
    %630 = vector.shape_cast %629 : vector<8xf32> to vector<8x1xf32>
    %631 = vector.broadcast %630 : vector<8x1xf32> to vector<8x8xf32>
    %632 = arith.subf %628, %631 : vector<8x8xf32>
    %633 = math.exp %632 : vector<8x8xf32>
    %cst_386 = arith.constant dense<0.000000e+00> : vector<8xf32>
    %634 = vector.multi_reduction <add>, %633, %cst_386 [1] : vector<8x8xf32> to vector<8xf32>
    %635 = vector.shape_cast %634 : vector<8xf32> to vector<8x1xf32>
    %636 = tpu.reciprocal %635 {approx = true} : vector<8x1xf32> -> vector<8x1xf32>
    %637 = vector.broadcast %636 : vector<8x1xf32> to vector<8x8xf32>
    %638 = arith.mulf %633, %637 : vector<8x8xf32>
    %cst_387 = arith.constant dense<0.000000e+00> : vector<8x8xf32>
    %639 = tpu.matmul %638, %623, %cst_387 {dimension_numbers = #tpu.dot_dimension_numbers<[1], [0], [0], [1], [0, 0, 1, 1], [], []>} : vector<8x8xf32>, vector<8x8xf32>, vector<8x8xf32> -> vector<8x8xf32>
    %c0_388 = arith.constant 0 : index
    %c0_389 = arith.constant 0 : index
    %640 = vector.load %arg26[%c0_388, %c0_389] : memref<16x8xf32, #tpu.memory_space<vmem>>, vector<8x8xf32>
    tpu.vector_store %arg26[%c0_388, %c0_389], %639 {strides = array<i32>} : memref<16x8xf32, #tpu.memory_space<vmem>>, vector<8x8xf32>,
    %641 = vector.extract_strided_slice %602 {offsets = [8, 0], sizes = [8, 8], strides = [1, 1]} : vector<16x8xf32> to vector<8x8xf32>
    %642 = vector.extract_strided_slice %611 {offsets = [8, 0], sizes = [8, 8], strides = [1, 1]} : vector<16x8xf32> to vector<8x8xf32>
    %643 = vector.extract_strided_slice %620 {offsets = [8, 0], sizes = [8, 8], strides = [1, 1]} : vector<16x8xf32> to vector<8x8xf32>
    %cst_390 = arith.constant dense<0.000000e+00> : vector<8x8xf32>
    %644 = tpu.matmul %641, %642, %cst_390 {dimension_numbers = #tpu.dot_dimension_numbers<[1], [1], [0], [0], [0, 0, 1, 0], [], []>} : vector<8x8xf32>, vector<8x8xf32>, vector<8x8xf32> -> vector<8x8xf32>
    %cst_391 = arith.constant 0.353553385 : f32
    %645 = vector.broadcast %cst_391 : f32 to vector<8x8xf32>
    %646 = arith.mulf %644, %645 : vector<8x8xf32>
    %647 = vector.broadcast %62 : vector<1x8xf32> to vector<8x8xf32>
    %648 = arith.addf %646, %647 : vector<8x8xf32>
    %cst_392 = arith.constant dense<0xFF800000> : vector<8xf32>
    %649 = vector.multi_reduction <maximumf>, %648, %cst_392 [1] : vector<8x8xf32> to vector<8xf32>
    %650 = vector.shape_cast %649 : vector<8xf32> to vector<8x1xf32>
    %651 = vector.broadcast %650 : vector<8x1xf32> to vector<8x8xf32>
    %652 = arith.subf %648, %651 : vector<8x8xf32>
    %653 = math.exp %652 : vector<8x8xf32>
    %cst_393 = arith.constant dense<0.000000e+00> : vector<8xf32>
    %654 = vector.multi_reduction <add>, %653, %cst_393 [1] : vector<8x8xf32> to vector<8xf32>
    %655 = vector.shape_cast %654 : vector<8xf32> to vector<8x1xf32>
    %656 = tpu.reciprocal %655 {approx = true} : vector<8x1xf32> -> vector<8x1xf32>
    %657 = vector.broadcast %656 : vector<8x1xf32> to vector<8x8xf32>
    %658 = arith.mulf %653, %657 : vector<8x8xf32>
    %cst_394 = arith.constant dense<0.000000e+00> : vector<8x8xf32>
    %659 = tpu.matmul %658, %643, %cst_394 {dimension_numbers = #tpu.dot_dimension_numbers<[1], [0], [0], [1], [0, 0, 1, 1], [], []>} : vector<8x8xf32>, vector<8x8xf32>, vector<8x8xf32> -> vector<8x8xf32>
    %c8_395 = arith.constant 8 : index
    %c0_396 = arith.constant 0 : index
    %660 = vector.load %arg26[%c8_395, %c0_396] : memref<16x8xf32, #tpu.memory_space<vmem>>, vector<8x8xf32>
    tpu.vector_store %arg26[%c8_395, %c0_396], %659 {strides = array<i32>} : memref<16x8xf32, #tpu.memory_space<vmem>>, vector<8x8xf32>,
    %c0_397 = arith.constant 0 : index
    %c0_398 = arith.constant 0 : index
    %661 = vector.load %arg26[%c0_397, %c0_398] : memref<16x8xf32, #tpu.memory_space<vmem>>, vector<16x8xf32>
    %c1_399 = arith.constant 1 : index
    %c2_400 = arith.constant 2 : index
    %c0_401 = arith.constant 0 : index
    %c0_402 = arith.constant 0 : index
    %662 = vector.load %arg10[%c1_399, %c2_400, %c0_401, %c0_402] : memref<2x4x8x32xf32, #tpu.memory_space<vmem>>, vector<1x1x8x32xf32>
    %663 = vector.shape_cast %662 : vector<1x1x8x32xf32> to vector<8x32xf32>
    %664 = arith.truncf %661 : vector<16x8xf32> to vector<16x8xbf16>
    %665 = arith.truncf %663 : vector<8x32xf32> to vector<8x32xbf16>
    %cst_403 = arith.constant dense<0.000000e+00> : vector<16x32xf32>
    %666 = tpu.matmul %664, %665, %cst_403 {dimension_numbers = #tpu.dot_dimension_numbers<[1], [0], [0], [1], [0, 0, 1, 1], [], []>} : vector<16x8xbf16>, vector<8x32xbf16>, vector<16x32xf32> -> vector<16x32xf32>
    %667 = arith.addf %593, %666 : vector<16x32xf32>
    %c1_404 = arith.constant 1 : index
    %c3_405 = arith.constant 3 : index
    %c0_406 = arith.constant 0 : index
    %c0_407 = arith.constant 0 : index
    %668 = vector.load %arg8[%c1_404, %c3_405, %c0_406, %c0_407] : memref<2x12x32x8xf32, #tpu.memory_space<vmem>>, vector<1x1x32x8xf32>
    %669 = vector.shape_cast %668 : vector<1x1x32x8xf32> to vector<32x8xf32>
    %670 = arith.truncf %444 : vector<16x32xf32> to vector<16x32xbf16>
    %671 = arith.truncf %669 : vector<32x8xf32> to vector<32x8xbf16>
    %cst_408 = arith.constant dense<0.000000e+00> : vector<16x8xf32>
    %672 = tpu.matmul %670, %671, %cst_408 {dimension_numbers = #tpu.dot_dimension_numbers<[1], [0], [0], [1], [0, 0, 1, 1], [], []>} : vector<16x32xbf16>, vector<32x8xbf16>, vector<16x8xf32> -> vector<16x8xf32>
    %c1_409 = arith.constant 1 : index
    %c3_410 = arith.constant 3 : index
    %c0_411 = arith.constant 0 : index
    %c0_412 = arith.constant 0 : index
    %673 = vector.load %arg9[%c1_409, %c3_410, %c0_411, %c0_412] : memref<2x12x1x8xf32, #tpu.memory_space<vmem>>, vector<1x1x1x8xf32>
    %674 = vector.shape_cast %673 : vector<1x1x1x8xf32> to vector<1x8xf32>
    %675 = vector.broadcast %674 : vector<1x8xf32> to vector<16x8xf32>
    %676 = arith.addf %672, %675 : vector<16x8xf32>
    %c1_413 = arith.constant 1 : index
    %c7_414 = arith.constant 7 : index
    %c0_415 = arith.constant 0 : index
    %c0_416 = arith.constant 0 : index
    %677 = vector.load %arg8[%c1_413, %c7_414, %c0_415, %c0_416] : memref<2x12x32x8xf32, #tpu.memory_space<vmem>>, vector<1x1x32x8xf32>
    %678 = vector.shape_cast %677 : vector<1x1x32x8xf32> to vector<32x8xf32>
    %679 = arith.truncf %444 : vector<16x32xf32> to vector<16x32xbf16>
    %680 = arith.truncf %678 : vector<32x8xf32> to vector<32x8xbf16>
    %cst_417 = arith.constant dense<0.000000e+00> : vector<16x8xf32>
    %681 = tpu.matmul %679, %680, %cst_417 {dimension_numbers = #tpu.dot_dimension_numbers<[1], [0], [0], [1], [0, 0, 1, 1], [], []>} : vector<16x32xbf16>, vector<32x8xbf16>, vector<16x8xf32> -> vector<16x8xf32>
    %c1_418 = arith.constant 1 : index
    %c7_419 = arith.constant 7 : index
    %c0_420 = arith.constant 0 : index
    %c0_421 = arith.constant 0 : index
    %682 = vector.load %arg9[%c1_418, %c7_419, %c0_420, %c0_421] : memref<2x12x1x8xf32, #tpu.memory_space<vmem>>, vector<1x1x1x8xf32>
    %683 = vector.shape_cast %682 : vector<1x1x1x8xf32> to vector<1x8xf32>
    %684 = vector.broadcast %683 : vector<1x8xf32> to vector<16x8xf32>
    %685 = arith.addf %681, %684 : vector<16x8xf32>
    %c1_422 = arith.constant 1 : index
    %c11_423 = arith.constant 11 : index
    %c0_424 = arith.constant 0 : index
    %c0_425 = arith.constant 0 : index
    %686 = vector.load %arg8[%c1_422, %c11_423, %c0_424, %c0_425] : memref<2x12x32x8xf32, #tpu.memory_space<vmem>>, vector<1x1x32x8xf32>
    %687 = vector.shape_cast %686 : vector<1x1x32x8xf32> to vector<32x8xf32>
    %688 = arith.truncf %444 : vector<16x32xf32> to vector<16x32xbf16>
    %689 = arith.truncf %687 : vector<32x8xf32> to vector<32x8xbf16>
    %cst_426 = arith.constant dense<0.000000e+00> : vector<16x8xf32>
    %690 = tpu.matmul %688, %689, %cst_426 {dimension_numbers = #tpu.dot_dimension_numbers<[1], [0], [0], [1], [0, 0, 1, 1], [], []>} : vector<16x32xbf16>, vector<32x8xbf16>, vector<16x8xf32> -> vector<16x8xf32>
    %c1_427 = arith.constant 1 : index
    %c11_428 = arith.constant 11 : index
    %c0_429 = arith.constant 0 : index
    %c0_430 = arith.constant 0 : index
    %691 = vector.load %arg9[%c1_427, %c11_428, %c0_429, %c0_430] : memref<2x12x1x8xf32, #tpu.memory_space<vmem>>, vector<1x1x1x8xf32>
    %692 = vector.shape_cast %691 : vector<1x1x1x8xf32> to vector<1x8xf32>
    %693 = vector.broadcast %692 : vector<1x8xf32> to vector<16x8xf32>
    %694 = arith.addf %690, %693 : vector<16x8xf32>
    %695 = vector.extract_strided_slice %676 {offsets = [0, 0], sizes = [8, 8], strides = [1, 1]} : vector<16x8xf32> to vector<8x8xf32>
    %696 = vector.extract_strided_slice %685 {offsets = [0, 0], sizes = [8, 8], strides = [1, 1]} : vector<16x8xf32> to vector<8x8xf32>
    %697 = vector.extract_strided_slice %694 {offsets = [0, 0], sizes = [8, 8], strides = [1, 1]} : vector<16x8xf32> to vector<8x8xf32>
    %cst_431 = arith.constant dense<0.000000e+00> : vector<8x8xf32>
    %698 = tpu.matmul %695, %696, %cst_431 {dimension_numbers = #tpu.dot_dimension_numbers<[1], [1], [0], [0], [0, 0, 1, 0], [], []>} : vector<8x8xf32>, vector<8x8xf32>, vector<8x8xf32> -> vector<8x8xf32>
    %cst_432 = arith.constant 0.353553385 : f32
    %699 = vector.broadcast %cst_432 : f32 to vector<8x8xf32>
    %700 = arith.mulf %698, %699 : vector<8x8xf32>
    %701 = vector.broadcast %55 : vector<1x8xf32> to vector<8x8xf32>
    %702 = arith.addf %700, %701 : vector<8x8xf32>
    %cst_433 = arith.constant dense<0xFF800000> : vector<8xf32>
    %703 = vector.multi_reduction <maximumf>, %702, %cst_433 [1] : vector<8x8xf32> to vector<8xf32>
    %704 = vector.shape_cast %703 : vector<8xf32> to vector<8x1xf32>
    %705 = vector.broadcast %704 : vector<8x1xf32> to vector<8x8xf32>
    %706 = arith.subf %702, %705 : vector<8x8xf32>
    %707 = math.exp %706 : vector<8x8xf32>
    %cst_434 = arith.constant dense<0.000000e+00> : vector<8xf32>
    %708 = vector.multi_reduction <add>, %707, %cst_434 [1] : vector<8x8xf32> to vector<8xf32>
    %709 = vector.shape_cast %708 : vector<8xf32> to vector<8x1xf32>
    %710 = tpu.reciprocal %709 {approx = true} : vector<8x1xf32> -> vector<8x1xf32>
    %711 = vector.broadcast %710 : vector<8x1xf32> to vector<8x8xf32>
    %712 = arith.mulf %707, %711 : vector<8x8xf32>
    %cst_435 = arith.constant dense<0.000000e+00> : vector<8x8xf32>
    %713 = tpu.matmul %712, %697, %cst_435 {dimension_numbers = #tpu.dot_dimension_numbers<[1], [0], [0], [1], [0, 0, 1, 1], [], []>} : vector<8x8xf32>, vector<8x8xf32>, vector<8x8xf32> -> vector<8x8xf32>
    %c0_436 = arith.constant 0 : index
    %c0_437 = arith.constant 0 : index
    %714 = vector.load %arg26[%c0_436, %c0_437] : memref<16x8xf32, #tpu.memory_space<vmem>>, vector<8x8xf32>
    tpu.vector_store %arg26[%c0_436, %c0_437], %713 {strides = array<i32>} : memref<16x8xf32, #tpu.memory_space<vmem>>, vector<8x8xf32>,
    %715 = vector.extract_strided_slice %676 {offsets = [8, 0], sizes = [8, 8], strides = [1, 1]} : vector<16x8xf32> to vector<8x8xf32>
    %716 = vector.extract_strided_slice %685 {offsets = [8, 0], sizes = [8, 8], strides = [1, 1]} : vector<16x8xf32> to vector<8x8xf32>
    %717 = vector.extract_strided_slice %694 {offsets = [8, 0], sizes = [8, 8], strides = [1, 1]} : vector<16x8xf32> to vector<8x8xf32>
    %cst_438 = arith.constant dense<0.000000e+00> : vector<8x8xf32>
    %718 = tpu.matmul %715, %716, %cst_438 {dimension_numbers = #tpu.dot_dimension_numbers<[1], [1], [0], [0], [0, 0, 1, 0], [], []>} : vector<8x8xf32>, vector<8x8xf32>, vector<8x8xf32> -> vector<8x8xf32>
    %cst_439 = arith.constant 0.353553385 : f32
    %719 = vector.broadcast %cst_439 : f32 to vector<8x8xf32>
    %720 = arith.mulf %718, %719 : vector<8x8xf32>
    %721 = vector.broadcast %62 : vector<1x8xf32> to vector<8x8xf32>
    %722 = arith.addf %720, %721 : vector<8x8xf32>
    %cst_440 = arith.constant dense<0xFF800000> : vector<8xf32>
    %723 = vector.multi_reduction <maximumf>, %722, %cst_440 [1] : vector<8x8xf32> to vector<8xf32>
    %724 = vector.shape_cast %723 : vector<8xf32> to vector<8x1xf32>
    %725 = vector.broadcast %724 : vector<8x1xf32> to vector<8x8xf32>
    %726 = arith.subf %722, %725 : vector<8x8xf32>
    %727 = math.exp %726 : vector<8x8xf32>
    %cst_441 = arith.constant dense<0.000000e+00> : vector<8xf32>
    %728 = vector.multi_reduction <add>, %727, %cst_441 [1] : vector<8x8xf32> to vector<8xf32>
    %729 = vector.shape_cast %728 : vector<8xf32> to vector<8x1xf32>
    %730 = tpu.reciprocal %729 {approx = true} : vector<8x1xf32> -> vector<8x1xf32>
    %731 = vector.broadcast %730 : vector<8x1xf32> to vector<8x8xf32>
    %732 = arith.mulf %727, %731 : vector<8x8xf32>
    %cst_442 = arith.constant dense<0.000000e+00> : vector<8x8xf32>
    %733 = tpu.matmul %732, %717, %cst_442 {dimension_numbers = #tpu.dot_dimension_numbers<[1], [0], [0], [1], [0, 0, 1, 1], [], []>} : vector<8x8xf32>, vector<8x8xf32>, vector<8x8xf32> -> vector<8x8xf32>
    %c8_443 = arith.constant 8 : index
    %c0_444 = arith.constant 0 : index
    %734 = vector.load %arg26[%c8_443, %c0_444] : memref<16x8xf32, #tpu.memory_space<vmem>>, vector<8x8xf32>
    tpu.vector_store %arg26[%c8_443, %c0_444], %733 {strides = array<i32>} : memref<16x8xf32, #tpu.memory_space<vmem>>, vector<8x8xf32>,
    %c0_445 = arith.constant 0 : index
    %c0_446 = arith.constant 0 : index
    %735 = vector.load %arg26[%c0_445, %c0_446] : memref<16x8xf32, #tpu.memory_space<vmem>>, vector<16x8xf32>
    %c1_447 = arith.constant 1 : index
    %c3_448 = arith.constant 3 : index
    %c0_449 = arith.constant 0 : index
    %c0_450 = arith.constant 0 : index
    %736 = vector.load %arg10[%c1_447, %c3_448, %c0_449, %c0_450] : memref<2x4x8x32xf32, #tpu.memory_space<vmem>>, vector<1x1x8x32xf32>
    %737 = vector.shape_cast %736 : vector<1x1x8x32xf32> to vector<8x32xf32>
    %738 = arith.truncf %735 : vector<16x8xf32> to vector<16x8xbf16>
    %739 = arith.truncf %737 : vector<8x32xf32> to vector<8x32xbf16>
    %cst_451 = arith.constant dense<0.000000e+00> : vector<16x32xf32>
    %740 = tpu.matmul %738, %739, %cst_451 {dimension_numbers = #tpu.dot_dimension_numbers<[1], [0], [0], [1], [0, 0, 1, 1], [], []>} : vector<16x8xbf16>, vector<8x32xbf16>, vector<16x32xf32> -> vector<16x32xf32>
    %741 = arith.addf %667, %740 : vector<16x32xf32>
    %c1_452 = arith.constant 1 : index
    %c0_453 = arith.constant 0 : index
    %c0_454 = arith.constant 0 : index
    %742 = vector.load %arg11[%c1_452, %c0_453, %c0_454] : memref<2x1x32xf32, #tpu.memory_space<vmem>>, vector<1x1x32xf32>
    %743 = vector.shape_cast %742 : vector<1x1x32xf32> to vector<1x32xf32>
    %744 = vector.broadcast %743 : vector<1x32xf32> to vector<16x32xf32>
    %745 = arith.addf %741, %744 : vector<16x32xf32>
    %746 = arith.addf %745, %444 : vector<16x32xf32>
    %c1_455 = arith.constant 1 : index
    %c0_456 = arith.constant 0 : index
    %c0_457 = arith.constant 0 : index
    %747 = vector.load %arg12[%c1_455, %c0_456, %c0_457] : memref<2x1x32xf32, #tpu.memory_space<vmem>>, vector<1x1x32xf32>
    %748 = vector.shape_cast %747 : vector<1x1x32xf32> to vector<1x32xf32>
    %c1_458 = arith.constant 1 : index
    %c0_459 = arith.constant 0 : index
    %c0_460 = arith.constant 0 : index
    %749 = vector.load %arg13[%c1_458, %c0_459, %c0_460] : memref<2x1x32xf32, #tpu.memory_space<vmem>>, vector<1x1x32xf32>
    %750 = vector.shape_cast %749 : vector<1x1x32xf32> to vector<1x32xf32>
    %cst_461 = arith.constant dense<0.000000e+00> : vector<16xf32>
    %751 = vector.multi_reduction <add>, %746, %cst_461 [1] : vector<16x32xf32> to vector<16xf32>
    %752 = vector.shape_cast %751 : vector<16xf32> to vector<16x1xf32>
    %cst_462 = arith.constant 3.200000e+01 : f32
    %753 = vector.broadcast %cst_462 : f32 to vector<16x1xf32>
    %754 = arith.divf %752, %753 : vector<16x1xf32>
    %755 = vector.broadcast %754 : vector<16x1xf32> to vector<16x32xf32>
    %756 = arith.subf %746, %755 : vector<16x32xf32>
    %757 = arith.mulf %756, %756 : vector<16x32xf32>
    %cst_463 = arith.constant dense<0.000000e+00> : vector<16xf32>
    %758 = vector.multi_reduction <add>, %757, %cst_463 [1] : vector<16x32xf32> to vector<16xf32>
    %759 = vector.shape_cast %758 : vector<16xf32> to vector<16x1xf32>
    %cst_464 = arith.constant 3.200000e+01 : f32
    %760 = vector.broadcast %cst_464 : f32 to vector<16x1xf32>
    %761 = arith.divf %759, %760 : vector<16x1xf32>
    %cst_465 = arith.constant 9.99999996E-13 : f32
    %762 = vector.broadcast %cst_465 : f32 to vector<16x1xf32>
    %763 = arith.addf %761, %762 : vector<16x1xf32>
    %764 = math.rsqrt %763 : vector<16x1xf32>
    %765 = vector.broadcast %764 : vector<16x1xf32> to vector<16x32xf32>
    %766 = arith.mulf %756, %765 : vector<16x32xf32>
    %767 = vector.broadcast %748 : vector<1x32xf32> to vector<16x32xf32>
    %768 = arith.mulf %766, %767 : vector<16x32xf32>
    %769 = vector.broadcast %750 : vector<1x32xf32> to vector<16x32xf32>
    %770 = arith.addf %768, %769 : vector<16x32xf32>
    %c1_466 = arith.constant 1 : index
    %c0_467 = arith.constant 0 : index
    %c0_468 = arith.constant 0 : index
    %771 = vector.load %arg14[%c1_466, %c0_467, %c0_468] : memref<2x32x64xf32, #tpu.memory_space<vmem>>, vector<1x32x64xf32>
    %772 = vector.shape_cast %771 : vector<1x32x64xf32> to vector<32x64xf32>
    %773 = arith.truncf %770 : vector<16x32xf32> to vector<16x32xbf16>
    %774 = arith.truncf %772 : vector<32x64xf32> to vector<32x64xbf16>
    %cst_469 = arith.constant dense<0.000000e+00> : vector<16x64xf32>
    %775 = tpu.matmul %773, %774, %cst_469 {dimension_numbers = #tpu.dot_dimension_numbers<[1], [0], [0], [1], [0, 0, 1, 1], [], []>} : vector<16x32xbf16>, vector<32x64xbf16>, vector<16x64xf32> -> vector<16x64xf32>
    %c1_470 = arith.constant 1 : index
    %c0_471 = arith.constant 0 : index
    %c0_472 = arith.constant 0 : index
    %776 = vector.load %arg15[%c1_470, %c0_471, %c0_472] : memref<2x1x64xf32, #tpu.memory_space<vmem>>, vector<1x1x64xf32>
    %777 = vector.shape_cast %776 : vector<1x1x64xf32> to vector<1x64xf32>
    %778 = vector.broadcast %777 : vector<1x64xf32> to vector<16x64xf32>
    %779 = arith.addf %775, %778 : vector<16x64xf32>
    %cst_473 = arith.constant 5.000000e-01 : f32
    %780 = vector.broadcast %cst_473 : f32 to vector<16x64xf32>
    %781 = arith.mulf %780, %779 : vector<16x64xf32>
    %cst_474 = arith.constant 4.471500e-02 : f32
    %782 = vector.broadcast %cst_474 : f32 to vector<16x64xf32>
    %783 = arith.mulf %782, %779 : vector<16x64xf32>
    %784 = arith.mulf %783, %779 : vector<16x64xf32>
    %785 = arith.mulf %784, %779 : vector<16x64xf32>
    %786 = arith.addf %779, %785 : vector<16x64xf32>
    %cst_475 = arith.constant 0.797884583 : f32
    %787 = vector.broadcast %cst_475 : f32 to vector<16x64xf32>
    %788 = arith.mulf %787, %786 : vector<16x64xf32>
    %789 = math.tanh %788 : vector<16x64xf32>
    %cst_476 = arith.constant 1.000000e+00 : f32
    %790 = vector.broadcast %cst_476 : f32 to vector<16x64xf32>
    %791 = arith.addf %790, %789 : vector<16x64xf32>
    %792 = arith.mulf %781, %791 : vector<16x64xf32>
    %c1_477 = arith.constant 1 : index
    %c0_478 = arith.constant 0 : index
    %c0_479 = arith.constant 0 : index
    %793 = vector.load %arg16[%c1_477, %c0_478, %c0_479] : memref<2x64x32xf32, #tpu.memory_space<vmem>>, vector<1x64x32xf32>
    %794 = vector.shape_cast %793 : vector<1x64x32xf32> to vector<64x32xf32>
    %795 = arith.truncf %792 : vector<16x64xf32> to vector<16x64xbf16>
    %796 = arith.truncf %794 : vector<64x32xf32> to vector<64x32xbf16>
    %cst_480 = arith.constant dense<0.000000e+00> : vector<16x32xf32>
    %797 = tpu.matmul %795, %796, %cst_480 {dimension_numbers = #tpu.dot_dimension_numbers<[1], [0], [0], [1], [0, 0, 1, 1], [], []>} : vector<16x64xbf16>, vector<64x32xbf16>, vector<16x32xf32> -> vector<16x32xf32>
    %c1_481 = arith.constant 1 : index
    %c0_482 = arith.constant 0 : index
    %c0_483 = arith.constant 0 : index
    %798 = vector.load %arg17[%c1_481, %c0_482, %c0_483] : memref<2x1x32xf32, #tpu.memory_space<vmem>>, vector<1x1x32xf32>
    %799 = vector.shape_cast %798 : vector<1x1x32xf32> to vector<1x32xf32>
    %800 = vector.broadcast %799 : vector<1x32xf32> to vector<16x32xf32>
    %801 = arith.addf %797, %800 : vector<16x32xf32>
    %802 = arith.addf %801, %770 : vector<16x32xf32>
    %c1_484 = arith.constant 1 : index
    %c0_485 = arith.constant 0 : index
    %c0_486 = arith.constant 0 : index
    %803 = vector.load %arg18[%c1_484, %c0_485, %c0_486] : memref<2x1x32xf32, #tpu.memory_space<vmem>>, vector<1x1x32xf32>
    %804 = vector.shape_cast %803 : vector<1x1x32xf32> to vector<1x32xf32>
    %c1_487 = arith.constant 1 : index
    %c0_488 = arith.constant 0 : index
    %c0_489 = arith.constant 0 : index
    %805 = vector.load %arg19[%c1_487, %c0_488, %c0_489] : memref<2x1x32xf32, #tpu.memory_space<vmem>>, vector<1x1x32xf32>
    %806 = vector.shape_cast %805 : vector<1x1x32xf32> to vector<1x32xf32>
    %cst_490 = arith.constant dense<0.000000e+00> : vector<16xf32>
    %807 = vector.multi_reduction <add>, %802, %cst_490 [1] : vector<16x32xf32> to vector<16xf32>
    %808 = vector.shape_cast %807 : vector<16xf32> to vector<16x1xf32>
    %cst_491 = arith.constant 3.200000e+01 : f32
    %809 = vector.broadcast %cst_491 : f32 to vector<16x1xf32>
    %810 = arith.divf %808, %809 : vector<16x1xf32>
    %811 = vector.broadcast %810 : vector<16x1xf32> to vector<16x32xf32>
    %812 = arith.subf %802, %811 : vector<16x32xf32>
    %813 = arith.mulf %812, %812 : vector<16x32xf32>
    %cst_492 = arith.constant dense<0.000000e+00> : vector<16xf32>
    %814 = vector.multi_reduction <add>, %813, %cst_492 [1] : vector<16x32xf32> to vector<16xf32>
    %815 = vector.shape_cast %814 : vector<16xf32> to vector<16x1xf32>
    %cst_493 = arith.constant 3.200000e+01 : f32
    %816 = vector.broadcast %cst_493 : f32 to vector<16x1xf32>
    %817 = arith.divf %815, %816 : vector<16x1xf32>
    %cst_494 = arith.constant 9.99999996E-13 : f32
    %818 = vector.broadcast %cst_494 : f32 to vector<16x1xf32>
    %819 = arith.addf %817, %818 : vector<16x1xf32>
    %820 = math.rsqrt %819 : vector<16x1xf32>
    %821 = vector.broadcast %820 : vector<16x1xf32> to vector<16x32xf32>
    %822 = arith.mulf %812, %821 : vector<16x32xf32>
    %823 = vector.broadcast %804 : vector<1x32xf32> to vector<16x32xf32>
    %824 = arith.mulf %822, %823 : vector<16x32xf32>
    %825 = vector.broadcast %806 : vector<1x32xf32> to vector<16x32xf32>
    %826 = arith.addf %824, %825 : vector<16x32xf32>
    %c0_495 = arith.constant 0 : index
    %c0_496 = arith.constant 0 : index
    %827 = vector.load %arg20[%c0_495, %c0_496] : memref<32x32xf32, #tpu.memory_space<vmem>>, vector<32x32xf32>
    %828 = arith.truncf %826 : vector<16x32xf32> to vector<16x32xbf16>
    %829 = arith.truncf %827 : vector<32x32xf32> to vector<32x32xbf16>
    %cst_497 = arith.constant dense<0.000000e+00> : vector<16x32xf32>
    %830 = tpu.matmul %828, %829, %cst_497 {dimension_numbers = #tpu.dot_dimension_numbers<[1], [0], [0], [1], [0, 0, 1, 1], [], []>} : vector<16x32xbf16>, vector<32x32xbf16>, vector<16x32xf32> -> vector<16x32xf32>
    %c0_498 = arith.constant 0 : index
    %c0_499 = arith.constant 0 : index
    %831 = vector.load %arg21[%c0_498, %c0_499] : memref<1x32xf32, #tpu.memory_space<vmem>>, vector<1x32xf32>
    %832 = vector.broadcast %831 : vector<1x32xf32> to vector<16x32xf32>
    %833 = arith.addf %830, %832 : vector<16x32xf32>
    %cst_500 = arith.constant 5.000000e-01 : f32
    %834 = vector.broadcast %cst_500 : f32 to vector<16x32xf32>
    %835 = arith.mulf %834, %833 : vector<16x32xf32>
    %cst_501 = arith.constant 4.471500e-02 : f32
    %836 = vector.broadcast %cst_501 : f32 to vector<16x32xf32>
    %837 = arith.mulf %836, %833 : vector<16x32xf32>
    %838 = arith.mulf %837, %833 : vector<16x32xf32>
    %839 = arith.mulf %838, %833 : vector<16x32xf32>
    %840 = arith.addf %833, %839 : vector<16x32xf32>
    %cst_502 = arith.constant 0.797884583 : f32
    %841 = vector.broadcast %cst_502 : f32 to vector<16x32xf32>
    %842 = arith.mulf %841, %840 : vector<16x32xf32>
    %843 = math.tanh %842 : vector<16x32xf32>
    %cst_503 = arith.constant 1.000000e+00 : f32
    %844 = vector.broadcast %cst_503 : f32 to vector<16x32xf32>
    %845 = arith.addf %844, %843 : vector<16x32xf32>
    %846 = arith.mulf %835, %845 : vector<16x32xf32>
    %c0_504 = arith.constant 0 : index
    %c0_505 = arith.constant 0 : index
    %847 = vector.load %arg22[%c0_504, %c0_505] : memref<1x32xf32, #tpu.memory_space<vmem>>, vector<1x32xf32>
    %c0_506 = arith.constant 0 : index
    %c0_507 = arith.constant 0 : index
    %848 = vector.load %arg23[%c0_506, %c0_507] : memref<1x32xf32, #tpu.memory_space<vmem>>, vector<1x32xf32>
    %cst_508 = arith.constant dense<0.000000e+00> : vector<16xf32>
    %849 = vector.multi_reduction <add>, %846, %cst_508 [1] : vector<16x32xf32> to vector<16xf32>
    %850 = vector.shape_cast %849 : vector<16xf32> to vector<16x1xf32>
    %cst_509 = arith.constant 3.200000e+01 : f32
    %851 = vector.broadcast %cst_509 : f32 to vector<16x1xf32>
    %852 = arith.divf %850, %851 : vector<16x1xf32>
    %853 = vector.broadcast %852 : vector<16x1xf32> to vector<16x32xf32>
    %854 = arith.subf %846, %853 : vector<16x32xf32>
    %855 = arith.mulf %854, %854 : vector<16x32xf32>
    %cst_510 = arith.constant dense<0.000000e+00> : vector<16xf32>
    %856 = vector.multi_reduction <add>, %855, %cst_510 [1] : vector<16x32xf32> to vector<16xf32>
    %857 = vector.shape_cast %856 : vector<16xf32> to vector<16x1xf32>
    %cst_511 = arith.constant 3.200000e+01 : f32
    %858 = vector.broadcast %cst_511 : f32 to vector<16x1xf32>
    %859 = arith.divf %857, %858 : vector<16x1xf32>
    %cst_512 = arith.constant 9.99999996E-13 : f32
    %860 = vector.broadcast %cst_512 : f32 to vector<16x1xf32>
    %861 = arith.addf %859, %860 : vector<16x1xf32>
    %862 = math.rsqrt %861 : vector<16x1xf32>
    %863 = vector.broadcast %862 : vector<16x1xf32> to vector<16x32xf32>
    %864 = arith.mulf %854, %863 : vector<16x32xf32>
    %865 = vector.broadcast %847 : vector<1x32xf32> to vector<16x32xf32>
    %866 = arith.mulf %864, %865 : vector<16x32xf32>
    %867 = vector.broadcast %848 : vector<1x32xf32> to vector<16x32xf32>
    %868 = arith.addf %866, %867 : vector<16x32xf32>
    %869 = arith.truncf %868 : vector<16x32xf32> to vector<16x32xbf16>
    %c0_513 = arith.constant 0 : index
    %c0_514 = arith.constant 0 : index
    %870 = vector.load %arg3[%c0_513, %c0_514] : memref<128x32xf32, #tpu.memory_space<vmem>>, vector<128x32xf32>
    %871 = arith.truncf %870 : vector<128x32xf32> to vector<128x32xbf16>
    %cst_515 = arith.constant dense<0.000000e+00> : vector<16x128xf32>
    %872 = tpu.matmul %869, %871, %cst_515 {dimension_numbers = #tpu.dot_dimension_numbers<[1], [1], [0], [0], [0, 0, 1, 0], [], []>} : vector<16x32xbf16>, vector<128x32xbf16>, vector<16x128xf32> -> vector<16x128xf32>
    %c0_516 = arith.constant 0 : index
    %c0_517 = arith.constant 0 : index
    %873 = vector.load %arg24[%c0_516, %c0_517] : memref<1x128xf32, #tpu.memory_space<vmem>>, vector<1x128xf32>
    %874 = vector.broadcast %873 : vector<1x128xf32> to vector<16x128xf32>
    %875 = arith.addf %872, %874 : vector<16x128xf32>
    %cst_518 = arith.constant dense<0xFF800000> : vector<16xf32>
    %876 = vector.multi_reduction <maximumf>, %875, %cst_518 [1] : vector<16x128xf32> to vector<16xf32>
    %877 = vector.shape_cast %876 : vector<16xf32> to vector<16x1xf32>
    %878 = tpu.iota {dimensions = array<i32: 1>} : vector<16x128xi32>
    %879 = vector.broadcast %877 : vector<16x1xf32> to vector<16x128xf32>
    %880 = arith.cmpf oeq, %875, %879 : vector<16x128xf32>
    %c128_i32 = arith.constant 128 : i32
    %881 = vector.broadcast %c128_i32 : i32 to vector<16x128xi32>
    %882 = arith.select %880, %878, %881 : vector<16x128xi1>, vector<16x128xi32>
    %cst_519 = arith.constant dense<2147483647> : vector<16xi32>
    %883 = vector.multi_reduction <minsi>, %882, %cst_519 [1] : vector<16x128xi32> to vector<16xi32>
    %884 = vector.shape_cast %883 : vector<16xi32> to vector<16x1xi32>
    %c0_520 = arith.constant 0 : index
    %c0_521 = arith.constant 0 : index
    %885 = vector.load %arg25[%c0_520, %c0_521] : memref<16x1xi32, #tpu.memory_space<vmem>>, vector<16x1xi32>
    tpu.vector_store %arg25[%c0_520, %c0_521], %884 {strides = array<i32>} : memref<16x1xi32, #tpu.memory_space<vmem>>, vector<16x1xi32>,
    return
  }
}

</mosaic_0001>

<llo_original>
// kernel: forward.1
$region0: #{forward.1}
  #allocation0 [shape = 'u32[]', space=smem, size = 0x4, offset = 0x4, fixed_abs, tag = 'smem constant byte address 0x4 - core index']
  #allocation1 [shape = 'u32[72,128]{1,0:T(1,128)}', space=vmem, size = 0x9000, scoped, tag = 'internal scratch']
  #allocation2 [shape = 'f32[16,8]{1,0:T(8,128)}', space=vmem, size = 0x2000, scoped, tag = 'scratch operand']
  %s0 = inlined_call_operand.vmem [shape: s32[16,1], index: 0, kind: input, shape index: {}]
  %s1 = inlined_call_operand.vmem [shape: s32[16,1], index: 1, kind: input, shape index: {}]
  %s2 = inlined_call_operand.vmem [shape: s32[2,1,8], index: 2, kind: input, shape index: {}]
  %s3 = inlined_call_operand.vmem [shape: f32[128,32], index: 3, kind: input, shape index: {}]
  %s4 = inlined_call_operand.vmem [shape: f32[16,32], index: 4, kind: input, shape index: {}]
  %s5 = inlined_call_operand.vmem [shape: f32[2,1,32], index: 5, kind: input, shape index: {}]
  %s6 = inlined_call_operand.vmem [shape: f32[1,32], index: 6, kind: input, shape index: {}]
  %s7 = inlined_call_operand.vmem [shape: f32[1,32], index: 7, kind: input, shape index: {}]
  %s8 = inlined_call_operand.vmem [shape: f32[2,12,32,8], index: 8, kind: input, shape index: {}]
  %s9 = inlined_call_operand.vmem [shape: f32[2,12,1,8], index: 9, kind: input, shape index: {}]
  %s10 = inlined_call_operand.vmem [shape: f32[2,4,8,32], index: 10, kind: input, shape index: {}]
  %s11 = inlined_call_operand.vmem [shape: f32[2,1,32], index: 11, kind: input, shape index: {}]
  %s12 = inlined_call_operand.vmem [shape: f32[2,1,32], index: 12, kind: input, shape index: {}]
  %s13 = inlined_call_operand.vmem [shape: f32[2,1,32], index: 13, kind: input, shape index: {}]
  %s14 = inlined_call_operand.vmem [shape: f32[2,32,64], index: 14, kind: input, shape index: {}]
  %s15 = inlined_call_operand.vmem [shape: f32[2,1,64], index: 15, kind: input, shape index: {}]
  %s16 = inlined_call_operand.vmem [shape: f32[2,64,32], index: 16, kind: input, shape index: {}]
  %s17 = inlined_call_operand.vmem [shape: f32[2,1,32], index: 17, kind: input, shape index: {}]
  %s18 = inlined_call_operand.vmem [shape: f32[2,1,32], index: 18, kind: input, shape index: {}]
  %s19 = inlined_call_operand.vmem [shape: f32[2,1,32], index: 19, kind: input, shape index: {}]
  %s20 = inlined_call_operand.vmem [shape: f32[32,32], index: 20, kind: input, shape index: {}]
  %s21 = inlined_call_operand.vmem [shape: f32[1,32], index: 21, kind: input, shape index: {}]
  %s22 = inlined_call_operand.vmem [shape: f32[1,32], index: 22, kind: input, shape index: {}]
  %s23 = inlined_call_operand.vmem [shape: f32[1,32], index: 23, kind: input, shape index: {}]
  %s24 = inlined_call_operand.vmem [shape: f32[1,128], index: 24, kind: input, shape index: {}]
  %s25 = inlined_call_operand.vmem [shape: s32[16,1], index: 25, kind: output, shape index: {}]
  %s26 = sld [smem:[#allocation0]]
  $region110: #{forward.1} parent=0
    _
  %s28 = ssub.s32 1, %s26
  %s29 = scalar_select 0, %s28, %s26
  // Predicated region
  $region2: #{forward.1} parent=0 // pred_check
    _
  $region3: #{forward.1} parent=0 // pred_check_branch
    %31 = sbr.rel (0) target = $region5
  $region4: #{forward.1} parent=0 // pred_region
    _
  $region5: #{forward.1} parent=0 // pred_fallthru
    _
  // Predicated region
  $region6: #{forward.1} parent=0 // pred_check
    _
  $region7: #{forward.1} parent=0 // pred_check_branch
    %33 = sbr.rel (0) target = $region9
  $region8: #{forward.1} parent=0 // pred_region
    _
  $region9: #{forward.1} parent=0 // pred_fallthru
    _
  // Predicated region
  $region10: #{forward.1} parent=0 // pred_check
    _
  $region11: #{forward.1} parent=0 // pred_check_branch
    %35 = sbr.rel (0) target = $region13
  $region12: #{forward.1} parent=0 // pred_region
    _
  $region13: #{forward.1} parent=0 // pred_fallthru
    _
  // Predicated region
  $region14: #{forward.1} parent=0 // pred_check
    _
  $region15: #{forward.1} parent=0 // pred_check_branch
    %37 = sbr.rel (0) target = $region17
  $region16: #{forward.1} parent=0 // pred_region
    _
  $region17: #{forward.1} parent=0 // pred_fallthru
    _
  // Predicated region
  $region18: #{forward.1} parent=0 // pred_check
    _
  $region19: #{forward.1} parent=0 // pred_check_branch
    %39 = sbr.rel (0) target = $region21
  $region20: #{forward.1} parent=0 // pred_region
    _
  $region21: #{forward.1} parent=0 // pred_fallthru
    _
  // Predicated region
  $region22: #{forward.1} parent=0 // pred_check
    _
  $region23: #{forward.1} parent=0 // pred_check_branch
    %41 = sbr.rel (0) target = $region25
  $region24: #{forward.1} parent=0 // pred_region
    _
  $region25: #{forward.1} parent=0 // pred_fallthru
    _
  // Predicated region
  $region26: #{forward.1} parent=0 // pred_check
    _
  $region27: #{forward.1} parent=0 // pred_check_branch
    %43 = sbr.rel (0) target = $region29
  $region28: #{forward.1} parent=0 // pred_region
    _
  $region29: #{forward.1} parent=0 // pred_fallthru
    _
  // Predicated region
  $region30: #{forward.1} parent=0 // pred_check
    _
  $region31: #{forward.1} parent=0 // pred_check_branch
    %45 = sbr.rel (0) target = $region33
  $region32: #{forward.1} parent=0 // pred_region
    _
  $region33: #{forward.1} parent=0 // pred_fallthru
    _
  // Predicated region
  $region34: #{forward.1} parent=0 // pred_check
    _
  $region35: #{forward.1} parent=0 // pred_check_branch
    %47 = sbr.rel (0) target = $region37
  $region36: #{forward.1} parent=0 // pred_region
    _
  $region37: #{forward.1} parent=0 // pred_fallthru
    _
  // Predicated region
  $region38: #{forward.1} parent=0 // pred_check
    _
  $region39: #{forward.1} parent=0 // pred_check_branch
    %49 = sbr.rel (0) target = $region41
  $region40: #{forward.1} parent=0 // pred_region
    _
  $region41: #{forward.1} parent=0 // pred_fallthru
    _
  // Predicated region
  $region42: #{forward.1} parent=0 // pred_check
    _
  $region43: #{forward.1} parent=0 // pred_check_branch
    %51 = sbr.rel (0) target = $region45
  $region44: #{forward.1} parent=0 // pred_region
    _
  $region45: #{forward.1} parent=0 // pred_fallthru
    _
  // Predicated region
  $region46: #{forward.1} parent=0 // pred_check
    _
  $region47: #{forward.1} parent=0 // pred_check_branch
    %53 = sbr.rel (0) target = $region49
  $region48: #{forward.1} parent=0 // pred_region
    _
  $region49: #{forward.1} parent=0 // pred_fallthru
    _
  // Predicated region
  $region50: #{forward.1} parent=0 // pred_check
    _
  $region51: #{forward.1} parent=0 // pred_check_branch
    %55 = sbr.rel (0) target = $region53
  $region52: #{forward.1} parent=0 // pred_region
    _
  $region53: #{forward.1} parent=0 // pred_fallthru
    _
  // Predicated region
  $region54: #{forward.1} parent=0 // pred_check
    _
  $region55: #{forward.1} parent=0 // pred_check_branch
    %57 = sbr.rel (0) target = $region57
  $region56: #{forward.1} parent=0 // pred_region
    _
  $region57: #{forward.1} parent=0 // pred_fallthru
    _
  // Predicated region
  $region58: #{forward.1} parent=0 // pred_check
    _
  $region59: #{forward.1} parent=0 // pred_check_branch
    %59 = sbr.rel (0) target = $region61
  $region60: #{forward.1} parent=0 // pred_region
    _
  $region61: #{forward.1} parent=0 // pred_fallthru
    _
  // Predicated region
  $region62: #{forward.1} parent=0 // pred_check
    _
  $region63: #{forward.1} parent=0 // pred_check_branch
    %61 = sbr.rel (0) target = $region65
  $region64: #{forward.1} parent=0 // pred_region
    _
  $region65: #{forward.1} parent=0 // pred_fallthru
    _
  // Predicated region
  $region66: #{forward.1} parent=0 // pred_check
    _
  $region67: #{forward.1} parent=0 // pred_check_branch
    %63 = sbr.rel (0) target = $region69
  $region68: #{forward.1} parent=0 // pred_region
    _
  $region69: #{forward.1} parent=0 // pred_fallthru
    _
  // Predicated region
  $region70: #{forward.1} parent=0 // pred_check
    _
  $region71: #{forward.1} parent=0 // pred_check_branch
    %65 = sbr.rel (0) target = $region73
  $region72: #{forward.1} parent=0 // pred_region
    _
  $region73: #{forward.1} parent=0 // pred_fallthru
    _
  // Predicated region
  $region74: #{forward.1} parent=0 // pred_check
    _
  $region75: #{forward.1} parent=0 // pred_check_branch
    %67 = sbr.rel (0) target = $region77
  $region76: #{forward.1} parent=0 // pred_region
    _
  $region77: #{forward.1} parent=0 // pred_fallthru
    _
  // Predicated region
  $region78: #{forward.1} parent=0 // pred_check
    _
  $region79: #{forward.1} parent=0 // pred_check_branch
    %69 = sbr.rel (0) target = $region81
  $region80: #{forward.1} parent=0 // pred_region
    _
  $region81: #{forward.1} parent=0 // pred_fallthru
    _
  // Predicated region
  $region82: #{forward.1} parent=0 // pred_check
    _
  $region83: #{forward.1} parent=0 // pred_check_branch
    %71 = sbr.rel (0) target = $region85
  $region84: #{forward.1} parent=0 // pred_region
    _
  $region85: #{forward.1} parent=0 // pred_fallthru
    _
  // Predicated region
  $region86: #{forward.1} parent=0 // pred_check
    _
  $region87: #{forward.1} parent=0 // pred_check_branch
    %73 = sbr.rel (0) target = $region89
  $region88: #{forward.1} parent=0 // pred_region
    _
  $region89: #{forward.1} parent=0 // pred_fallthru
    _
  // Predicated region
  $region90: #{forward.1} parent=0 // pred_check
    _
  $region91: #{forward.1} parent=0 // pred_check_branch
    %75 = sbr.rel (0) target = $region93
  $region92: #{forward.1} parent=0 // pred_region
    _
  $region93: #{forward.1} parent=0 // pred_fallthru
    _
  // Predicated region
  $region94: #{forward.1} parent=0 // pred_check
    _
  $region95: #{forward.1} parent=0 // pred_check_branch
    %77 = sbr.rel (0) target = $region97
  $region96: #{forward.1} parent=0 // pred_region
    _
  $region97: #{forward.1} parent=0 // pred_fallthru
    _
  // Predicated region
  $region98: #{forward.1} parent=0 // pred_check
    _
  $region99: #{forward.1} parent=0 // pred_check_branch
    %79 = sbr.rel (0) target = $region101
  $region100: #{forward.1} parent=0 // pred_region
    _
  $region101: #{forward.1} parent=0 // pred_fallthru
    _
  %v81 = vld [vmem:[%s0] sm:$0xff]
  %v82 = vld [vmem:[%s0 + $0x8] sm:$0xff]
  %v83 = vlaneseq
  %v84 = vand.u32 %v83, 127
  %85 = vset.pattern.permute.xlu0 0
  %86 = vperm.xlu0 %85, %v81
  %v87 = vpop.permute.xlu0 %86
  %88 = vset.pattern.permute.xlu0 0
  %89 = vperm.xlu0 %88, %v82
  %v90 = vpop.permute.xlu0 %89
  %vm91 = vcmp.eq.s32.totalorder %v87, %v84
  %vm92 = vcmp.eq.s32.totalorder %v90, %v84
  %v93 = vsel %vm91, 1, 0
  %v94 = vsel %vm92, 1, 0
  %v95 = vcvt.s32.f32 %v93
  %v96 = vcvt.s32.f32 %v94
  %v97 = vpack.c.bf16 %v96, %v95
  %v98 = vld [vmem:[%s3] sm:$0xff]
  %v99 = vld [vmem:[%s3 + $0x8] sm:$0xff]
  %v100 = vld [vmem:[%s3 + $0x10] sm:$0xff]
  %v101 = vld [vmem:[%s3 + $0x18] sm:$0xff]
  %v102 = vld [vmem:[%s3 + $0x20] sm:$0xff]
  %v103 = vld [vmem:[%s3 + $0x28] sm:$0xff]
  %v104 = vld [vmem:[%s3 + $0x30] sm:$0xff]
  %v105 = vld [vmem:[%s3 + $0x38] sm:$0xff]
  %v106 = vld [vmem:[%s3 + $0x40] sm:$0xff]
  %v107 = vld [vmem:[%s3 + $0x48] sm:$0xff]
  %v108 = vld [vmem:[%s3 + $0x50] sm:$0xff]
  %v109 = vld [vmem:[%s3 + $0x58] sm:$0xff]
  %v110 = vld [vmem:[%s3 + $0x60] sm:$0xff]
  %v111 = vld [vmem:[%s3 + $0x68] sm:$0xff]
  %v112 = vld [vmem:[%s3 + $0x70] sm:$0xff]
  %v113 = vld [vmem:[%s3 + $0x78] sm:$0xff]
  %v114 = vpack.c.bf16 %v99, %v98
  %v115 = vpack.c.bf16 %v101, %v100
  %v116 = vpack.c.bf16 %v103, %v102
  %v117 = vpack.c.bf16 %v105, %v104
  %v118 = vpack.c.bf16 %v107, %v106
  %v119 = vpack.c.bf16 %v109, %v108
  %v120 = vpack.c.bf16 %v111, %v110
  %v121 = vpack.c.bf16 %v113, %v112
  %v122 = vld [vmem:[%s1] sm:$0xff]
  %v123 = vld [vmem:[%s1 + $0x8] sm:$0xff]
  %vm124 = vcmp.eq.s32.totalorder %v122, 0
  %vm125 = vcmp.eq.s32.totalorder %v123, 0
  %v126 = vld [vmem:[%s5] sm:$0x1]
  %s127 = scalar_lea.vmem %s5, 1
  %v128 = vld [vmem:[%s127] sm:$0x1]
  %v129 = vsel %vm124, 1, 0
  %v130 = vsel %vm125, 1, 0
  %131 = vset.pattern.permute.xlu0 0
  %132 = vperm.xlu0 %131, %v129
  %v133 = vpop.permute.xlu0 %132
  %134 = vset.pattern.permute.xlu0 0
  %135 = vperm.xlu0 %134, %v130
  %v136 = vpop.permute.xlu0 %135
  %vm137 = vcmp.eq.s32.totalorder %v133, 1
  %vm138 = vcmp.eq.s32.totalorder %v136, 1
  %v140 = vperm.slane %v126, 0
  %v143 = vperm.slane %v128, 0
  %v145 = vsel %vm137, %v140, %v143
  %v146 = vsel %vm138, %v140, %v143
  %v147 = vld [vmem:[%s4] sm:$0xff]
  %v148 = vld [vmem:[%s4 + $0x8] sm:$0xff]
  %149 = vmatpush.bf16.msra.mxu0 %v121
  %150 = vmatpush.bf16.msra.mxu0 %v120
  %151 = vmatpush.bf16.msra.mxu0 %v119
  %152 = vmatpush.bf16.msra.mxu0 %v118
  %153 = vmatpush.bf16.msra.mxu0 %v117
  %154 = vmatpush.bf16.msra.mxu0 %v116
  %155 = vmatpush.bf16.msra.mxu0 %v115
  %156 = vmatpush.bf16.msra.mxu0 %v114
  %157 = vmatmul.bf16.gmra.mxu0 %v97
  %v158 = vpop.f32.mrf.mxu0
  %v159 = vadd.f32 %v147, %v158
  %v160 = vpop.f32.mrf.mxu0
  %v161 = vadd.f32 %v148, %v160
  %162 = vdwg.mxu0
  %v163 = vadd.f32 %v159, %v145
  %v164 = vadd.f32 %v161, %v146
  %v165 = vld [vmem:[%s6] sm:$0x1]
  %v166 = vld [vmem:[%s7] sm:$0x1]
  %vm167 = vcmask 261120
  %v168 = vsel %vm167, %v163, 0.0
  %169 = vadd.xlane.f32.xlu0 %v168
  %v170 = vpop.xlane.xlu0 %169
  %v171 = vsel %vm167, %v164, 0.0
  %172 = vadd.xlane.f32.xlu0 %v171
  %v173 = vpop.xlane.xlu0 %172
  %v174 = vrcp.pop 32.0
  %v175 = vmul.f32 32.0, %v174
  %v176 = vsub.f32 1.0, %v175
  %v177 = vmul.f32 %v174, %v176
  %v178 = vadd.f32 %v174, %v177
  %vm179 = vweird.f32 %v174
  %v180 = vsel %vm179, %v174, %v178
  %v181 = vmul.f32 %v170, %v180
  %v182 = vmul.f32 %v173, %v180
  %v183 = vsub.f32 %v163, %v181
  %v184 = vsub.f32 %v164, %v182
  %v185 = vmul.f32 %v183, %v183
  %v186 = vmul.f32 %v184, %v184
  %v187 = vsel %vm167, %v185, 0.0
  %188 = vadd.xlane.f32.xlu0 %v187
  %v189 = vpop.xlane.xlu0 %188
  %v190 = vsel %vm167, %v186, 0.0
  %191 = vadd.xlane.f32.xlu0 %v190
  %v192 = vpop.xlane.xlu0 %191
  %v193 = vmul.f32 %v189, %v180
  %v194 = vmul.f32 %v192, %v180
  %v195 = vadd.f32 %v193, 1e-12
  %v196 = vadd.f32 %v194, 1e-12
  %v197 = vrsqrt.pop %v195
  %v198 = vmul.f32 %v197, %v195
  %v199 = vmul.f32 %v198, %v197
  %v200 = vmul.f32 0.5, %v199
  %v201 = vsub.f32 1.5, %v200
  %v202 = vmul.f32 %v197, %v201
  %vm203 = vweird.f32 %v195
  %vm204 = vweird.f32 %v197
  %vm205 = vmor %vm203, %vm204
  %v206 = vsel %vm205, %v197, %v202
  %v207 = vrsqrt.pop %v196
  %v208 = vmul.f32 %v207, %v196
  %v209 = vmul.f32 %v208, %v207
  %v210 = vmul.f32 0.5, %v209
  %v211 = vsub.f32 1.5, %v210
  %v212 = vmul.f32 %v207, %v211
  %vm213 = vweird.f32 %v196
  %vm214 = vweird.f32 %v207
  %vm215 = vmor %vm213, %vm214
  %v216 = vsel %vm215, %v207, %v212
  %v217 = vmul.f32 %v183, %v206
  %v218 = vmul.f32 %v184, %v216
  %v220 = vperm.slane %v165, 0
  %v222 = vmul.f32 %v217, %v220
  %v223 = vmul.f32 %v218, %v220
  %v225 = vperm.slane %v166, 0
  %v227 = vadd.f32 %v222, %v225
  %v228 = vadd.f32 %v223, %v225
  %v229 = vld [vmem:[%s2] sm:$0x1]
  %vm230 = vcmp.gt.s32.totalorder %v229, 0
  %v231 = vsel %vm230, 0.0, -1e+09
  %s232 = scalar_lea.vmem %s2, 1
  %v233 = vld [vmem:[%s232] sm:$0x1]
  %vm234 = vcmp.gt.s32.totalorder %v233, 0
  %v235 = vsel %vm234, 0.0, -1e+09
  %v236 = vld [vmem:[%s8] sm:$0xff]
  %v237 = vld [vmem:[%s8 + $0x8] sm:$0xff]
  %v238 = vld [vmem:[%s8 + $0x10] sm:$0xff]
  %v239 = vld [vmem:[%s8 + $0x18] sm:$0xff]
  %v240 = vpack.c.bf16 %v228, %v227
  %v241 = vpack.c.bf16 %v237, %v236
  %v242 = vpack.c.bf16 %v239, %v238
  %v243 = vld [vmem:[%s9] sm:$0x1]
  %v245 = vperm.slane %v243, 0
  %v248 = vsel %vm167, %v240, 0
  %250 = vmatpush.bf16.msra.mxu0 0
  %251 = vmatpush.bf16.msra.mxu0 0
  %252 = vmatpush.bf16.msra.mxu0 0
  %253 = vmatpush.bf16.msra.mxu0 0
  %254 = vmatpush.bf16.msra.mxu0 0
  %255 = vmatpush.bf16.msra.mxu0 0
  %256 = vmatpush.bf16.msra.mxu0 %v242
  %257 = vmatpush.bf16.msra.mxu0 %v241
  %258 = vmatmul.bf16.gmra.mxu0 %v248
  %v259 = vpop.f32.mrf.mxu0
  %v260 = vadd.f32 %v245, %v259
  %v261 = vpop.f32.mrf.mxu0
  %v262 = vadd.f32 %v245, %v261
  %263 = vdwg.mxu0
  %s264 = scalar_lea.vmem %s8, 128
  %v265 = vld [vmem:[%s264] sm:$0xff]
  %v266 = vld [vmem:[%s264 + $0x8] sm:$0xff]
  %v267 = vld [vmem:[%s264 + $0x10] sm:$0xff]
  %v268 = vld [vmem:[%s264 + $0x18] sm:$0xff]
  %v269 = vpack.c.bf16 %v266, %v265
  %v270 = vpack.c.bf16 %v268, %v267
  %s271 = scalar_lea.vmem %s9, 4
  %v272 = vld [vmem:[%s271] sm:$0x1]
  %v274 = vperm.slane %v272, 0
  %276 = vmatpush.bf16.msra.mxu0 0
  %277 = vmatpush.bf16.msra.mxu0 0
  %278 = vmatpush.bf16.msra.mxu0 0
  %279 = vmatpush.bf16.msra.mxu0 0
  %280 = vmatpush.bf16.msra.mxu0 0
  %281 = vmatpush.bf16.msra.mxu0 0
  %282 = vmatpush.bf16.msra.mxu0 %v270
  %283 = vmatpush.bf16.msra.mxu0 %v269
  %284 = vmatmul.bf16.gmra.mxu0 %v248
  %v285 = vpop.f32.mrf.mxu0
  %v286 = vadd.f32 %v274, %v285
  %v287 = vpop.f32.mrf.mxu0
  %v288 = vadd.f32 %v274, %v287
  %289 = vdwg.mxu0
  %s290 = scalar_lea.vmem %s8, 256
  %v291 = vld [vmem:[%s290] sm:$0xff]
  %v292 = vld [vmem:[%s290 + $0x8] sm:$0xff]
  %v293 = vld [vmem:[%s290 + $0x10] sm:$0xff]
  %v294 = vld [vmem:[%s290 + $0x18] sm:$0xff]
  %v295 = vpack.c.bf16 %v292, %v291
  %v296 = vpack.c.bf16 %v294, %v293
  %s297 = scalar_lea.vmem %s9, 8
  %v298 = vld [vmem:[%s297] sm:$0x1]
  %v300 = vperm.slane %v298, 0
  %302 = vmatpush.bf16.msra.mxu0 0
  %303 = vmatpush.bf16.msra.mxu0 0
  %304 = vmatpush.bf16.msra.mxu0 0
  %305 = vmatpush.bf16.msra.mxu0 0
  %306 = vmatpush.bf16.msra.mxu0 0
  %307 = vmatpush.bf16.msra.mxu0 0
  %308 = vmatpush.bf16.msra.mxu0 %v296
  %309 = vmatpush.bf16.msra.mxu0 %v295
  %310 = vmatmul.bf16.gmra.mxu0 %v248
  %v311 = vpop.f32.mrf.mxu0
  %v312 = vadd.f32 %v300, %v311
  %v313 = vpop.f32.mrf.mxu0
  %v314 = vadd.f32 %v300, %v313
  %315 = vdwg.mxu0
  %vm316 = vcmask 64512
  %v318 = vsel %vm316, %v260, 0
  %v321 = vsel %vm316, %v286, 0
  %323 = vmatpush.xpose.msra.mxu0 0.0
  %324 = vmatpush.xpose.msra.mxu0 0.0
  %325 = vmatpush.xpose.msra.mxu0 0.0
  %326 = vmatpush.xpose.msra.mxu0 0.0
  %327 = vmatpush.xpose.msra.mxu0 0.0
  %328 = vmatpush.xpose.msra.mxu0 0.0
  %329 = vmatpush.xpose.msra.mxu0 0.0
  %330 = vmatpush.xpose.msra.mxu0 0.0
  %331 = vmatpush.xpose.msra.mxu0 0.0
  %332 = vmatpush.xpose.msra.mxu0 0.0
  %333 = vmatpush.xpose.msra.mxu0 0.0
  %334 = vmatpush.xpose.msra.mxu0 0.0
  %335 = vmatpush.xpose.msra.mxu0 0.0
  %336 = vmatpush.xpose.msra.mxu0 0.0
  %337 = vmatpush.xpose.msra.mxu0 0.0
  %338 = vmatpush.xpose.msra.mxu0 %v321
  %339 = vmatmul.f32.gmra.mxu0 %v318
  %v340 = vpop.f32.mrf.mxu0
  %v341 = vadd.f32 0.0, %v340
  %342 = vdwg.mxu0
  %v343 = vmul.f32 %v341, 0.35355338
  %v345 = vperm.slane %v231, 0
  %v347 = vadd.f32 %v343, %v345
  %v348 = vsel %vm316, %v347, -inf
  %349 = vmax.xlane.f32.xlu0 %v348
  %v350 = vpop.xlane.xlu0 %349
  %v351 = vsub.f32 %v347, %v350
  %v352 = vmul.f32 %v351, 1.442695
  %v353 = vpow.pop %v352
  %v354 = vsel %vm316, %v353, 0.0
  %355 = vadd.xlane.f32.xlu0 %v354
  %v356 = vpop.xlane.xlu0 %355
  %v357 = vrcp.pop %v356
  %v358 = vmul.f32 %v353, %v357
  %v360 = vsel %vm316, %v358, 0
  %362 = vmatpush.msra.mxu0 0.0
  %363 = vmatpush.msra.mxu0 0.0
  %364 = vmatpush.msra.mxu0 0.0
  %365 = vmatpush.msra.mxu0 0.0
  %366 = vmatpush.msra.mxu0 0.0
  %367 = vmatpush.msra.mxu0 0.0
  %368 = vmatpush.msra.mxu0 0.0
  %369 = vmatpush.msra.mxu0 0.0
  %370 = vmatpush.msra.mxu0 0.0
  %371 = vmatpush.msra.mxu0 0.0
  %372 = vmatpush.msra.mxu0 0.0
  %373 = vmatpush.msra.mxu0 0.0
  %374 = vmatpush.msra.mxu0 0.0
  %375 = vmatpush.msra.mxu0 0.0
  %376 = vmatpush.msra.mxu0 0.0
  %377 = vmatpush.msra.mxu0 %v312
  %378 = vmatmul.f32.gmra.mxu0 %v360
  %v379 = vpop.f32.mrf.mxu0
  %v380 = vadd.f32 0.0, %v379
  %381 = vdwg.mxu0
  %382 = vst.msk [vmem:[#allocation2] sm:$0xff] %vm316, %v380
  %v384 = vsel %vm316, %v262, 0
  %v387 = vsel %vm316, %v288, 0
  %389 = vmatpush.xpose.msra.mxu0 0.0
  %390 = vmatpush.xpose.msra.mxu0 0.0
  %391 = vmatpush.xpose.msra.mxu0 0.0
  %392 = vmatpush.xpose.msra.mxu0 0.0
  %393 = vmatpush.xpose.msra.mxu0 0.0
  %394 = vmatpush.xpose.msra.mxu0 0.0
  %395 = vmatpush.xpose.msra.mxu0 0.0
  %396 = vmatpush.xpose.msra.mxu0 0.0
  %397 = vmatpush.xpose.msra.mxu0 0.0
  %398 = vmatpush.xpose.msra.mxu0 0.0
  %399 = vmatpush.xpose.msra.mxu0 0.0
  %400 = vmatpush.xpose.msra.mxu0 0.0
  %401 = vmatpush.xpose.msra.mxu0 0.0
  %402 = vmatpush.xpose.msra.mxu0 0.0
  %403 = vmatpush.xpose.msra.mxu0 0.0
  %404 = vmatpush.xpose.msra.mxu0 %v387
  %405 = vmatmul.f32.gmra.mxu0 %v384
  %v406 = vpop.f32.mrf.mxu0
  %v407 = vadd.f32 0.0, %v406
  %408 = vdwg.mxu0
  %v409 = vmul.f32 %v407, 0.35355338
  %v411 = vperm.slane %v235, 0
  %v413 = vadd.f32 %v409, %v411
  %v414 = vsel %vm316, %v413, -inf
  %415 = vmax.xlane.f32.xlu0 %v414
  %v416 = vpop.xlane.xlu0 %415
  %v417 = vsub.f32 %v413, %v416
  %v418 = vmul.f32 %v417, 1.442695
  %v419 = vpow.pop %v418
  %v420 = vsel %vm316, %v419, 0.0
  %421 = vadd.xlane.f32.xlu0 %v420
  %v422 = vpop.xlane.xlu0 %421
  %v423 = vrcp.pop %v422
  %v424 = vmul.f32 %v419, %v423
  %v426 = vsel %vm316, %v424, 0
  %428 = vmatpush.msra.mxu0 0.0
  %429 = vmatpush.msra.mxu0 0.0
  %430 = vmatpush.msra.mxu0 0.0
  %431 = vmatpush.msra.mxu0 0.0
  %432 = vmatpush.msra.mxu0 0.0
  %433 = vmatpush.msra.mxu0 0.0
  %434 = vmatpush.msra.mxu0 0.0
  %435 = vmatpush.msra.mxu0 0.0
  %436 = vmatpush.msra.mxu0 0.0
  %437 = vmatpush.msra.mxu0 0.0
  %438 = vmatpush.msra.mxu0 0.0
  %439 = vmatpush.msra.mxu0 0.0
  %440 = vmatpush.msra.mxu0 0.0
  %441 = vmatpush.msra.mxu0 0.0
  %442 = vmatpush.msra.mxu0 0.0
  %443 = vmatpush.msra.mxu0 %v314
  %444 = vmatmul.f32.gmra.mxu0 %v426
  %v445 = vpop.f32.mrf.mxu0
  %v446 = vadd.f32 0.0, %v445
  %447 = vdwg.mxu0
  %448 = vst.msk [vmem:[#allocation2 + $0x8] sm:$0xff] %vm316, %v446
  %v449 = vld [vmem:[#allocation2] sm:$0xff]
  %v450 = vld [vmem:[#allocation2 + $0x8] sm:$0xff]
  %v451 = vld [vmem:[%s10] sm:$0xff]
  %v452 = vpack.c.bf16 %v450, %v449
  %v453 = vpack.c.bf16 %v451, %v451
  %s454 = scalar_lea.vmem %s8, 32
  %v455 = vld [vmem:[%s454] sm:$0xff]
  %v456 = vld [vmem:[%s454 + $0x8] sm:$0xff]
  %v457 = vld [vmem:[%s454 + $0x10] sm:$0xff]
  %v458 = vld [vmem:[%s454 + $0x18] sm:$0xff]
  %v459 = vpack.c.bf16 %v456, %v455
  %v460 = vpack.c.bf16 %v458, %v457
  %s461 = scalar_lea.vmem %s9, 1
  %v462 = vld [vmem:[%s461] sm:$0x1]
  %v464 = vperm.slane %v462, 0
  %466 = vmatpush.bf16.msra.mxu0 0
  %467 = vmatpush.bf16.msra.mxu0 0
  %468 = vmatpush.bf16.msra.mxu0 0
  %469 = vmatpush.bf16.msra.mxu0 0
  %470 = vmatpush.bf16.msra.mxu0 0
  %471 = vmatpush.bf16.msra.mxu0 0
  %472 = vmatpush.bf16.msra.mxu0 %v460
  %473 = vmatpush.bf16.msra.mxu0 %v459
  %474 = vmatmul.bf16.gmra.mxu0 %v248
  %v475 = vpop.f32.mrf.mxu0
  %v476 = vadd.f32 %v464, %v475
  %v477 = vpop.f32.mrf.mxu0
  %v478 = vadd.f32 %v464, %v477
  %479 = vdwg.mxu0
  %s480 = scalar_lea.vmem %s8, 160
  %v481 = vld [vmem:[%s480] sm:$0xff]
  %v482 = vld [vmem:[%s480 + $0x8] sm:$0xff]
  %v483 = vld [vmem:[%s480 + $0x10] sm:$0xff]
  %v484 = vld [vmem:[%s480 + $0x18] sm:$0xff]
  %v485 = vpack.c.bf16 %v482, %v481
  %v486 = vpack.c.bf16 %v484, %v483
  %s487 = scalar_lea.vmem %s9, 5
  %v488 = vld [vmem:[%s487] sm:$0x1]
  %v490 = vperm.slane %v488, 0
  %492 = vmatpush.bf16.msra.mxu0 0
  %493 = vmatpush.bf16.msra.mxu0 0
  %494 = vmatpush.bf16.msra.mxu0 0
  %495 = vmatpush.bf16.msra.mxu0 0
  %496 = vmatpush.bf16.msra.mxu0 0
  %497 = vmatpush.bf16.msra.mxu0 0
  %498 = vmatpush.bf16.msra.mxu0 %v486
  %499 = vmatpush.bf16.msra.mxu0 %v485
  %500 = vmatmul.bf16.gmra.mxu0 %v248
  %v501 = vpop.f32.mrf.mxu0
  %v502 = vadd.f32 %v490, %v501
  %v503 = vpop.f32.mrf.mxu0
  %v504 = vadd.f32 %v490, %v503
  %505 = vdwg.mxu0
  %s506 = scalar_lea.vmem %s8, 288
  %v507 = vld [vmem:[%s506] sm:$0xff]
  %v508 = vld [vmem:[%s506 + $0x8] sm:$0xff]
  %v509 = vld [vmem:[%s506 + $0x10] sm:$0xff]
  %v510 = vld [vmem:[%s506 + $0x18] sm:$0xff]
  %v511 = vpack.c.bf16 %v508, %v507
  %v512 = vpack.c.bf16 %v510, %v509
  %s513 = scalar_lea.vmem %s9, 9
  %v514 = vld [vmem:[%s513] sm:$0x1]
  %v516 = vperm.slane %v514, 0
  %518 = vmatpush.bf16.msra.mxu0 0
  %519 = vmatpush.bf16.msra.mxu0 0
  %520 = vmatpush.bf16.msra.mxu0 0
  %521 = vmatpush.bf16.msra.mxu0 0
  %522 = vmatpush.bf16.msra.mxu0 0
  %523 = vmatpush.bf16.msra.mxu0 0
  %524 = vmatpush.bf16.msra.mxu0 %v512
  %525 = vmatpush.bf16.msra.mxu0 %v511
  %526 = vmatmul.bf16.gmra.mxu0 %v248
  %v527 = vpop.f32.mrf.mxu0
  %v528 = vadd.f32 %v516, %v527
  %v529 = vpop.f32.mrf.mxu0
  %v530 = vadd.f32 %v516, %v529
  %531 = vdwg.mxu0
  %v533 = vsel %vm316, %v476, 0
  %v536 = vsel %vm316, %v502, 0
  %538 = vmatpush.xpose.msra.mxu0 0.0
  %539 = vmatpush.xpose.msra.mxu0 0.0
  %540 = vmatpush.xpose.msra.mxu0 0.0
  %541 = vmatpush.xpose.msra.mxu0 0.0
  %542 = vmatpush.xpose.msra.mxu0 0.0
  %543 = vmatpush.xpose.msra.mxu0 0.0
  %544 = vmatpush.xpose.msra.mxu0 0.0
  %545 = vmatpush.xpose.msra.mxu0 0.0
  %546 = vmatpush.xpose.msra.mxu0 0.0
  %547 = vmatpush.xpose.msra.mxu0 0.0
  %548 = vmatpush.xpose.msra.mxu0 0.0
  %549 = vmatpush.xpose.msra.mxu0 0.0
  %550 = vmatpush.xpose.msra.mxu0 0.0
  %551 = vmatpush.xpose.msra.mxu0 0.0
  %552 = vmatpush.xpose.msra.mxu0 0.0
  %553 = vmatpush.xpose.msra.mxu0 %v536
  %554 = vmatmul.f32.gmra.mxu0 %v533
  %v555 = vpop.f32.mrf.mxu0
  %v556 = vadd.f32 0.0, %v555
  %557 = vdwg.mxu0
  %v558 = vmul.f32 %v556, 0.35355338
  %v559 = vadd.f32 %v558, %v345
  %v560 = vsel %vm316, %v559, -inf
  %561 = vmax.xlane.f32.xlu0 %v560
  %v562 = vpop.xlane.xlu0 %561
  %v563 = vsub.f32 %v559, %v562
  %v564 = vmul.f32 %v563, 1.442695
  %v565 = vpow.pop %v564
  %v566 = vsel %vm316, %v565, 0.0
  %567 = vadd.xlane.f32.xlu0 %v566
  %v568 = vpop.xlane.xlu0 %567
  %v569 = vrcp.pop %v568
  %v570 = vmul.f32 %v565, %v569
  %v572 = vsel %vm316, %v570, 0
  %574 = vmatpush.msra.mxu0 0.0
  %575 = vmatpush.msra.mxu0 0.0
  %576 = vmatpush.msra.mxu0 0.0
  %577 = vmatpush.msra.mxu0 0.0
  %578 = vmatpush.msra.mxu0 0.0
  %579 = vmatpush.msra.mxu0 0.0
  %580 = vmatpush.msra.mxu0 0.0
  %581 = vmatpush.msra.mxu0 0.0
  %582 = vmatpush.msra.mxu0 0.0
  %583 = vmatpush.msra.mxu0 0.0
  %584 = vmatpush.msra.mxu0 0.0
  %585 = vmatpush.msra.mxu0 0.0
  %586 = vmatpush.msra.mxu0 0.0
  %587 = vmatpush.msra.mxu0 0.0
  %588 = vmatpush.msra.mxu0 0.0
  %589 = vmatpush.msra.mxu0 %v528
  %590 = vmatmul.f32.gmra.mxu0 %v572
  %v591 = vpop.f32.mrf.mxu0
  %v592 = vadd.f32 0.0, %v591
  %593 = vdwg.mxu0
  %594 = vst.msk [vmem:[#allocation2] sm:$0xff] %vm316, %v592
  %v596 = vsel %vm316, %v478, 0
  %v599 = vsel %vm316, %v504, 0
  %601 = vmatpush.xpose.msra.mxu0 0.0
  %602 = vmatpush.xpose.msra.mxu0 0.0
  %603 = vmatpush.xpose.msra.mxu0 0.0
  %604 = vmatpush.xpose.msra.mxu0 0.0
  %605 = vmatpush.xpose.msra.mxu0 0.0
  %606 = vmatpush.xpose.msra.mxu0 0.0
  %607 = vmatpush.xpose.msra.mxu0 0.0
  %608 = vmatpush.xpose.msra.mxu0 0.0
  %609 = vmatpush.xpose.msra.mxu0 0.0
  %610 = vmatpush.xpose.msra.mxu0 0.0
  %611 = vmatpush.xpose.msra.mxu0 0.0
  %612 = vmatpush.xpose.msra.mxu0 0.0
  %613 = vmatpush.xpose.msra.mxu0 0.0
  %614 = vmatpush.xpose.msra.mxu0 0.0
  %615 = vmatpush.xpose.msra.mxu0 0.0
  %616 = vmatpush.xpose.msra.mxu0 %v599
  %617 = vmatmul.f32.gmra.mxu0 %v596
  %v618 = vpop.f32.mrf.mxu0
  %v619 = vadd.f32 0.0, %v618
  %620 = vdwg.mxu0
  %v621 = vmul.f32 %v619, 0.35355338
  %v622 = vadd.f32 %v621, %v411
  %v623 = vsel %vm316, %v622, -inf
  %624 = vmax.xlane.f32.xlu0 %v623
  %v625 = vpop.xlane.xlu0 %624
  %v626 = vsub.f32 %v622, %v625
  %v627 = vmul.f32 %v626, 1.442695
  %v628 = vpow.pop %v627
  %v629 = vsel %vm316, %v628, 0.0
  %630 = vadd.xlane.f32.xlu0 %v629
  %v631 = vpop.xlane.xlu0 %630
  %v632 = vrcp.pop %v631
  %v633 = vmul.f32 %v628, %v632
  %v635 = vsel %vm316, %v633, 0
  %637 = vmatpush.msra.mxu0 0.0
  %638 = vmatpush.msra.mxu0 0.0
  %639 = vmatpush.msra.mxu0 0.0
  %640 = vmatpush.msra.mxu0 0.0
  %641 = vmatpush.msra.mxu0 0.0
  %642 = vmatpush.msra.mxu0 0.0
  %643 = vmatpush.msra.mxu0 0.0
  %644 = vmatpush.msra.mxu0 0.0
  %645 = vmatpush.msra.mxu0 0.0
  %646 = vmatpush.msra.mxu0 0.0
  %647 = vmatpush.msra.mxu0 0.0
  %648 = vmatpush.msra.mxu0 0.0
  %649 = vmatpush.msra.mxu0 0.0
  %650 = vmatpush.msra.mxu0 0.0
  %651 = vmatpush.msra.mxu0 0.0
  %652 = vmatpush.msra.mxu0 %v530
  %653 = vmatmul.f32.gmra.mxu0 %v635
  %v654 = vpop.f32.mrf.mxu0
  %v655 = vadd.f32 0.0, %v654
  %656 = vdwg.mxu0
  %657 = vst.msk [vmem:[#allocation2 + $0x8] sm:$0xff] %vm316, %v655
  %v658 = vld [vmem:[#allocation2] sm:$0xff]
  %v659 = vld [vmem:[#allocation2 + $0x8] sm:$0xff]
  %s660 = scalar_lea.vmem %s10, 8
  %v661 = vld [vmem:[%s660] sm:$0xff]
  %v662 = vpack.c.bf16 %v659, %v658
  %v663 = vpack.c.bf16 %v661, %v661
  %v665 = vsel %vm316, %v662, 0
  %vm667 = vcmask 1043456
  %v669 = vsel %vm667, %v663, 0
  %671 = vmatpush.bf16.msra.mxu0 0
  %672 = vmatpush.bf16.msra.mxu0 0
  %673 = vmatpush.bf16.msra.mxu0 0
  %674 = vmatpush.bf16.msra.mxu0 0
  %675 = vmatpush.bf16.msra.mxu0 0
  %676 = vmatpush.bf16.msra.mxu0 0
  %677 = vmatpush.bf16.msra.mxu0 0
  %678 = vmatpush.bf16.msra.mxu0 %v669
  %679 = vmatmul.bf16.gmra.mxu0 %v665
  %v680 = vpop.f32.mrf.mxu0
  %v681 = vadd.f32 0.0, %v680
  %v682 = vpop.f32.mrf.mxu0
  %v683 = vadd.f32 0.0, %v682
  %684 = vdwg.mxu0
  %v686 = vsel %vm316, %v452, 0
  %v689 = vsel %vm667, %v453, 0
  %691 = vmatpush.bf16.msra.mxu0 0
  %692 = vmatpush.bf16.msra.mxu0 0
  %693 = vmatpush.bf16.msra.mxu0 0
  %694 = vmatpush.bf16.msra.mxu0 0
  %695 = vmatpush.bf16.msra.mxu0 0
  %696 = vmatpush.bf16.msra.mxu0 0
  %697 = vmatpush.bf16.msra.mxu0 0
  %698 = vmatpush.bf16.msra.mxu0 %v689
  %699 = vmatmul.bf16.gmra.mxu0 %v686
  %v700 = vpop.f32.mrf.mxu0
  %v701 = vadd.f32 %v681, %v700
  %v702 = vpop.f32.mrf.mxu0
  %v703 = vadd.f32 %v683, %v702
  %704 = vdwg.mxu0
  %s705 = scalar_lea.vmem %s8, 64
  %v706 = vld [vmem:[%s705] sm:$0xff]
  %v707 = vld [vmem:[%s705 + $0x8] sm:$0xff]
  %v708 = vld [vmem:[%s705 + $0x10] sm:$0xff]
  %v709 = vld [vmem:[%s705 + $0x18] sm:$0xff]
  %v710 = vpack.c.bf16 %v707, %v706
  %v711 = vpack.c.bf16 %v709, %v708
  %s712 = scalar_lea.vmem %s9, 2
  %v713 = vld [vmem:[%s712] sm:$0x1]
  %v715 = vperm.slane %v713, 0
  %717 = vmatpush.bf16.msra.mxu0 0
  %718 = vmatpush.bf16.msra.mxu0 0
  %719 = vmatpush.bf16.msra.mxu0 0
  %720 = vmatpush.bf16.msra.mxu0 0
  %721 = vmatpush.bf16.msra.mxu0 0
  %722 = vmatpush.bf16.msra.mxu0 0
  %723 = vmatpush.bf16.msra.mxu0 %v711
  %724 = vmatpush.bf16.msra.mxu0 %v710
  %725 = vmatmul.bf16.gmra.mxu0 %v248
  %v726 = vpop.f32.mrf.mxu0
  %v727 = vadd.f32 %v715, %v726
  %v728 = vpop.f32.mrf.mxu0
  %v729 = vadd.f32 %v715, %v728
  %730 = vdwg.mxu0
  %s731 = scalar_lea.vmem %s8, 192
  %v732 = vld [vmem:[%s731] sm:$0xff]
  %v733 = vld [vmem:[%s731 + $0x8] sm:$0xff]
  %v734 = vld [vmem:[%s731 + $0x10] sm:$0xff]
  %v735 = vld [vmem:[%s731 + $0x18] sm:$0xff]
  %v736 = vpack.c.bf16 %v733, %v732
  %v737 = vpack.c.bf16 %v735, %v734
  %s738 = scalar_lea.vmem %s9, 6
  %v739 = vld [vmem:[%s738] sm:$0x1]
  %v741 = vperm.slane %v739, 0
  %743 = vmatpush.bf16.msra.mxu0 0
  %744 = vmatpush.bf16.msra.mxu0 0
  %745 = vmatpush.bf16.msra.mxu0 0
  %746 = vmatpush.bf16.msra.mxu0 0
  %747 = vmatpush.bf16.msra.mxu0 0
  %748 = vmatpush.bf16.msra.mxu0 0
  %749 = vmatpush.bf16.msra.mxu0 %v737
  %750 = vmatpush.bf16.msra.mxu0 %v736
  %751 = vmatmul.bf16.gmra.mxu0 %v248
  %v752 = vpop.f32.mrf.mxu0
  %v753 = vadd.f32 %v741, %v752
  %v754 = vpop.f32.mrf.mxu0
  %v755 = vadd.f32 %v741, %v754
  %756 = vdwg.mxu0
  %s757 = scalar_lea.vmem %s8, 320
  %v758 = vld [vmem:[%s757] sm:$0xff]
  %v759 = vld [vmem:[%s757 + $0x8] sm:$0xff]
  %v760 = vld [vmem:[%s757 + $0x10] sm:$0xff]
  %v761 = vld [vmem:[%s757 + $0x18] sm:$0xff]
  %v762 = vpack.c.bf16 %v759, %v758
  %v763 = vpack.c.bf16 %v761, %v760
  %s764 = scalar_lea.vmem %s9, 10
  %v765 = vld [vmem:[%s764] sm:$0x1]
  %v767 = vperm.slane %v765, 0
  %769 = vmatpush.bf16.msra.mxu0 0
  %770 = vmatpush.bf16.msra.mxu0 0
  %771 = vmatpush.bf16.msra.mxu0 0
  %772 = vmatpush.bf16.msra.mxu0 0
  %773 = vmatpush.bf16.msra.mxu0 0
  %774 = vmatpush.bf16.msra.mxu0 0
  %775 = vmatpush.bf16.msra.mxu0 %v763
  %776 = vmatpush.bf16.msra.mxu0 %v762
  %777 = vmatmul.bf16.gmra.mxu0 %v248
  %v778 = vpop.f32.mrf.mxu0
  %v779 = vadd.f32 %v767, %v778
  %v780 = vpop.f32.mrf.mxu0
  %v781 = vadd.f32 %v767, %v780
  %782 = vdwg.mxu0
  %v784 = vsel %vm316, %v727, 0
  %v787 = vsel %vm316, %v753, 0
  %789 = vmatpush.xpose.msra.mxu0 0.0
  %790 = vmatpush.xpose.msra.mxu0 0.0
  %791 = vmatpush.xpose.msra.mxu0 0.0
  %792 = vmatpush.xpose.msra.mxu0 0.0
  %793 = vmatpush.xpose.msra.mxu0 0.0
  %794 = vmatpush.xpose.msra.mxu0 0.0
  %795 = vmatpush.xpose.msra.mxu0 0.0
  %796 = vmatpush.xpose.msra.mxu0 0.0
  %797 = vmatpush.xpose.msra.mxu0 0.0
  %798 = vmatpush.xpose.msra.mxu0 0.0
  %799 = vmatpush.xpose.msra.mxu0 0.0
  %800 = vmatpush.xpose.msra.mxu0 0.0
  %801 = vmatpush.xpose.msra.mxu0 0.0
  %802 = vmatpush.xpose.msra.mxu0 0.0
  %803 = vmatpush.xpose.msra.mxu0 0.0
  %804 = vmatpush.xpose.msra.mxu0 %v787
  %805 = vmatmul.f32.gmra.mxu0 %v784
  %v806 = vpop.f32.mrf.mxu0
  %v807 = vadd.f32 0.0, %v806
  %808 = vdwg.mxu0
  %v809 = vmul.f32 %v807, 0.35355338
  %v810 = vadd.f32 %v809, %v345
  %v811 = vsel %vm316, %v810, -inf
  %812 = vmax.xlane.f32.xlu0 %v811
  %v813 = vpop.xlane.xlu0 %812
  %v814 = vsub.f32 %v810, %v813
  %v815 = vmul.f32 %v814, 1.442695
  %v816 = vpow.pop %v815
  %v817 = vsel %vm316, %v816, 0.0
  %818 = vadd.xlane.f32.xlu0 %v817
  %v819 = vpop.xlane.xlu0 %818
  %v820 = vrcp.pop %v819
  %v821 = vmul.f32 %v816, %v820
  %v823 = vsel %vm316, %v821, 0
  %825 = vmatpush.msra.mxu0 0.0
  %826 = vmatpush.msra.mxu0 0.0
  %827 = vmatpush.msra.mxu0 0.0
  %828 = vmatpush.msra.mxu0 0.0
  %829 = vmatpush.msra.mxu0 0.0
  %830 = vmatpush.msra.mxu0 0.0
  %831 = vmatpush.msra.mxu0 0.0
  %832 = vmatpush.msra.mxu0 0.0
  %833 = vmatpush.msra.mxu0 0.0
  %834 = vmatpush.msra.mxu0 0.0
  %835 = vmatpush.msra.mxu0 0.0
  %836 = vmatpush.msra.mxu0 0.0
  %837 = vmatpush.msra.mxu0 0.0
  %838 = vmatpush.msra.mxu0 0.0
  %839 = vmatpush.msra.mxu0 0.0
  %840 = vmatpush.msra.mxu0 %v779
  %841 = vmatmul.f32.gmra.mxu0 %v823
  %v842 = vpop.f32.mrf.mxu0
  %v843 = vadd.f32 0.0, %v842
  %844 = vdwg.mxu0
  %845 = vst.msk [vmem:[#allocation2] sm:$0xff] %vm316, %v843
  %v847 = vsel %vm316, %v729, 0
  %v850 = vsel %vm316, %v755, 0
  %852 = vmatpush.xpose.msra.mxu0 0.0
  %853 = vmatpush.xpose.msra.mxu0 0.0
  %854 = vmatpush.xpose.msra.mxu0 0.0
  %855 = vmatpush.xpose.msra.mxu0 0.0
  %856 = vmatpush.xpose.msra.mxu0 0.0
  %857 = vmatpush.xpose.msra.mxu0 0.0
  %858 = vmatpush.xpose.msra.mxu0 0.0
  %859 = vmatpush.xpose.msra.mxu0 0.0
  %860 = vmatpush.xpose.msra.mxu0 0.0
  %861 = vmatpush.xpose.msra.mxu0 0.0
  %862 = vmatpush.xpose.msra.mxu0 0.0
  %863 = vmatpush.xpose.msra.mxu0 0.0
  %864 = vmatpush.xpose.msra.mxu0 0.0
  %865 = vmatpush.xpose.msra.mxu0 0.0
  %866 = vmatpush.xpose.msra.mxu0 0.0
  %867 = vmatpush.xpose.msra.mxu0 %v850
  %868 = vmatmul.f32.gmra.mxu0 %v847
  %v869 = vpop.f32.mrf.mxu0
  %v870 = vadd.f32 0.0, %v869
  %871 = vdwg.mxu0
  %v872 = vmul.f32 %v870, 0.35355338
  %v873 = vadd.f32 %v872, %v411
  %v874 = vsel %vm316, %v873, -inf
  %875 = vmax.xlane.f32.xlu0 %v874
  %v876 = vpop.xlane.xlu0 %875
  %v877 = vsub.f32 %v873, %v876
  %v878 = vmul.f32 %v877, 1.442695
  %v879 = vpow.pop %v878
  %v880 = vsel %vm316, %v879, 0.0
  %881 = vadd.xlane.f32.xlu0 %v880
  %v882 = vpop.xlane.xlu0 %881
  %v883 = vrcp.pop %v882
  %v884 = vmul.f32 %v879, %v883
  %v886 = vsel %vm316, %v884, 0
  %888 = vmatpush.msra.mxu0 0.0
  %889 = vmatpush.msra.mxu0 0.0
  %890 = vmatpush.msra.mxu0 0.0
  %891 = vmatpush.msra.mxu0 0.0
  %892 = vmatpush.msra.mxu0 0.0
  %893 = vmatpush.msra.mxu0 0.0
  %894 = vmatpush.msra.mxu0 0.0
  %895 = vmatpush.msra.mxu0 0.0
  %896 = vmatpush.msra.mxu0 0.0
  %897 = vmatpush.msra.mxu0 0.0
  %898 = vmatpush.msra.mxu0 0.0
  %899 = vmatpush.msra.mxu0 0.0
  %900 = vmatpush.msra.mxu0 0.0
  %901 = vmatpush.msra.mxu0 0.0
  %902 = vmatpush.msra.mxu0 0.0
  %903 = vmatpush.msra.mxu0 %v781
  %904 = vmatmul.f32.gmra.mxu0 %v886
  %v905 = vpop.f32.mrf.mxu0
  %v906 = vadd.f32 0.0, %v905
  %907 = vdwg.mxu0
  %908 = vst.msk [vmem:[#allocation2 + $0x8] sm:$0xff] %vm316, %v906
  %v909 = vld [vmem:[#allocation2] sm:$0xff]
  %v910 = vld [vmem:[#allocation2 + $0x8] sm:$0xff]
  %s911 = scalar_lea.vmem %s10, 16
  %v912 = vld [vmem:[%s911] sm:$0xff]
  %v913 = vpack.c.bf16 %v910, %v909
  %v914 = vpack.c.bf16 %v912, %v912
  %v916 = vsel %vm316, %v913, 0
  %v919 = vsel %vm667, %v914, 0
  %921 = vmatpush.bf16.msra.mxu0 0
  %922 = vmatpush.bf16.msra.mxu0 0
  %923 = vmatpush.bf16.msra.mxu0 0
  %924 = vmatpush.bf16.msra.mxu0 0
  %925 = vmatpush.bf16.msra.mxu0 0
  %926 = vmatpush.bf16.msra.mxu0 0
  %927 = vmatpush.bf16.msra.mxu0 0
  %928 = vmatpush.bf16.msra.mxu0 %v919
  %929 = vmatmul.bf16.gmra.mxu0 %v916
  %v930 = vpop.f32.mrf.mxu0
  %v931 = vadd.f32 0.0, %v930
  %v932 = vpop.f32.mrf.mxu0
  %v933 = vadd.f32 0.0, %v932
  %934 = vdwg.mxu0
  %v935 = vadd.f32 %v701, %v931
  %v936 = vadd.f32 %v703, %v933
  %s937 = scalar_lea.vmem %s8, 96
  %v938 = vld [vmem:[%s937] sm:$0xff]
  %v939 = vld [vmem:[%s937 + $0x8] sm:$0xff]
  %v940 = vld [vmem:[%s937 + $0x10] sm:$0xff]
  %v941 = vld [vmem:[%s937 + $0x18] sm:$0xff]
  %v942 = vpack.c.bf16 %v939, %v938
  %v943 = vpack.c.bf16 %v941, %v940
  %s944 = scalar_lea.vmem %s9, 3
  %v945 = vld [vmem:[%s944] sm:$0x1]
  %v947 = vperm.slane %v945, 0
  %949 = vmatpush.bf16.msra.mxu0 0
  %950 = vmatpush.bf16.msra.mxu0 0
  %951 = vmatpush.bf16.msra.mxu0 0
  %952 = vmatpush.bf16.msra.mxu0 0
  %953 = vmatpush.bf16.msra.mxu0 0
  %954 = vmatpush.bf16.msra.mxu0 0
  %955 = vmatpush.bf16.msra.mxu0 %v943
  %956 = vmatpush.bf16.msra.mxu0 %v942
  %957 = vmatmul.bf16.gmra.mxu0 %v248
  %v958 = vpop.f32.mrf.mxu0
  %v959 = vadd.f32 %v947, %v958
  %v960 = vpop.f32.mrf.mxu0
  %v961 = vadd.f32 %v947, %v960
  %962 = vdwg.mxu0
  %s963 = scalar_lea.vmem %s8, 224
  %v964 = vld [vmem:[%s963] sm:$0xff]
  %v965 = vld [vmem:[%s963 + $0x8] sm:$0xff]
  %v966 = vld [vmem:[%s963 + $0x10] sm:$0xff]
  %v967 = vld [vmem:[%s963 + $0x18] sm:$0xff]
  %v968 = vpack.c.bf16 %v965, %v964
  %v969 = vpack.c.bf16 %v967, %v966
  %s970 = scalar_lea.vmem %s9, 7
  %v971 = vld [vmem:[%s970] sm:$0x1]
  %v973 = vperm.slane %v971, 0
  %975 = vmatpush.bf16.msra.mxu0 0
  %976 = vmatpush.bf16.msra.mxu0 0
  %977 = vmatpush.bf16.msra.mxu0 0
  %978 = vmatpush.bf16.msra.mxu0 0
  %979 = vmatpush.bf16.msra.mxu0 0
  %980 = vmatpush.bf16.msra.mxu0 0
  %981 = vmatpush.bf16.msra.mxu0 %v969
  %982 = vmatpush.bf16.msra.mxu0 %v968
  %983 = vmatmul.bf16.gmra.mxu0 %v248
  %v984 = vpop.f32.mrf.mxu0
  %v985 = vadd.f32 %v973, %v984
  %v986 = vpop.f32.mrf.mxu0
  %v987 = vadd.f32 %v973, %v986
  %988 = vdwg.mxu0
  %s989 = scalar_lea.vmem %s8, 352
  %v990 = vld [vmem:[%s989] sm:$0xff]
  %v991 = vld [vmem:[%s989 + $0x8] sm:$0xff]
  %v992 = vld [vmem:[%s989 + $0x10] sm:$0xff]
  %v993 = vld [vmem:[%s989 + $0x18] sm:$0xff]
  %v994 = vpack.c.bf16 %v991, %v990
  %v995 = vpack.c.bf16 %v993, %v992
  %s996 = scalar_lea.vmem %s9, 11
  %v997 = vld [vmem:[%s996] sm:$0x1]
  %v999 = vperm.slane %v997, 0
  %1001 = vmatpush.bf16.msra.mxu0 0
  %1002 = vmatpush.bf16.msra.mxu0 0
  %1003 = vmatpush.bf16.msra.mxu0 0
  %1004 = vmatpush.bf16.msra.mxu0 0
  %1005 = vmatpush.bf16.msra.mxu0 0
  %1006 = vmatpush.bf16.msra.mxu0 0
  %1007 = vmatpush.bf16.msra.mxu0 %v995
  %1008 = vmatpush.bf16.msra.mxu0 %v994
  %1009 = vmatmul.bf16.gmra.mxu0 %v248
  %v1010 = vpop.f32.mrf.mxu0
  %v1011 = vadd.f32 %v999, %v1010
  %v1012 = vpop.f32.mrf.mxu0
  %v1013 = vadd.f32 %v999, %v1012
  %1014 = vdwg.mxu0
  %v1016 = vsel %vm316, %v959, 0
  %v1019 = vsel %vm316, %v985, 0
  %1021 = vmatpush.xpose.msra.mxu0 0.0
  %1022 = vmatpush.xpose.msra.mxu0 0.0
  %1023 = vmatpush.xpose.msra.mxu0 0.0
  %1024 = vmatpush.xpose.msra.mxu0 0.0
  %1025 = vmatpush.xpose.msra.mxu0 0.0
  %1026 = vmatpush.xpose.msra.mxu0 0.0
  %1027 = vmatpush.xpose.msra.mxu0 0.0
  %1028 = vmatpush.xpose.msra.mxu0 0.0
  %1029 = vmatpush.xpose.msra.mxu0 0.0
  %1030 = vmatpush.xpose.msra.mxu0 0.0
  %1031 = vmatpush.xpose.msra.mxu0 0.0
  %1032 = vmatpush.xpose.msra.mxu0 0.0
  %1033 = vmatpush.xpose.msra.mxu0 0.0
  %1034 = vmatpush.xpose.msra.mxu0 0.0
  %1035 = vmatpush.xpose.msra.mxu0 0.0
  %1036 = vmatpush.xpose.msra.mxu0 %v1019
  %1037 = vmatmul.f32.gmra.mxu0 %v1016
  %v1038 = vpop.f32.mrf.mxu0
  %v1039 = vadd.f32 0.0, %v1038
  %1040 = vdwg.mxu0
  %v1041 = vmul.f32 %v1039, 0.35355338
  %v1042 = vadd.f32 %v1041, %v345
  %v1043 = vsel %vm316, %v1042, -inf
  %1044 = vmax.xlane.f32.xlu0 %v1043
  %v1045 = vpop.xlane.xlu0 %1044
  %v1046 = vsub.f32 %v1042, %v1045
  %v1047 = vmul.f32 %v1046, 1.442695
  %v1048 = vpow.pop %v1047
  %v1049 = vsel %vm316, %v1048, 0.0
  %1050 = vadd.xlane.f32.xlu0 %v1049
  %v1051 = vpop.xlane.xlu0 %1050
  %v1052 = vrcp.pop %v1051
  %v1053 = vmul.f32 %v1048, %v1052
  %v1055 = vsel %vm316, %v1053, 0
  %1057 = vmatpush.msra.mxu0 0.0
  %1058 = vmatpush.msra.mxu0 0.0
  %1059 = vmatpush.msra.mxu0 0.0
  %1060 = vmatpush.msra.mxu0 0.0
  %1061 = vmatpush.msra.mxu0 0.0
  %1062 = vmatpush.msra.mxu0 0.0
  %1063 = vmatpush.msra.mxu0 0.0
  %1064 = vmatpush.msra.mxu0 0.0
  %1065 = vmatpush.msra.mxu0 0.0
  %1066 = vmatpush.msra.mxu0 0.0
  %1067 = vmatpush.msra.mxu0 0.0
  %1068 = vmatpush.msra.mxu0 0.0
  %1069 = vmatpush.msra.mxu0 0.0
  %1070 = vmatpush.msra.mxu0 0.0
  %1071 = vmatpush.msra.mxu0 0.0
  %1072 = vmatpush.msra.mxu0 %v1011
  %1073 = vmatmul.f32.gmra.mxu0 %v1055
  %v1074 = vpop.f32.mrf.mxu0
  %v1075 = vadd.f32 0.0, %v1074
  %1076 = vdwg.mxu0
  %1077 = vst.msk [vmem:[#allocation2] sm:$0xff] %vm316, %v1075
  %v1079 = vsel %vm316, %v961, 0
  %v1082 = vsel %vm316, %v987, 0
  %1084 = vmatpush.xpose.msra.mxu0 0.0
  %1085 = vmatpush.xpose.msra.mxu0 0.0
  %1086 = vmatpush.xpose.msra.mxu0 0.0
  %1087 = vmatpush.xpose.msra.mxu0 0.0
  %1088 = vmatpush.xpose.msra.mxu0 0.0
  %1089 = vmatpush.xpose.msra.mxu0 0.0
  %1090 = vmatpush.xpose.msra.mxu0 0.0
  %1091 = vmatpush.xpose.msra.mxu0 0.0
  %1092 = vmatpush.xpose.msra.mxu0 0.0
  %1093 = vmatpush.xpose.msra.mxu0 0.0
  %1094 = vmatpush.xpose.msra.mxu0 0.0
  %1095 = vmatpush.xpose.msra.mxu0 0.0
  %1096 = vmatpush.xpose.msra.mxu0 0.0
  %1097 = vmatpush.xpose.msra.mxu0 0.0
  %1098 = vmatpush.xpose.msra.mxu0 0.0
  %1099 = vmatpush.xpose.msra.mxu0 %v1082
  %1100 = vmatmul.f32.gmra.mxu0 %v1079
  %v1101 = vpop.f32.mrf.mxu0
  %v1102 = vadd.f32 0.0, %v1101
  %1103 = vdwg.mxu0
  %v1104 = vmul.f32 %v1102, 0.35355338
  %v1105 = vadd.f32 %v1104, %v411
  %v1106 = vsel %vm316, %v1105, -inf
  %1107 = vmax.xlane.f32.xlu0 %v1106
  %v1108 = vpop.xlane.xlu0 %1107
  %v1109 = vsub.f32 %v1105, %v1108
  %v1110 = vmul.f32 %v1109, 1.442695
  %v1111 = vpow.pop %v1110
  %v1112 = vsel %vm316, %v1111, 0.0
  %1113 = vadd.xlane.f32.xlu0 %v1112
  %v1114 = vpop.xlane.xlu0 %1113
  %v1115 = vrcp.pop %v1114
  %v1116 = vmul.f32 %v1111, %v1115
  %v1118 = vsel %vm316, %v1116, 0
  %1120 = vmatpush.msra.mxu0 0.0
  %1121 = vmatpush.msra.mxu0 0.0
  %1122 = vmatpush.msra.mxu0 0.0
  %1123 = vmatpush.msra.mxu0 0.0
  %1124 = vmatpush.msra.mxu0 0.0
  %1125 = vmatpush.msra.mxu0 0.0
  %1126 = vmatpush.msra.mxu0 0.0
  %1127 = vmatpush.msra.mxu0 0.0
  %1128 = vmatpush.msra.mxu0 0.0
  %1129 = vmatpush.msra.mxu0 0.0
  %1130 = vmatpush.msra.mxu0 0.0
  %1131 = vmatpush.msra.mxu0 0.0
  %1132 = vmatpush.msra.mxu0 0.0
  %1133 = vmatpush.msra.mxu0 0.0
  %1134 = vmatpush.msra.mxu0 0.0
  %1135 = vmatpush.msra.mxu0 %v1013
  %1136 = vmatmul.f32.gmra.mxu0 %v1118
  %v1137 = vpop.f32.mrf.mxu0
  %v1138 = vadd.f32 0.0, %v1137
  %1139 = vdwg.mxu0
  %1140 = vst.msk [vmem:[#allocation2 + $0x8] sm:$0xff] %vm316, %v1138
  %v1141 = vld [vmem:[#allocation2] sm:$0xff]
  %v1142 = vld [vmem:[#allocation2 + $0x8] sm:$0xff]
  %s1143 = scalar_lea.vmem %s10, 24
  %v1144 = vld [vmem:[%s1143] sm:$0xff]
  %v1145 = vpack.c.bf16 %v1142, %v1141
  %v1146 = vpack.c.bf16 %v1144, %v1144
  %v1148 = vsel %vm316, %v1145, 0
  %v1151 = vsel %vm667, %v1146, 0
  %1153 = vmatpush.bf16.msra.mxu0 0
  %1154 = vmatpush.bf16.msra.mxu0 0
  %1155 = vmatpush.bf16.msra.mxu0 0
  %1156 = vmatpush.bf16.msra.mxu0 0
  %1157 = vmatpush.bf16.msra.mxu0 0
  %1158 = vmatpush.bf16.msra.mxu0 0
  %1159 = vmatpush.bf16.msra.mxu0 0
  %1160 = vmatpush.bf16.msra.mxu0 %v1151
  %1161 = vmatmul.bf16.gmra.mxu0 %v1148
  %v1162 = vpop.f32.mrf.mxu0
  %v1163 = vadd.f32 0.0, %v1162
  %v1164 = vpop.f32.mrf.mxu0
  %v1165 = vadd.f32 0.0, %v1164
  %1166 = vdwg.mxu0
  %v1167 = vadd.f32 %v935, %v1163
  %v1168 = vadd.f32 %v936, %v1165
  %v1169 = vld [vmem:[%s11] sm:$0x1]
  %v1171 = vperm.slane %v1169, 0
  %v1173 = vadd.f32 %v1167, %v1171
  %v1174 = vadd.f32 %v1168, %v1171
  %v1175 = vadd.f32 %v1173, %v227
  %v1176 = vadd.f32 %v1174, %v228
  %v1177 = vld [vmem:[%s12] sm:$0x1]
  %v1178 = vld [vmem:[%s13] sm:$0x1]
  %v1179 = vsel %vm167, %v1175, 0.0
  %1180 = vadd.xlane.f32.xlu0 %v1179
  %v1181 = vpop.xlane.xlu0 %1180
  %v1182 = vsel %vm167, %v1176, 0.0
  %1183 = vadd.xlane.f32.xlu0 %v1182
  %v1184 = vpop.xlane.xlu0 %1183
  %v1185 = vmul.f32 %v1181, %v180
  %v1186 = vmul.f32 %v1184, %v180
  %v1187 = vsub.f32 %v1175, %v1185
  %v1188 = vsub.f32 %v1176, %v1186
  %v1189 = vmul.f32 %v1187, %v1187
  %v1190 = vmul.f32 %v1188, %v1188
  %v1191 = vsel %vm167, %v1189, 0.0
  %1192 = vadd.xlane.f32.xlu0 %v1191
  %v1193 = vpop.xlane.xlu0 %1192
  %v1194 = vsel %vm167, %v1190, 0.0
  %1195 = vadd.xlane.f32.xlu0 %v1194
  %v1196 = vpop.xlane.xlu0 %1195
  %v1197 = vmul.f32 %v1193, %v180
  %v1198 = vmul.f32 %v1196, %v180
  %v1199 = vadd.f32 %v1197, 1e-12
  %v1200 = vadd.f32 %v1198, 1e-12
  %v1201 = vrsqrt.pop %v1199
  %v1202 = vmul.f32 %v1201, %v1199
  %v1203 = vmul.f32 %v1202, %v1201
  %v1204 = vmul.f32 0.5, %v1203
  %v1205 = vsub.f32 1.5, %v1204
  %v1206 = vmul.f32 %v1201, %v1205
  %vm1207 = vweird.f32 %v1199
  %vm1208 = vweird.f32 %v1201
  %vm1209 = vmor %vm1207, %vm1208
  %v1210 = vsel %vm1209, %v1201, %v1206
  %v1211 = vrsqrt.pop %v1200
  %v1212 = vmul.f32 %v1211, %v1200
  %v1213 = vmul.f32 %v1212, %v1211
  %v1214 = vmul.f32 0.5, %v1213
  %v1215 = vsub.f32 1.5, %v1214
  %v1216 = vmul.f32 %v1211, %v1215
  %vm1217 = vweird.f32 %v1200
  %vm1218 = vweird.f32 %v1211
  %vm1219 = vmor %vm1217, %vm1218
  %v1220 = vsel %vm1219, %v1211, %v1216
  %v1221 = vmul.f32 %v1187, %v1210
  %v1222 = vmul.f32 %v1188, %v1220
  %v1224 = vperm.slane %v1177, 0
  %v1226 = vmul.f32 %v1221, %v1224
  %v1227 = vmul.f32 %v1222, %v1224
  %v1229 = vperm.slane %v1178, 0
  %v1231 = vadd.f32 %v1226, %v1229
  %v1232 = vadd.f32 %v1227, %v1229
  %v1233 = vld [vmem:[%s14] sm:$0xff]
  %v1234 = vld [vmem:[%s14 + $0x8] sm:$0xff]
  %v1235 = vld [vmem:[%s14 + $0x10] sm:$0xff]
  %v1236 = vld [vmem:[%s14 + $0x18] sm:$0xff]
  %v1237 = vpack.c.bf16 %v1232, %v1231
  %v1238 = vpack.c.bf16 %v1234, %v1233
  %v1239 = vpack.c.bf16 %v1236, %v1235
  %v1240 = vld [vmem:[%s15] sm:$0x1]
  %v1242 = vperm.slane %v1240, 0
  %v1245 = vsel %vm167, %v1237, 0
  %1247 = vmatpush.bf16.msra.mxu0 0
  %1248 = vmatpush.bf16.msra.mxu0 0
  %1249 = vmatpush.bf16.msra.mxu0 0
  %1250 = vmatpush.bf16.msra.mxu0 0
  %1251 = vmatpush.bf16.msra.mxu0 0
  %1252 = vmatpush.bf16.msra.mxu0 0
  %1253 = vmatpush.bf16.msra.mxu0 %v1239
  %1254 = vmatpush.bf16.msra.mxu0 %v1238
  %1255 = vmatmul.bf16.gmra.mxu0 %v1245
  %v1256 = vpop.f32.mrf.mxu0
  %v1257 = vadd.f32 %v1242, %v1256
  %v1258 = vpop.f32.mrf.mxu0
  %v1259 = vadd.f32 %v1242, %v1258
  %1260 = vdwg.mxu0
  %v1261 = vmul.f32 %v1257, 0.5
  %v1262 = vmul.f32 %v1259, 0.5
  %v1263 = vmul.f32 %v1257, 0.044715
  %v1264 = vmul.f32 %v1259, 0.044715
  %v1265 = vmul.f32 %v1263, %v1257
  %v1266 = vmul.f32 %v1264, %v1259
  %v1267 = vmul.f32 %v1265, %v1257
  %v1268 = vmul.f32 %v1266, %v1259
  %v1269 = vadd.f32 %v1257, %v1267
  %v1270 = vadd.f32 %v1259, %v1268
  %v1271 = vmul.f32 %v1269, 0.7978846
  %v1272 = vmul.f32 %v1270, 0.7978846
  %v1273 = vtanh.pop %v1271
  %v1274 = vtanh.pop %v1272
  %v1275 = vadd.f32 %v1273, 1.0
  %v1276 = vadd.f32 %v1274, 1.0
  %v1277 = vmul.f32 %v1261, %v1275
  %v1278 = vmul.f32 %v1262, %v1276
  %v1279 = vld [vmem:[%s16] sm:$0xff]
  %v1280 = vld [vmem:[%s16 + $0x8] sm:$0xff]
  %v1281 = vld [vmem:[%s16 + $0x10] sm:$0xff]
  %v1282 = vld [vmem:[%s16 + $0x18] sm:$0xff]
  %v1283 = vld [vmem:[%s16 + $0x20] sm:$0xff]
  %v1284 = vld [vmem:[%s16 + $0x28] sm:$0xff]
  %v1285 = vld [vmem:[%s16 + $0x30] sm:$0xff]
  %v1286 = vld [vmem:[%s16 + $0x38] sm:$0xff]
  %v1287 = vpack.c.bf16 %v1278, %v1277
  %v1288 = vpack.c.bf16 %v1280, %v1279
  %v1289 = vpack.c.bf16 %v1282, %v1281
  %v1290 = vpack.c.bf16 %v1284, %v1283
  %v1291 = vpack.c.bf16 %v1286, %v1285
  %v1292 = vld [vmem:[%s17] sm:$0x1]
  %v1294 = vperm.slane %v1292, 0
  %vm1296 = vcmask 523264
  %v1298 = vsel %vm1296, %v1287, 0
  %1300 = vmatpush.bf16.msra.mxu0 0
  %1301 = vmatpush.bf16.msra.mxu0 0
  %1302 = vmatpush.bf16.msra.mxu0 0
  %1303 = vmatpush.bf16.msra.mxu0 0
  %1304 = vmatpush.bf16.msra.mxu0 %v1291
  %1305 = vmatpush.bf16.msra.mxu0 %v1290
  %1306 = vmatpush.bf16.msra.mxu0 %v1289
  %1307 = vmatpush.bf16.msra.mxu0 %v1288
  %1308 = vmatmul.bf16.gmra.mxu0 %v1298
  %v1309 = vpop.f32.mrf.mxu0
  %v1310 = vadd.f32 %v1294, %v1309
  %v1311 = vpop.f32.mrf.mxu0
  %v1312 = vadd.f32 %v1294, %v1311
  %1313 = vdwg.mxu0
  %v1314 = vadd.f32 %v1310, %v1231
  %v1315 = vadd.f32 %v1312, %v1232
  %v1316 = vld [vmem:[%s18] sm:$0x1]
  %v1317 = vld [vmem:[%s19] sm:$0x1]
  %v1318 = vsel %vm167, %v1314, 0.0
  %1319 = vadd.xlane.f32.xlu0 %v1318
  %v1320 = vpop.xlane.xlu0 %1319
  %v1321 = vsel %vm167, %v1315, 0.0
  %1322 = vadd.xlane.f32.xlu0 %v1321
  %v1323 = vpop.xlane.xlu0 %1322
  %v1324 = vmul.f32 %v1320, %v180
  %v1325 = vmul.f32 %v1323, %v180
  %v1326 = vsub.f32 %v1314, %v1324
  %v1327 = vsub.f32 %v1315, %v1325
  %v1328 = vmul.f32 %v1326, %v1326
  %v1329 = vmul.f32 %v1327, %v1327
  %v1330 = vsel %vm167, %v1328, 0.0
  %1331 = vadd.xlane.f32.xlu0 %v1330
  %v1332 = vpop.xlane.xlu0 %1331
  %v1333 = vsel %vm167, %v1329, 0.0
  %1334 = vadd.xlane.f32.xlu0 %v1333
  %v1335 = vpop.xlane.xlu0 %1334
  %v1336 = vmul.f32 %v1332, %v180
  %v1337 = vmul.f32 %v1335, %v180
  %v1338 = vadd.f32 %v1336, 1e-12
  %v1339 = vadd.f32 %v1337, 1e-12
  %v1340 = vrsqrt.pop %v1338
  %v1341 = vmul.f32 %v1340, %v1338
  %v1342 = vmul.f32 %v1341, %v1340
  %v1343 = vmul.f32 0.5, %v1342
  %v1344 = vsub.f32 1.5, %v1343
  %v1345 = vmul.f32 %v1340, %v1344
  %vm1346 = vweird.f32 %v1338
  %vm1347 = vweird.f32 %v1340
  %vm1348 = vmor %vm1346, %vm1347
  %v1349 = vsel %vm1348, %v1340, %v1345
  %v1350 = vrsqrt.pop %v1339
  %v1351 = vmul.f32 %v1350, %v1339
  %v1352 = vmul.f32 %v1351, %v1350
  %v1353 = vmul.f32 0.5, %v1352
  %v1354 = vsub.f32 1.5, %v1353
  %v1355 = vmul.f32 %v1350, %v1354
  %vm1356 = vweird.f32 %v1339
  %vm1357 = vweird.f32 %v1350
  %vm1358 = vmor %vm1356, %vm1357
  %v1359 = vsel %vm1358, %v1350, %v1355
  %v1360 = vmul.f32 %v1326, %v1349
  %v1361 = vmul.f32 %v1327, %v1359
  %v1363 = vperm.slane %v1316, 0
  %v1365 = vmul.f32 %v1360, %v1363
  %v1366 = vmul.f32 %v1361, %v1363
  %v1368 = vperm.slane %v1317, 0
  %v1370 = vadd.f32 %v1365, %v1368
  %v1371 = vadd.f32 %v1366, %v1368
  %s1372 = scalar_lea.vmem %s8, 384
  %v1373 = vld [vmem:[%s1372] sm:$0xff]
  %v1374 = vld [vmem:[%s1372 + $0x8] sm:$0xff]
  %v1375 = vld [vmem:[%s1372 + $0x10] sm:$0xff]
  %v1376 = vld [vmem:[%s1372 + $0x18] sm:$0xff]
  %v1377 = vpack.c.bf16 %v1371, %v1370
  %v1378 = vpack.c.bf16 %v1374, %v1373
  %v1379 = vpack.c.bf16 %v1376, %v1375
  %s1380 = scalar_lea.vmem %s9, 12
  %v1381 = vld [vmem:[%s1380] sm:$0x1]
  %v1383 = vperm.slane %v1381, 0
  %v1386 = vsel %vm167, %v1377, 0
  %1388 = vmatpush.bf16.msra.mxu0 0
  %1389 = vmatpush.bf16.msra.mxu0 0
  %1390 = vmatpush.bf16.msra.mxu0 0
  %1391 = vmatpush.bf16.msra.mxu0 0
  %1392 = vmatpush.bf16.msra.mxu0 0
  %1393 = vmatpush.bf16.msra.mxu0 0
  %1394 = vmatpush.bf16.msra.mxu0 %v1379
  %1395 = vmatpush.bf16.msra.mxu0 %v1378
  %1396 = vmatmul.bf16.gmra.mxu0 %v1386
  %v1397 = vpop.f32.mrf.mxu0
  %v1398 = vadd.f32 %v1383, %v1397
  %v1399 = vpop.f32.mrf.mxu0
  %v1400 = vadd.f32 %v1383, %v1399
  %1401 = vdwg.mxu0
  %s1402 = scalar_lea.vmem %s8, 512
  %v1403 = vld [vmem:[%s1402] sm:$0xff]
  %v1404 = vld [vmem:[%s1402 + $0x8] sm:$0xff]
  %v1405 = vld [vmem:[%s1402 + $0x10] sm:$0xff]
  %v1406 = vld [vmem:[%s1402 + $0x18] sm:$0xff]
  %v1407 = vpack.c.bf16 %v1404, %v1403
  %v1408 = vpack.c.bf16 %v1406, %v1405
  %s1409 = scalar_lea.vmem %s9, 16
  %v1410 = vld [vmem:[%s1409] sm:$0x1]
  %v1412 = vperm.slane %v1410, 0
  %1414 = vmatpush.bf16.msra.mxu0 0
  %1415 = vmatpush.bf16.msra.mxu0 0
  %1416 = vmatpush.bf16.msra.mxu0 0
  %1417 = vmatpush.bf16.msra.mxu0 0
  %1418 = vmatpush.bf16.msra.mxu0 0
  %1419 = vmatpush.bf16.msra.mxu0 0
  %1420 = vmatpush.bf16.msra.mxu0 %v1408
  %1421 = vmatpush.bf16.msra.mxu0 %v1407
  %1422 = vmatmul.bf16.gmra.mxu0 %v1386
  %v1423 = vpop.f32.mrf.mxu0
  %v1424 = vadd.f32 %v1412, %v1423
  %v1425 = vpop.f32.mrf.mxu0
  %v1426 = vadd.f32 %v1412, %v1425
  %1427 = vdwg.mxu0
  %s1428 = scalar_lea.vmem %s8, 640
  %v1429 = vld [vmem:[%s1428] sm:$0xff]
  %v1430 = vld [vmem:[%s1428 + $0x8] sm:$0xff]
  %v1431 = vld [vmem:[%s1428 + $0x10] sm:$0xff]
  %v1432 = vld [vmem:[%s1428 + $0x18] sm:$0xff]
  %v1433 = vpack.c.bf16 %v1430, %v1429
  %v1434 = vpack.c.bf16 %v1432, %v1431
  %s1435 = scalar_lea.vmem %s9, 20
  %v1436 = vld [vmem:[%s1435] sm:$0x1]
  %v1438 = vperm.slane %v1436, 0
  %1440 = vmatpush.bf16.msra.mxu0 0
  %1441 = vmatpush.bf16.msra.mxu0 0
  %1442 = vmatpush.bf16.msra.mxu0 0
  %1443 = vmatpush.bf16.msra.mxu0 0
  %1444 = vmatpush.bf16.msra.mxu0 0
  %1445 = vmatpush.bf16.msra.mxu0 0
  %1446 = vmatpush.bf16.msra.mxu0 %v1434
  %1447 = vmatpush.bf16.msra.mxu0 %v1433
  %1448 = vmatmul.bf16.gmra.mxu0 %v1386
  %v1449 = vpop.f32.mrf.mxu0
  %v1450 = vadd.f32 %v1438, %v1449
  %v1451 = vpop.f32.mrf.mxu0
  %v1452 = vadd.f32 %v1438, %v1451
  %1453 = vdwg.mxu0
  %v1455 = vsel %vm316, %v1398, 0
  %v1458 = vsel %vm316, %v1424, 0
  %1460 = vmatpush.xpose.msra.mxu0 0.0
  %1461 = vmatpush.xpose.msra.mxu0 0.0
  %1462 = vmatpush.xpose.msra.mxu0 0.0
  %1463 = vmatpush.xpose.msra.mxu0 0.0
  %1464 = vmatpush.xpose.msra.mxu0 0.0
  %1465 = vmatpush.xpose.msra.mxu0 0.0
  %1466 = vmatpush.xpose.msra.mxu0 0.0
  %1467 = vmatpush.xpose.msra.mxu0 0.0
  %1468 = vmatpush.xpose.msra.mxu0 0.0
  %1469 = vmatpush.xpose.msra.mxu0 0.0
  %1470 = vmatpush.xpose.msra.mxu0 0.0
  %1471 = vmatpush.xpose.msra.mxu0 0.0
  %1472 = vmatpush.xpose.msra.mxu0 0.0
  %1473 = vmatpush.xpose.msra.mxu0 0.0
  %1474 = vmatpush.xpose.msra.mxu0 0.0
  %1475 = vmatpush.xpose.msra.mxu0 %v1458
  %1476 = vmatmul.f32.gmra.mxu0 %v1455
  %v1477 = vpop.f32.mrf.mxu0
  %v1478 = vadd.f32 0.0, %v1477
  %1479 = vdwg.mxu0
  %v1480 = vmul.f32 %v1478, 0.35355338
  %v1481 = vadd.f32 %v1480, %v345
  %v1482 = vsel %vm316, %v1481, -inf
  %1483 = vmax.xlane.f32.xlu0 %v1482
  %v1484 = vpop.xlane.xlu0 %1483
  %v1485 = vsub.f32 %v1481, %v1484
  %v1486 = vmul.f32 %v1485, 1.442695
  %v1487 = vpow.pop %v1486
  %v1488 = vsel %vm316, %v1487, 0.0
  %1489 = vadd.xlane.f32.xlu0 %v1488
  %v1490 = vpop.xlane.xlu0 %1489
  %v1491 = vrcp.pop %v1490
  %v1492 = vmul.f32 %v1487, %v1491
  %v1494 = vsel %vm316, %v1492, 0
  %1496 = vmatpush.msra.mxu0 0.0
  %1497 = vmatpush.msra.mxu0 0.0
  %1498 = vmatpush.msra.mxu0 0.0
  %1499 = vmatpush.msra.mxu0 0.0
  %1500 = vmatpush.msra.mxu0 0.0
  %1501 = vmatpush.msra.mxu0 0.0
  %1502 = vmatpush.msra.mxu0 0.0
  %1503 = vmatpush.msra.mxu0 0.0
  %1504 = vmatpush.msra.mxu0 0.0
  %1505 = vmatpush.msra.mxu0 0.0
  %1506 = vmatpush.msra.mxu0 0.0
  %1507 = vmatpush.msra.mxu0 0.0
  %1508 = vmatpush.msra.mxu0 0.0
  %1509 = vmatpush.msra.mxu0 0.0
  %1510 = vmatpush.msra.mxu0 0.0
  %1511 = vmatpush.msra.mxu0 %v1450
  %1512 = vmatmul.f32.gmra.mxu0 %v1494
  %v1513 = vpop.f32.mrf.mxu0
  %v1514 = vadd.f32 0.0, %v1513
  %1515 = vdwg.mxu0
  %1516 = vst.msk [vmem:[#allocation2] sm:$0xff] %vm316, %v1514
  %v1518 = vsel %vm316, %v1400, 0
  %v1521 = vsel %vm316, %v1426, 0
  %1523 = vmatpush.xpose.msra.mxu0 0.0
  %1524 = vmatpush.xpose.msra.mxu0 0.0
  %1525 = vmatpush.xpose.msra.mxu0 0.0
  %1526 = vmatpush.xpose.msra.mxu0 0.0
  %1527 = vmatpush.xpose.msra.mxu0 0.0
  %1528 = vmatpush.xpose.msra.mxu0 0.0
  %1529 = vmatpush.xpose.msra.mxu0 0.0
  %1530 = vmatpush.xpose.msra.mxu0 0.0
  %1531 = vmatpush.xpose.msra.mxu0 0.0
  %1532 = vmatpush.xpose.msra.mxu0 0.0
  %1533 = vmatpush.xpose.msra.mxu0 0.0
  %1534 = vmatpush.xpose.msra.mxu0 0.0
  %1535 = vmatpush.xpose.msra.mxu0 0.0
  %1536 = vmatpush.xpose.msra.mxu0 0.0
  %1537 = vmatpush.xpose.msra.mxu0 0.0
  %1538 = vmatpush.xpose.msra.mxu0 %v1521
  %1539 = vmatmul.f32.gmra.mxu0 %v1518
  %v1540 = vpop.f32.mrf.mxu0
  %v1541 = vadd.f32 0.0, %v1540
  %1542 = vdwg.mxu0
  %v1543 = vmul.f32 %v1541, 0.35355338
  %v1544 = vadd.f32 %v1543, %v411
  %v1545 = vsel %vm316, %v1544, -inf
  %1546 = vmax.xlane.f32.xlu0 %v1545
  %v1547 = vpop.xlane.xlu0 %1546
  %v1548 = vsub.f32 %v1544, %v1547
  %v1549 = vmul.f32 %v1548, 1.442695
  %v1550 = vpow.pop %v1549
  %v1551 = vsel %vm316, %v1550, 0.0
  %1552 = vadd.xlane.f32.xlu0 %v1551
  %v1553 = vpop.xlane.xlu0 %1552
  %v1554 = vrcp.pop %v1553
  %v1555 = vmul.f32 %v1550, %v1554
  %v1557 = vsel %vm316, %v1555, 0
  %1559 = vmatpush.msra.mxu0 0.0
  %1560 = vmatpush.msra.mxu0 0.0
  %1561 = vmatpush.msra.mxu0 0.0
  %1562 = vmatpush.msra.mxu0 0.0
  %1563 = vmatpush.msra.mxu0 0.0
  %1564 = vmatpush.msra.mxu0 0.0
  %1565 = vmatpush.msra.mxu0 0.0
  %1566 = vmatpush.msra.mxu0 0.0
  %1567 = vmatpush.msra.mxu0 0.0
  %1568 = vmatpush.msra.mxu0 0.0
  %1569 = vmatpush.msra.mxu0 0.0
  %1570 = vmatpush.msra.mxu0 0.0
  %1571 = vmatpush.msra.mxu0 0.0
  %1572 = vmatpush.msra.mxu0 0.0
  %1573 = vmatpush.msra.mxu0 0.0
  %1574 = vmatpush.msra.mxu0 %v1452
  %1575 = vmatmul.f32.gmra.mxu0 %v1557
  %v1576 = vpop.f32.mrf.mxu0
  %v1577 = vadd.f32 0.0, %v1576
  %1578 = vdwg.mxu0
  %1579 = vst.msk [vmem:[#allocation2 + $0x8] sm:$0xff] %vm316, %v1577
  %v1580 = vld [vmem:[#allocation2] sm:$0xff]
  %v1581 = vld [vmem:[#allocation2 + $0x8] sm:$0xff]
  %s1582 = scalar_lea.vmem %s10, 32
  %v1583 = vld [vmem:[%s1582] sm:$0xff]
  %v1584 = vpack.c.bf16 %v1581, %v1580
  %v1585 = vpack.c.bf16 %v1583, %v1583
  %s1586 = scalar_lea.vmem %s8, 416
  %v1587 = vld [vmem:[%s1586] sm:$0xff]
  %v1588 = vld [vmem:[%s1586 + $0x8] sm:$0xff]
  %v1589 = vld [vmem:[%s1586 + $0x10] sm:$0xff]
  %v1590 = vld [vmem:[%s1586 + $0x18] sm:$0xff]
  %v1591 = vpack.c.bf16 %v1588, %v1587
  %v1592 = vpack.c.bf16 %v1590, %v1589
  %s1593 = scalar_lea.vmem %s9, 13
  %v1594 = vld [vmem:[%s1593] sm:$0x1]
  %v1596 = vperm.slane %v1594, 0
  %1598 = vmatpush.bf16.msra.mxu0 0
  %1599 = vmatpush.bf16.msra.mxu0 0
  %1600 = vmatpush.bf16.msra.mxu0 0
  %1601 = vmatpush.bf16.msra.mxu0 0
  %1602 = vmatpush.bf16.msra.mxu0 0
  %1603 = vmatpush.bf16.msra.mxu0 0
  %1604 = vmatpush.bf16.msra.mxu0 %v1592
  %1605 = vmatpush.bf16.msra.mxu0 %v1591
  %1606 = vmatmul.bf16.gmra.mxu0 %v1386
  %v1607 = vpop.f32.mrf.mxu0
  %v1608 = vadd.f32 %v1596, %v1607
  %v1609 = vpop.f32.mrf.mxu0
  %v1610 = vadd.f32 %v1596, %v1609
  %1611 = vdwg.mxu0
  %s1612 = scalar_lea.vmem %s8, 544
  %v1613 = vld [vmem:[%s1612] sm:$0xff]
  %v1614 = vld [vmem:[%s1612 + $0x8] sm:$0xff]
  %v1615 = vld [vmem:[%s1612 + $0x10] sm:$0xff]
  %v1616 = vld [vmem:[%s1612 + $0x18] sm:$0xff]
  %v1617 = vpack.c.bf16 %v1614, %v1613
  %v1618 = vpack.c.bf16 %v1616, %v1615
  %s1619 = scalar_lea.vmem %s9, 17
  %v1620 = vld [vmem:[%s1619] sm:$0x1]
  %v1622 = vperm.slane %v1620, 0
  %1624 = vmatpush.bf16.msra.mxu0 0
  %1625 = vmatpush.bf16.msra.mxu0 0
  %1626 = vmatpush.bf16.msra.mxu0 0
  %1627 = vmatpush.bf16.msra.mxu0 0
  %1628 = vmatpush.bf16.msra.mxu0 0
  %1629 = vmatpush.bf16.msra.mxu0 0
  %1630 = vmatpush.bf16.msra.mxu0 %v1618
  %1631 = vmatpush.bf16.msra.mxu0 %v1617
  %1632 = vmatmul.bf16.gmra.mxu0 %v1386
  %v1633 = vpop.f32.mrf.mxu0
  %v1634 = vadd.f32 %v1622, %v1633
  %v1635 = vpop.f32.mrf.mxu0
  %v1636 = vadd.f32 %v1622, %v1635
  %1637 = vdwg.mxu0
  %s1638 = scalar_lea.vmem %s8, 672
  %v1639 = vld [vmem:[%s1638] sm:$0xff]
  %v1640 = vld [vmem:[%s1638 + $0x8] sm:$0xff]
  %v1641 = vld [vmem:[%s1638 + $0x10] sm:$0xff]
  %v1642 = vld [vmem:[%s1638 + $0x18] sm:$0xff]
  %v1643 = vpack.c.bf16 %v1640, %v1639
  %v1644 = vpack.c.bf16 %v1642, %v1641
  %s1645 = scalar_lea.vmem %s9, 21
  %v1646 = vld [vmem:[%s1645] sm:$0x1]
  %v1648 = vperm.slane %v1646, 0
  %1650 = vmatpush.bf16.msra.mxu0 0
  %1651 = vmatpush.bf16.msra.mxu0 0
  %1652 = vmatpush.bf16.msra.mxu0 0
  %1653 = vmatpush.bf16.msra.mxu0 0
  %1654 = vmatpush.bf16.msra.mxu0 0
  %1655 = vmatpush.bf16.msra.mxu0 0
  %1656 = vmatpush.bf16.msra.mxu0 %v1644
  %1657 = vmatpush.bf16.msra.mxu0 %v1643
  %1658 = vmatmul.bf16.gmra.mxu0 %v1386
  %v1659 = vpop.f32.mrf.mxu0
  %v1660 = vadd.f32 %v1648, %v1659
  %v1661 = vpop.f32.mrf.mxu0
  %v1662 = vadd.f32 %v1648, %v1661
  %1663 = vdwg.mxu0
  %v1665 = vsel %vm316, %v1608, 0
  %v1668 = vsel %vm316, %v1634, 0
  %1670 = vmatpush.xpose.msra.mxu0 0.0
  %1671 = vmatpush.xpose.msra.mxu0 0.0
  %1672 = vmatpush.xpose.msra.mxu0 0.0
  %1673 = vmatpush.xpose.msra.mxu0 0.0
  %1674 = vmatpush.xpose.msra.mxu0 0.0
  %1675 = vmatpush.xpose.msra.mxu0 0.0
  %1676 = vmatpush.xpose.msra.mxu0 0.0
  %1677 = vmatpush.xpose.msra.mxu0 0.0
  %1678 = vmatpush.xpose.msra.mxu0 0.0
  %1679 = vmatpush.xpose.msra.mxu0 0.0
  %1680 = vmatpush.xpose.msra.mxu0 0.0
  %1681 = vmatpush.xpose.msra.mxu0 0.0
  %1682 = vmatpush.xpose.msra.mxu0 0.0
  %1683 = vmatpush.xpose.msra.mxu0 0.0
  %1684 = vmatpush.xpose.msra.mxu0 0.0
  %1685 = vmatpush.xpose.msra.mxu0 %v1668
  %1686 = vmatmul.f32.gmra.mxu0 %v1665
  %v1687 = vpop.f32.mrf.mxu0
  %v1688 = vadd.f32 0.0, %v1687
  %1689 = vdwg.mxu0
  %v1690 = vmul.f32 %v1688, 0.35355338
  %v1691 = vadd.f32 %v1690, %v345
  %v1692 = vsel %vm316, %v1691, -inf
  %1693 = vmax.xlane.f32.xlu0 %v1692
  %v1694 = vpop.xlane.xlu0 %1693
  %v1695 = vsub.f32 %v1691, %v1694
  %v1696 = vmul.f32 %v1695, 1.442695
  %v1697 = vpow.pop %v1696
  %v1698 = vsel %vm316, %v1697, 0.0
  %1699 = vadd.xlane.f32.xlu0 %v1698
  %v1700 = vpop.xlane.xlu0 %1699
  %v1701 = vrcp.pop %v1700
  %v1702 = vmul.f32 %v1697, %v1701
  %v1704 = vsel %vm316, %v1702, 0
  %1706 = vmatpush.msra.mxu0 0.0
  %1707 = vmatpush.msra.mxu0 0.0
  %1708 = vmatpush.msra.mxu0 0.0
  %1709 = vmatpush.msra.mxu0 0.0
  %1710 = vmatpush.msra.mxu0 0.0
  %1711 = vmatpush.msra.mxu0 0.0
  %1712 = vmatpush.msra.mxu0 0.0
  %1713 = vmatpush.msra.mxu0 0.0
  %1714 = vmatpush.msra.mxu0 0.0
  %1715 = vmatpush.msra.mxu0 0.0
  %1716 = vmatpush.msra.mxu0 0.0
  %1717 = vmatpush.msra.mxu0 0.0
  %1718 = vmatpush.msra.mxu0 0.0
  %1719 = vmatpush.msra.mxu0 0.0
  %1720 = vmatpush.msra.mxu0 0.0
  %1721 = vmatpush.msra.mxu0 %v1660
  %1722 = vmatmul.f32.gmra.mxu0 %v1704
  %v1723 = vpop.f32.mrf.mxu0
  %v1724 = vadd.f32 0.0, %v1723
  %1725 = vdwg.mxu0
  %1726 = vst.msk [vmem:[#allocation2] sm:$0xff] %vm316, %v1724
  %v1728 = vsel %vm316, %v1610, 0
  %v1731 = vsel %vm316, %v1636, 0
  %1733 = vmatpush.xpose.msra.mxu0 0.0
  %1734 = vmatpush.xpose.msra.mxu0 0.0
  %1735 = vmatpush.xpose.msra.mxu0 0.0
  %1736 = vmatpush.xpose.msra.mxu0 0.0
  %1737 = vmatpush.xpose.msra.mxu0 0.0
  %1738 = vmatpush.xpose.msra.mxu0 0.0
  %1739 = vmatpush.xpose.msra.mxu0 0.0
  %1740 = vmatpush.xpose.msra.mxu0 0.0
  %1741 = vmatpush.xpose.msra.mxu0 0.0
  %1742 = vmatpush.xpose.msra.mxu0 0.0
  %1743 = vmatpush.xpose.msra.mxu0 0.0
  %1744 = vmatpush.xpose.msra.mxu0 0.0
  %1745 = vmatpush.xpose.msra.mxu0 0.0
  %1746 = vmatpush.xpose.msra.mxu0 0.0
  %1747 = vmatpush.xpose.msra.mxu0 0.0
  %1748 = vmatpush.xpose.msra.mxu0 %v1731
  %1749 = vmatmul.f32.gmra.mxu0 %v1728
  %v1750 = vpop.f32.mrf.mxu0
  %v1751 = vadd.f32 0.0, %v1750
  %1752 = vdwg.mxu0
  %v1753 = vmul.f32 %v1751, 0.35355338
  %v1754 = vadd.f32 %v1753, %v411
  %v1755 = vsel %vm316, %v1754, -inf
  %1756 = vmax.xlane.f32.xlu0 %v1755
  %v1757 = vpop.xlane.xlu0 %1756
  %v1758 = vsub.f32 %v1754, %v1757
  %v1759 = vmul.f32 %v1758, 1.442695
  %v1760 = vpow.pop %v1759
  %v1761 = vsel %vm316, %v1760, 0.0
  %1762 = vadd.xlane.f32.xlu0 %v1761
  %v1763 = vpop.xlane.xlu0 %1762
  %v1764 = vrcp.pop %v1763
  %v1765 = vmul.f32 %v1760, %v1764
  %v1767 = vsel %vm316, %v1765, 0
  %1769 = vmatpush.msra.mxu0 0.0
  %1770 = vmatpush.msra.mxu0 0.0
  %1771 = vmatpush.msra.mxu0 0.0
  %1772 = vmatpush.msra.mxu0 0.0
  %1773 = vmatpush.msra.mxu0 0.0
  %1774 = vmatpush.msra.mxu0 0.0
  %1775 = vmatpush.msra.mxu0 0.0
  %1776 = vmatpush.msra.mxu0 0.0
  %1777 = vmatpush.msra.mxu0 0.0
  %1778 = vmatpush.msra.mxu0 0.0
  %1779 = vmatpush.msra.mxu0 0.0
  %1780 = vmatpush.msra.mxu0 0.0
  %1781 = vmatpush.msra.mxu0 0.0
  %1782 = vmatpush.msra.mxu0 0.0
  %1783 = vmatpush.msra.mxu0 0.0
  %1784 = vmatpush.msra.mxu0 %v1662
  %1785 = vmatmul.f32.gmra.mxu0 %v1767
  %v1786 = vpop.f32.mrf.mxu0
  %v1787 = vadd.f32 0.0, %v1786
  %1788 = vdwg.mxu0
  %1789 = vst.msk [vmem:[#allocation2 + $0x8] sm:$0xff] %vm316, %v1787
  %v1790 = vld [vmem:[#allocation2] sm:$0xff]
  %v1791 = vld [vmem:[#allocation2 + $0x8] sm:$0xff]
  %s1792 = scalar_lea.vmem %s10, 40
  %v1793 = vld [vmem:[%s1792] sm:$0xff]
  %v1794 = vpack.c.bf16 %v1791, %v1790
  %v1795 = vpack.c.bf16 %v1793, %v1793
  %v1797 = vsel %vm316, %v1794, 0
  %v1800 = vsel %vm667, %v1795, 0
  %1802 = vmatpush.bf16.msra.mxu0 0
  %1803 = vmatpush.bf16.msra.mxu0 0
  %1804 = vmatpush.bf16.msra.mxu0 0
  %1805 = vmatpush.bf16.msra.mxu0 0
  %1806 = vmatpush.bf16.msra.mxu0 0
  %1807 = vmatpush.bf16.msra.mxu0 0
  %1808 = vmatpush.bf16.msra.mxu0 0
  %1809 = vmatpush.bf16.msra.mxu0 %v1800
  %1810 = vmatmul.bf16.gmra.mxu0 %v1797
  %v1811 = vpop.f32.mrf.mxu0
  %v1812 = vadd.f32 0.0, %v1811
  %v1813 = vpop.f32.mrf.mxu0
  %v1814 = vadd.f32 0.0, %v1813
  %1815 = vdwg.mxu0
  %v1817 = vsel %vm316, %v1584, 0
  %v1820 = vsel %vm667, %v1585, 0
  %1822 = vmatpush.bf16.msra.mxu0 0
  %1823 = vmatpush.bf16.msra.mxu0 0
  %1824 = vmatpush.bf16.msra.mxu0 0
  %1825 = vmatpush.bf16.msra.mxu0 0
  %1826 = vmatpush.bf16.msra.mxu0 0
  %1827 = vmatpush.bf16.msra.mxu0 0
  %1828 = vmatpush.bf16.msra.mxu0 0
  %1829 = vmatpush.bf16.msra.mxu0 %v1820
  %1830 = vmatmul.bf16.gmra.mxu0 %v1817
  %v1831 = vpop.f32.mrf.mxu0
  %v1832 = vadd.f32 %v1812, %v1831
  %v1833 = vpop.f32.mrf.mxu0
  %v1834 = vadd.f32 %v1814, %v1833
  %1835 = vdwg.mxu0
  %s1836 = scalar_lea.vmem %s8, 448
  %v1837 = vld [vmem:[%s1836] sm:$0xff]
  %v1838 = vld [vmem:[%s1836 + $0x8] sm:$0xff]
  %v1839 = vld [vmem:[%s1836 + $0x10] sm:$0xff]
  %v1840 = vld [vmem:[%s1836 + $0x18] sm:$0xff]
  %v1841 = vpack.c.bf16 %v1838, %v1837
  %v1842 = vpack.c.bf16 %v1840, %v1839
  %s1843 = scalar_lea.vmem %s9, 14
  %v1844 = vld [vmem:[%s1843] sm:$0x1]
  %v1846 = vperm.slane %v1844, 0
  %1848 = vmatpush.bf16.msra.mxu0 0
  %1849 = vmatpush.bf16.msra.mxu0 0
  %1850 = vmatpush.bf16.msra.mxu0 0
  %1851 = vmatpush.bf16.msra.mxu0 0
  %1852 = vmatpush.bf16.msra.mxu0 0
  %1853 = vmatpush.bf16.msra.mxu0 0
  %1854 = vmatpush.bf16.msra.mxu0 %v1842
  %1855 = vmatpush.bf16.msra.mxu0 %v1841
  %1856 = vmatmul.bf16.gmra.mxu0 %v1386
  %v1857 = vpop.f32.mrf.mxu0
  %v1858 = vadd.f32 %v1846, %v1857
  %v1859 = vpop.f32.mrf.mxu0
  %v1860 = vadd.f32 %v1846, %v1859
  %1861 = vdwg.mxu0
  %s1862 = scalar_lea.vmem %s8, 576
  %v1863 = vld [vmem:[%s1862] sm:$0xff]
  %v1864 = vld [vmem:[%s1862 + $0x8] sm:$0xff]
  %v1865 = vld [vmem:[%s1862 + $0x10] sm:$0xff]
  %v1866 = vld [vmem:[%s1862 + $0x18] sm:$0xff]
  %v1867 = vpack.c.bf16 %v1864, %v1863
  %v1868 = vpack.c.bf16 %v1866, %v1865
  %s1869 = scalar_lea.vmem %s9, 18
  %v1870 = vld [vmem:[%s1869] sm:$0x1]
  %v1872 = vperm.slane %v1870, 0
  %1874 = vmatpush.bf16.msra.mxu0 0
  %1875 = vmatpush.bf16.msra.mxu0 0
  %1876 = vmatpush.bf16.msra.mxu0 0
  %1877 = vmatpush.bf16.msra.mxu0 0
  %1878 = vmatpush.bf16.msra.mxu0 0
  %1879 = vmatpush.bf16.msra.mxu0 0
  %1880 = vmatpush.bf16.msra.mxu0 %v1868
  %1881 = vmatpush.bf16.msra.mxu0 %v1867
  %1882 = vmatmul.bf16.gmra.mxu0 %v1386
  %v1883 = vpop.f32.mrf.mxu0
  %v1884 = vadd.f32 %v1872, %v1883
  %v1885 = vpop.f32.mrf.mxu0
  %v1886 = vadd.f32 %v1872, %v1885
  %1887 = vdwg.mxu0
  %s1888 = scalar_lea.vmem %s8, 704
  %v1889 = vld [vmem:[%s1888] sm:$0xff]
  %v1890 = vld [vmem:[%s1888 + $0x8] sm:$0xff]
  %v1891 = vld [vmem:[%s1888 + $0x10] sm:$0xff]
  %v1892 = vld [vmem:[%s1888 + $0x18] sm:$0xff]
  %v1893 = vpack.c.bf16 %v1890, %v1889
  %v1894 = vpack.c.bf16 %v1892, %v1891
  %s1895 = scalar_lea.vmem %s9, 22
  %v1896 = vld [vmem:[%s1895] sm:$0x1]
  %v1898 = vperm.slane %v1896, 0
  %1900 = vmatpush.bf16.msra.mxu0 0
  %1901 = vmatpush.bf16.msra.mxu0 0
  %1902 = vmatpush.bf16.msra.mxu0 0
  %1903 = vmatpush.bf16.msra.mxu0 0
  %1904 = vmatpush.bf16.msra.mxu0 0
  %1905 = vmatpush.bf16.msra.mxu0 0
  %1906 = vmatpush.bf16.msra.mxu0 %v1894
  %1907 = vmatpush.bf16.msra.mxu0 %v1893
  %1908 = vmatmul.bf16.gmra.mxu0 %v1386
  %v1909 = vpop.f32.mrf.mxu0
  %v1910 = vadd.f32 %v1898, %v1909
  %v1911 = vpop.f32.mrf.mxu0
  %v1912 = vadd.f32 %v1898, %v1911
  %1913 = vdwg.mxu0
  %v1915 = vsel %vm316, %v1858, 0
  %v1918 = vsel %vm316, %v1884, 0
  %1920 = vmatpush.xpose.msra.mxu0 0.0
  %1921 = vmatpush.xpose.msra.mxu0 0.0
  %1922 = vmatpush.xpose.msra.mxu0 0.0
  %1923 = vmatpush.xpose.msra.mxu0 0.0
  %1924 = vmatpush.xpose.msra.mxu0 0.0
  %1925 = vmatpush.xpose.msra.mxu0 0.0
  %1926 = vmatpush.xpose.msra.mxu0 0.0
  %1927 = vmatpush.xpose.msra.mxu0 0.0
  %1928 = vmatpush.xpose.msra.mxu0 0.0
  %1929 = vmatpush.xpose.msra.mxu0 0.0
  %1930 = vmatpush.xpose.msra.mxu0 0.0
  %1931 = vmatpush.xpose.msra.mxu0 0.0
  %1932 = vmatpush.xpose.msra.mxu0 0.0
  %1933 = vmatpush.xpose.msra.mxu0 0.0
  %1934 = vmatpush.xpose.msra.mxu0 0.0
  %1935 = vmatpush.xpose.msra.mxu0 %v1918
  %1936 = vmatmul.f32.gmra.mxu0 %v1915
  %v1937 = vpop.f32.mrf.mxu0
  %v1938 = vadd.f32 0.0, %v1937
  %1939 = vdwg.mxu0
  %v1940 = vmul.f32 %v1938, 0.35355338
  %v1941 = vadd.f32 %v1940, %v345
  %v1942 = vsel %vm316, %v1941, -inf
  %1943 = vmax.xlane.f32.xlu0 %v1942
  %v1944 = vpop.xlane.xlu0 %1943
  %v1945 = vsub.f32 %v1941, %v1944
  %v1946 = vmul.f32 %v1945, 1.442695
  %v1947 = vpow.pop %v1946
  %v1948 = vsel %vm316, %v1947, 0.0
  %1949 = vadd.xlane.f32.xlu0 %v1948
  %v1950 = vpop.xlane.xlu0 %1949
  %v1951 = vrcp.pop %v1950
  %v1952 = vmul.f32 %v1947, %v1951
  %v1954 = vsel %vm316, %v1952, 0
  %1956 = vmatpush.msra.mxu0 0.0
  %1957 = vmatpush.msra.mxu0 0.0
  %1958 = vmatpush.msra.mxu0 0.0
  %1959 = vmatpush.msra.mxu0 0.0
  %1960 = vmatpush.msra.mxu0 0.0
  %1961 = vmatpush.msra.mxu0 0.0
  %1962 = vmatpush.msra.mxu0 0.0
  %1963 = vmatpush.msra.mxu0 0.0
  %1964 = vmatpush.msra.mxu0 0.0
  %1965 = vmatpush.msra.mxu0 0.0
  %1966 = vmatpush.msra.mxu0 0.0
  %1967 = vmatpush.msra.mxu0 0.0
  %1968 = vmatpush.msra.mxu0 0.0
  %1969 = vmatpush.msra.mxu0 0.0
  %1970 = vmatpush.msra.mxu0 0.0
  %1971 = vmatpush.msra.mxu0 %v1910
  %1972 = vmatmul.f32.gmra.mxu0 %v1954
  %v1973 = vpop.f32.mrf.mxu0
  %v1974 = vadd.f32 0.0, %v1973
  %1975 = vdwg.mxu0
  %1976 = vst.msk [vmem:[#allocation2] sm:$0xff] %vm316, %v1974
  %v1978 = vsel %vm316, %v1860, 0
  %v1981 = vsel %vm316, %v1886, 0
  %1983 = vmatpush.xpose.msra.mxu0 0.0
  %1984 = vmatpush.xpose.msra.mxu0 0.0
  %1985 = vmatpush.xpose.msra.mxu0 0.0
  %1986 = vmatpush.xpose.msra.mxu0 0.0
  %1987 = vmatpush.xpose.msra.mxu0 0.0
  %1988 = vmatpush.xpose.msra.mxu0 0.0
  %1989 = vmatpush.xpose.msra.mxu0 0.0
  %1990 = vmatpush.xpose.msra.mxu0 0.0
  %1991 = vmatpush.xpose.msra.mxu0 0.0
  %1992 = vmatpush.xpose.msra.mxu0 0.0
  %1993 = vmatpush.xpose.msra.mxu0 0.0
  %1994 = vmatpush.xpose.msra.mxu0 0.0
  %1995 = vmatpush.xpose.msra.mxu0 0.0
  %1996 = vmatpush.xpose.msra.mxu0 0.0
  %1997 = vmatpush.xpose.msra.mxu0 0.0
  %1998 = vmatpush.xpose.msra.mxu0 %v1981
  %1999 = vmatmul.f32.gmra.mxu0 %v1978
  %v2000 = vpop.f32.mrf.mxu0
  %v2001 = vadd.f32 0.0, %v2000
  %2002 = vdwg.mxu0
  %v2003 = vmul.f32 %v2001, 0.35355338
  %v2004 = vadd.f32 %v2003, %v411
  %v2005 = vsel %vm316, %v2004, -inf
  %2006 = vmax.xlane.f32.xlu0 %v2005
  %v2007 = vpop.xlane.xlu0 %2006
  %v2008 = vsub.f32 %v2004, %v2007
  %v2009 = vmul.f32 %v2008, 1.442695
  %v2010 = vpow.pop %v2009
  %v2011 = vsel %vm316, %v2010, 0.0
  %2012 = vadd.xlane.f32.xlu0 %v2011
  %v2013 = vpop.xlane.xlu0 %2012
  %v2014 = vrcp.pop %v2013
  %v2015 = vmul.f32 %v2010, %v2014
  %v2017 = vsel %vm316, %v2015, 0
  %2019 = vmatpush.msra.mxu0 0.0
  %2020 = vmatpush.msra.mxu0 0.0
  %2021 = vmatpush.msra.mxu0 0.0
  %2022 = vmatpush.msra.mxu0 0.0
  %2023 = vmatpush.msra.mxu0 0.0
  %2024 = vmatpush.msra.mxu0 0.0
  %2025 = vmatpush.msra.mxu0 0.0
  %2026 = vmatpush.msra.mxu0 0.0
  %2027 = vmatpush.msra.mxu0 0.0
  %2028 = vmatpush.msra.mxu0 0.0
  %2029 = vmatpush.msra.mxu0 0.0
  %2030 = vmatpush.msra.mxu0 0.0
  %2031 = vmatpush.msra.mxu0 0.0
  %2032 = vmatpush.msra.mxu0 0.0
  %2033 = vmatpush.msra.mxu0 0.0
  %2034 = vmatpush.msra.mxu0 %v1912
  %2035 = vmatmul.f32.gmra.mxu0 %v2017
  %v2036 = vpop.f32.mrf.mxu0
  %v2037 = vadd.f32 0.0, %v2036
  %2038 = vdwg.mxu0
  %2039 = vst.msk [vmem:[#allocation2 + $0x8] sm:$0xff] %vm316, %v2037
  %v2040 = vld [vmem:[#allocation2] sm:$0xff]
  %v2041 = vld [vmem:[#allocation2 + $0x8] sm:$0xff]
  %s2042 = scalar_lea.vmem %s10, 48
  %v2043 = vld [vmem:[%s2042] sm:$0xff]
  %v2044 = vpack.c.bf16 %v2041, %v2040
  %v2045 = vpack.c.bf16 %v2043, %v2043
  %v2047 = vsel %vm316, %v2044, 0
  %v2050 = vsel %vm667, %v2045, 0
  %2052 = vmatpush.bf16.msra.mxu0 0
  %2053 = vmatpush.bf16.msra.mxu0 0
  %2054 = vmatpush.bf16.msra.mxu0 0
  %2055 = vmatpush.bf16.msra.mxu0 0
  %2056 = vmatpush.bf16.msra.mxu0 0
  %2057 = vmatpush.bf16.msra.mxu0 0
  %2058 = vmatpush.bf16.msra.mxu0 0
  %2059 = vmatpush.bf16.msra.mxu0 %v2050
  %2060 = vmatmul.bf16.gmra.mxu0 %v2047
  %v2061 = vpop.f32.mrf.mxu0
  %v2062 = vadd.f32 0.0, %v2061
  %v2063 = vpop.f32.mrf.mxu0
  %v2064 = vadd.f32 0.0, %v2063
  %2065 = vdwg.mxu0
  %v2066 = vadd.f32 %v1832, %v2062
  %v2067 = vadd.f32 %v1834, %v2064
  %s2068 = scalar_lea.vmem %s8, 480
  %v2069 = vld [vmem:[%s2068] sm:$0xff]
  %v2070 = vld [vmem:[%s2068 + $0x8] sm:$0xff]
  %v2071 = vld [vmem:[%s2068 + $0x10] sm:$0xff]
  %v2072 = vld [vmem:[%s2068 + $0x18] sm:$0xff]
  %v2073 = vpack.c.bf16 %v2070, %v2069
  %v2074 = vpack.c.bf16 %v2072, %v2071
  %s2075 = scalar_lea.vmem %s9, 15
  %v2076 = vld [vmem:[%s2075] sm:$0x1]
  %v2078 = vperm.slane %v2076, 0
  %2080 = vmatpush.bf16.msra.mxu0 0
  %2081 = vmatpush.bf16.msra.mxu0 0
  %2082 = vmatpush.bf16.msra.mxu0 0
  %2083 = vmatpush.bf16.msra.mxu0 0
  %2084 = vmatpush.bf16.msra.mxu0 0
  %2085 = vmatpush.bf16.msra.mxu0 0
  %2086 = vmatpush.bf16.msra.mxu0 %v2074
  %2087 = vmatpush.bf16.msra.mxu0 %v2073
  %2088 = vmatmul.bf16.gmra.mxu0 %v1386
  %v2089 = vpop.f32.mrf.mxu0
  %v2090 = vadd.f32 %v2078, %v2089
  %v2091 = vpop.f32.mrf.mxu0
  %v2092 = vadd.f32 %v2078, %v2091
  %2093 = vdwg.mxu0
  %s2094 = scalar_lea.vmem %s8, 608
  %v2095 = vld [vmem:[%s2094] sm:$0xff]
  %v2096 = vld [vmem:[%s2094 + $0x8] sm:$0xff]
  %v2097 = vld [vmem:[%s2094 + $0x10] sm:$0xff]
  %v2098 = vld [vmem:[%s2094 + $0x18] sm:$0xff]
  %v2099 = vpack.c.bf16 %v2096, %v2095
  %v2100 = vpack.c.bf16 %v2098, %v2097
  %s2101 = scalar_lea.vmem %s9, 19
  %v2102 = vld [vmem:[%s2101] sm:$0x1]
  %v2104 = vperm.slane %v2102, 0
  %2106 = vmatpush.bf16.msra.mxu0 0
  %2107 = vmatpush.bf16.msra.mxu0 0
  %2108 = vmatpush.bf16.msra.mxu0 0
  %2109 = vmatpush.bf16.msra.mxu0 0
  %2110 = vmatpush.bf16.msra.mxu0 0
  %2111 = vmatpush.bf16.msra.mxu0 0
  %2112 = vmatpush.bf16.msra.mxu0 %v2100
  %2113 = vmatpush.bf16.msra.mxu0 %v2099
  %2114 = vmatmul.bf16.gmra.mxu0 %v1386
  %v2115 = vpop.f32.mrf.mxu0
  %v2116 = vadd.f32 %v2104, %v2115
  %v2117 = vpop.f32.mrf.mxu0
  %v2118 = vadd.f32 %v2104, %v2117
  %2119 = vdwg.mxu0
  %s2120 = scalar_lea.vmem %s8, 736
  %v2121 = vld [vmem:[%s2120] sm:$0xff]
  %v2122 = vld [vmem:[%s2120 + $0x8] sm:$0xff]
  %v2123 = vld [vmem:[%s2120 + $0x10] sm:$0xff]
  %v2124 = vld [vmem:[%s2120 + $0x18] sm:$0xff]
  %v2125 = vpack.c.bf16 %v2122, %v2121
  %v2126 = vpack.c.bf16 %v2124, %v2123
  %s2127 = scalar_lea.vmem %s9, 23
  %v2128 = vld [vmem:[%s2127] sm:$0x1]
  %v2130 = vperm.slane %v2128, 0
  %2132 = vmatpush.bf16.msra.mxu0 0
  %2133 = vmatpush.bf16.msra.mxu0 0
  %2134 = vmatpush.bf16.msra.mxu0 0
  %2135 = vmatpush.bf16.msra.mxu0 0
  %2136 = vmatpush.bf16.msra.mxu0 0
  %2137 = vmatpush.bf16.msra.mxu0 0
  %2138 = vmatpush.bf16.msra.mxu0 %v2126
  %2139 = vmatpush.bf16.msra.mxu0 %v2125
  %2140 = vmatmul.bf16.gmra.mxu0 %v1386
  %v2141 = vpop.f32.mrf.mxu0
  %v2142 = vadd.f32 %v2130, %v2141
  %v2143 = vpop.f32.mrf.mxu0
  %v2144 = vadd.f32 %v2130, %v2143
  %2145 = vdwg.mxu0
  %v2147 = vsel %vm316, %v2090, 0
  %v2150 = vsel %vm316, %v2116, 0
  %2152 = vmatpush.xpose.msra.mxu0 0.0
  %2153 = vmatpush.xpose.msra.mxu0 0.0
  %2154 = vmatpush.xpose.msra.mxu0 0.0
  %2155 = vmatpush.xpose.msra.mxu0 0.0
  %2156 = vmatpush.xpose.msra.mxu0 0.0
  %2157 = vmatpush.xpose.msra.mxu0 0.0
  %2158 = vmatpush.xpose.msra.mxu0 0.0
  %2159 = vmatpush.xpose.msra.mxu0 0.0
  %2160 = vmatpush.xpose.msra.mxu0 0.0
  %2161 = vmatpush.xpose.msra.mxu0 0.0
  %2162 = vmatpush.xpose.msra.mxu0 0.0
  %2163 = vmatpush.xpose.msra.mxu0 0.0
  %2164 = vmatpush.xpose.msra.mxu0 0.0
  %2165 = vmatpush.xpose.msra.mxu0 0.0
  %2166 = vmatpush.xpose.msra.mxu0 0.0
  %2167 = vmatpush.xpose.msra.mxu0 %v2150
  %2168 = vmatmul.f32.gmra.mxu0 %v2147
  %v2169 = vpop.f32.mrf.mxu0
  %v2170 = vadd.f32 0.0, %v2169
  %2171 = vdwg.mxu0
  %v2172 = vmul.f32 %v2170, 0.35355338
  %v2173 = vadd.f32 %v2172, %v345
  %v2174 = vsel %vm316, %v2173, -inf
  %2175 = vmax.xlane.f32.xlu0 %v2174
  %v2176 = vpop.xlane.xlu0 %2175
  %v2177 = vsub.f32 %v2173, %v2176
  %v2178 = vmul.f32 %v2177, 1.442695
  %v2179 = vpow.pop %v2178
  %v2180 = vsel %vm316, %v2179, 0.0
  %2181 = vadd.xlane.f32.xlu0 %v2180
  %v2182 = vpop.xlane.xlu0 %2181
  %v2183 = vrcp.pop %v2182
  %v2184 = vmul.f32 %v2179, %v2183
  %v2186 = vsel %vm316, %v2184, 0
  %2188 = vmatpush.msra.mxu0 0.0
  %2189 = vmatpush.msra.mxu0 0.0
  %2190 = vmatpush.msra.mxu0 0.0
  %2191 = vmatpush.msra.mxu0 0.0
  %2192 = vmatpush.msra.mxu0 0.0
  %2193 = vmatpush.msra.mxu0 0.0
  %2194 = vmatpush.msra.mxu0 0.0
  %2195 = vmatpush.msra.mxu0 0.0
  %2196 = vmatpush.msra.mxu0 0.0
  %2197 = vmatpush.msra.mxu0 0.0
  %2198 = vmatpush.msra.mxu0 0.0
  %2199 = vmatpush.msra.mxu0 0.0
  %2200 = vmatpush.msra.mxu0 0.0
  %2201 = vmatpush.msra.mxu0 0.0
  %2202 = vmatpush.msra.mxu0 0.0
  %2203 = vmatpush.msra.mxu0 %v2142
  %2204 = vmatmul.f32.gmra.mxu0 %v2186
  %v2205 = vpop.f32.mrf.mxu0
  %v2206 = vadd.f32 0.0, %v2205
  %2207 = vdwg.mxu0
  %2208 = vst.msk [vmem:[#allocation2] sm:$0xff] %vm316, %v2206
  %v2210 = vsel %vm316, %v2092, 0
  %v2213 = vsel %vm316, %v2118, 0
  %2215 = vmatpush.xpose.msra.mxu0 0.0
  %2216 = vmatpush.xpose.msra.mxu0 0.0
  %2217 = vmatpush.xpose.msra.mxu0 0.0
  %2218 = vmatpush.xpose.msra.mxu0 0.0
  %2219 = vmatpush.xpose.msra.mxu0 0.0
  %2220 = vmatpush.xpose.msra.mxu0 0.0
  %2221 = vmatpush.xpose.msra.mxu0 0.0
  %2222 = vmatpush.xpose.msra.mxu0 0.0
  %2223 = vmatpush.xpose.msra.mxu0 0.0
  %2224 = vmatpush.xpose.msra.mxu0 0.0
  %2225 = vmatpush.xpose.msra.mxu0 0.0
  %2226 = vmatpush.xpose.msra.mxu0 0.0
  %2227 = vmatpush.xpose.msra.mxu0 0.0
  %2228 = vmatpush.xpose.msra.mxu0 0.0
  %2229 = vmatpush.xpose.msra.mxu0 0.0
  %2230 = vmatpush.xpose.msra.mxu0 %v2213
  %2231 = vmatmul.f32.gmra.mxu0 %v2210
  %v2232 = vpop.f32.mrf.mxu0
  %v2233 = vadd.f32 0.0, %v2232
  %2234 = vdwg.mxu0
  %v2235 = vmul.f32 %v2233, 0.35355338
  %v2236 = vadd.f32 %v2235, %v411
  %v2237 = vsel %vm316, %v2236, -inf
  %2238 = vmax.xlane.f32.xlu0 %v2237
  %v2239 = vpop.xlane.xlu0 %2238
  %v2240 = vsub.f32 %v2236, %v2239
  %v2241 = vmul.f32 %v2240, 1.442695
  %v2242 = vpow.pop %v2241
  %v2243 = vsel %vm316, %v2242, 0.0
  %2244 = vadd.xlane.f32.xlu0 %v2243
  %v2245 = vpop.xlane.xlu0 %2244
  %v2246 = vrcp.pop %v2245
  %v2247 = vmul.f32 %v2242, %v2246
  %v2249 = vsel %vm316, %v2247, 0
  %2251 = vmatpush.msra.mxu0 0.0
  %2252 = vmatpush.msra.mxu0 0.0
  %2253 = vmatpush.msra.mxu0 0.0
  %2254 = vmatpush.msra.mxu0 0.0
  %2255 = vmatpush.msra.mxu0 0.0
  %2256 = vmatpush.msra.mxu0 0.0
  %2257 = vmatpush.msra.mxu0 0.0
  %2258 = vmatpush.msra.mxu0 0.0
  %2259 = vmatpush.msra.mxu0 0.0
  %2260 = vmatpush.msra.mxu0 0.0
  %2261 = vmatpush.msra.mxu0 0.0
  %2262 = vmatpush.msra.mxu0 0.0
  %2263 = vmatpush.msra.mxu0 0.0
  %2264 = vmatpush.msra.mxu0 0.0
  %2265 = vmatpush.msra.mxu0 0.0
  %2266 = vmatpush.msra.mxu0 %v2144
  %2267 = vmatmul.f32.gmra.mxu0 %v2249
  %v2268 = vpop.f32.mrf.mxu0
  %v2269 = vadd.f32 0.0, %v2268
  %2270 = vdwg.mxu0
  %2271 = vst.msk [vmem:[#allocation2 + $0x8] sm:$0xff] %vm316, %v2269
  %v2272 = vld [vmem:[#allocation2] sm:$0xff]
  %v2273 = vld [vmem:[#allocation2 + $0x8] sm:$0xff]
  %s2274 = scalar_lea.vmem %s10, 56
  %v2275 = vld [vmem:[%s2274] sm:$0xff]
  %v2276 = vpack.c.bf16 %v2273, %v2272
  %v2277 = vpack.c.bf16 %v2275, %v2275
  %v2279 = vsel %vm316, %v2276, 0
  %v2282 = vsel %vm667, %v2277, 0
  %2284 = vmatpush.bf16.msra.mxu0 0
  %2285 = vmatpush.bf16.msra.mxu0 0
  %2286 = vmatpush.bf16.msra.mxu0 0
  %2287 = vmatpush.bf16.msra.mxu0 0
  %2288 = vmatpush.bf16.msra.mxu0 0
  %2289 = vmatpush.bf16.msra.mxu0 0
  %2290 = vmatpush.bf16.msra.mxu0 0
  %2291 = vmatpush.bf16.msra.mxu0 %v2282
  %2292 = vmatmul.bf16.gmra.mxu0 %v2279
  %v2293 = vpop.f32.mrf.mxu0
  %v2294 = vadd.f32 0.0, %v2293
  %v2295 = vpop.f32.mrf.mxu0
  %v2296 = vadd.f32 0.0, %v2295
  %2297 = vdwg.mxu0
  %v2298 = vadd.f32 %v2066, %v2294
  %v2299 = vadd.f32 %v2067, %v2296
  %s2300 = scalar_lea.vmem %s11, 1
  %v2301 = vld [vmem:[%s2300] sm:$0x1]
  %v2303 = vperm.slane %v2301, 0
  %v2305 = vadd.f32 %v2298, %v2303
  %v2306 = vadd.f32 %v2299, %v2303
  %v2307 = vadd.f32 %v2305, %v1370
  %v2308 = vadd.f32 %v2306, %v1371
  %s2309 = scalar_lea.vmem %s12, 1
  %v2310 = vld [vmem:[%s2309] sm:$0x1]
  %s2311 = scalar_lea.vmem %s13, 1
  %v2312 = vld [vmem:[%s2311] sm:$0x1]
  %v2313 = vsel %vm167, %v2307, 0.0
  %2314 = vadd.xlane.f32.xlu0 %v2313
  %v2315 = vpop.xlane.xlu0 %2314
  %v2316 = vsel %vm167, %v2308, 0.0
  %2317 = vadd.xlane.f32.xlu0 %v2316
  %v2318 = vpop.xlane.xlu0 %2317
  %v2319 = vmul.f32 %v2315, %v180
  %v2320 = vmul.f32 %v2318, %v180
  %v2321 = vsub.f32 %v2307, %v2319
  %v2322 = vsub.f32 %v2308, %v2320
  %v2323 = vmul.f32 %v2321, %v2321
  %v2324 = vmul.f32 %v2322, %v2322
  %v2325 = vsel %vm167, %v2323, 0.0
  %2326 = vadd.xlane.f32.xlu0 %v2325
  %v2327 = vpop.xlane.xlu0 %2326
  %v2328 = vsel %vm167, %v2324, 0.0
  %2329 = vadd.xlane.f32.xlu0 %v2328
  %v2330 = vpop.xlane.xlu0 %2329
  %v2331 = vmul.f32 %v2327, %v180
  %v2332 = vmul.f32 %v2330, %v180
  %v2333 = vadd.f32 %v2331, 1e-12
  %v2334 = vadd.f32 %v2332, 1e-12
  %v2335 = vrsqrt.pop %v2333
  %v2336 = vmul.f32 %v2335, %v2333
  %v2337 = vmul.f32 %v2336, %v2335
  %v2338 = vmul.f32 0.5, %v2337
  %v2339 = vsub.f32 1.5, %v2338
  %v2340 = vmul.f32 %v2335, %v2339
  %vm2341 = vweird.f32 %v2333
  %vm2342 = vweird.f32 %v2335
  %vm2343 = vmor %vm2341, %vm2342
  %v2344 = vsel %vm2343, %v2335, %v2340
  %v2345 = vrsqrt.pop %v2334
  %v2346 = vmul.f32 %v2345, %v2334
  %v2347 = vmul.f32 %v2346, %v2345
  %v2348 = vmul.f32 0.5, %v2347
  %v2349 = vsub.f32 1.5, %v2348
  %v2350 = vmul.f32 %v2345, %v2349
  %vm2351 = vweird.f32 %v2334
  %vm2352 = vweird.f32 %v2345
  %vm2353 = vmor %vm2351, %vm2352
  %v2354 = vsel %vm2353, %v2345, %v2350
  %v2355 = vmul.f32 %v2321, %v2344
  %v2356 = vmul.f32 %v2322, %v2354
  %v2358 = vperm.slane %v2310, 0
  %v2360 = vmul.f32 %v2355, %v2358
  %v2361 = vmul.f32 %v2356, %v2358
  %v2363 = vperm.slane %v2312, 0
  %v2365 = vadd.f32 %v2360, %v2363
  %v2366 = vadd.f32 %v2361, %v2363
  %s2367 = scalar_lea.vmem %s14, 32
  %v2368 = vld [vmem:[%s2367] sm:$0xff]
  %v2369 = vld [vmem:[%s2367 + $0x8] sm:$0xff]
  %v2370 = vld [vmem:[%s2367 + $0x10] sm:$0xff]
  %v2371 = vld [vmem:[%s2367 + $0x18] sm:$0xff]
  %v2372 = vpack.c.bf16 %v2366, %v2365
  %v2373 = vpack.c.bf16 %v2369, %v2368
  %v2374 = vpack.c.bf16 %v2371, %v2370
  %s2375 = scalar_lea.vmem %s15, 1
  %v2376 = vld [vmem:[%s2375] sm:$0x1]
  %v2378 = vperm.slane %v2376, 0
  %v2381 = vsel %vm167, %v2372, 0
  %2383 = vmatpush.bf16.msra.mxu0 0
  %2384 = vmatpush.bf16.msra.mxu0 0
  %2385 = vmatpush.bf16.msra.mxu0 0
  %2386 = vmatpush.bf16.msra.mxu0 0
  %2387 = vmatpush.bf16.msra.mxu0 0
  %2388 = vmatpush.bf16.msra.mxu0 0
  %2389 = vmatpush.bf16.msra.mxu0 %v2374
  %2390 = vmatpush.bf16.msra.mxu0 %v2373
  %2391 = vmatmul.bf16.gmra.mxu0 %v2381
  %v2392 = vpop.f32.mrf.mxu0
  %v2393 = vadd.f32 %v2378, %v2392
  %v2394 = vpop.f32.mrf.mxu0
  %v2395 = vadd.f32 %v2378, %v2394
  %2396 = vdwg.mxu0
  %v2397 = vmul.f32 %v2393, 0.5
  %v2398 = vmul.f32 %v2395, 0.5
  %v2399 = vmul.f32 %v2393, 0.044715
  %v2400 = vmul.f32 %v2395, 0.044715
  %v2401 = vmul.f32 %v2399, %v2393
  %v2402 = vmul.f32 %v2400, %v2395
  %v2403 = vmul.f32 %v2401, %v2393
  %v2404 = vmul.f32 %v2402, %v2395
  %v2405 = vadd.f32 %v2393, %v2403
  %v2406 = vadd.f32 %v2395, %v2404
  %v2407 = vmul.f32 %v2405, 0.7978846
  %v2408 = vmul.f32 %v2406, 0.7978846
  %v2409 = vtanh.pop %v2407
  %v2410 = vtanh.pop %v2408
  %v2411 = vadd.f32 %v2409, 1.0
  %v2412 = vadd.f32 %v2410, 1.0
  %v2413 = vmul.f32 %v2397, %v2411
  %v2414 = vmul.f32 %v2398, %v2412
  %s2415 = scalar_lea.vmem %s16, 64
  %v2416 = vld [vmem:[%s2415] sm:$0xff]
  %v2417 = vld [vmem:[%s2415 + $0x8] sm:$0xff]
  %v2418 = vld [vmem:[%s2415 + $0x10] sm:$0xff]
  %v2419 = vld [vmem:[%s2415 + $0x18] sm:$0xff]
  %v2420 = vld [vmem:[%s2415 + $0x20] sm:$0xff]
  %v2421 = vld [vmem:[%s2415 + $0x28] sm:$0xff]
  %v2422 = vld [vmem:[%s2415 + $0x30] sm:$0xff]
  %v2423 = vld [vmem:[%s2415 + $0x38] sm:$0xff]
  %v2424 = vpack.c.bf16 %v2414, %v2413
  %v2425 = vpack.c.bf16 %v2417, %v2416
  %v2426 = vpack.c.bf16 %v2419, %v2418
  %v2427 = vpack.c.bf16 %v2421, %v2420
  %v2428 = vpack.c.bf16 %v2423, %v2422
  %s2429 = scalar_lea.vmem %s17, 1
  %v2430 = vld [vmem:[%s2429] sm:$0x1]
  %v2432 = vperm.slane %v2430, 0
  %v2435 = vsel %vm1296, %v2424, 0
  %2437 = vmatpush.bf16.msra.mxu0 0
  %2438 = vmatpush.bf16.msra.mxu0 0
  %2439 = vmatpush.bf16.msra.mxu0 0
  %2440 = vmatpush.bf16.msra.mxu0 0
  %2441 = vmatpush.bf16.msra.mxu0 %v2428
  %2442 = vmatpush.bf16.msra.mxu0 %v2427
  %2443 = vmatpush.bf16.msra.mxu0 %v2426
  %2444 = vmatpush.bf16.msra.mxu0 %v2425
  %2445 = vmatmul.bf16.gmra.mxu0 %v2435
  %v2446 = vpop.f32.mrf.mxu0
  %v2447 = vadd.f32 %v2432, %v2446
  %v2448 = vpop.f32.mrf.mxu0
  %v2449 = vadd.f32 %v2432, %v2448
  %2450 = vdwg.mxu0
  %v2451 = vadd.f32 %v2447, %v2365
  %v2452 = vadd.f32 %v2449, %v2366
  %s2453 = scalar_lea.vmem %s18, 1
  %v2454 = vld [vmem:[%s2453] sm:$0x1]
  %s2455 = scalar_lea.vmem %s19, 1
  %v2456 = vld [vmem:[%s2455] sm:$0x1]
  %v2457 = vsel %vm167, %v2451, 0.0
  %2458 = vadd.xlane.f32.xlu0 %v2457
  %v2459 = vpop.xlane.xlu0 %2458
  %v2460 = vsel %vm167, %v2452, 0.0
  %2461 = vadd.xlane.f32.xlu0 %v2460
  %v2462 = vpop.xlane.xlu0 %2461
  %v2463 = vmul.f32 %v2459, %v180
  %v2464 = vmul.f32 %v2462, %v180
  %v2465 = vsub.f32 %v2451, %v2463
  %v2466 = vsub.f32 %v2452, %v2464
  %v2467 = vmul.f32 %v2465, %v2465
  %v2468 = vmul.f32 %v2466, %v2466
  %v2469 = vsel %vm167, %v2467, 0.0
  %2470 = vadd.xlane.f32.xlu0 %v2469
  %v2471 = vpop.xlane.xlu0 %2470
  %v2472 = vsel %vm167, %v2468, 0.0
  %2473 = vadd.xlane.f32.xlu0 %v2472
  %v2474 = vpop.xlane.xlu0 %2473
  %v2475 = vmul.f32 %v2471, %v180
  %v2476 = vmul.f32 %v2474, %v180
  %v2477 = vadd.f32 %v2475, 1e-12
  %v2478 = vadd.f32 %v2476, 1e-12
  %v2479 = vrsqrt.pop %v2477
  %v2480 = vmul.f32 %v2479, %v2477
  %v2481 = vmul.f32 %v2480, %v2479
  %v2482 = vmul.f32 0.5, %v2481
  %v2483 = vsub.f32 1.5, %v2482
  %v2484 = vmul.f32 %v2479, %v2483
  %vm2485 = vweird.f32 %v2477
  %vm2486 = vweird.f32 %v2479
  %vm2487 = vmor %vm2485, %vm2486
  %v2488 = vsel %vm2487, %v2479, %v2484
  %v2489 = vrsqrt.pop %v2478
  %v2490 = vmul.f32 %v2489, %v2478
  %v2491 = vmul.f32 %v2490, %v2489
  %v2492 = vmul.f32 0.5, %v2491
  %v2493 = vsub.f32 1.5, %v2492
  %v2494 = vmul.f32 %v2489, %v2493
  %vm2495 = vweird.f32 %v2478
  %vm2496 = vweird.f32 %v2489
  %vm2497 = vmor %vm2495, %vm2496
  %v2498 = vsel %vm2497, %v2489, %v2494
  %v2499 = vmul.f32 %v2465, %v2488
  %v2500 = vmul.f32 %v2466, %v2498
  %v2502 = vperm.slane %v2454, 0
  %v2504 = vmul.f32 %v2499, %v2502
  %v2505 = vmul.f32 %v2500, %v2502
  %v2507 = vperm.slane %v2456, 0
  %v2509 = vadd.f32 %v2504, %v2507
  %v2510 = vadd.f32 %v2505, %v2507
  %v2511 = vld [vmem:[%s20] sm:$0xff]
  %v2512 = vld [vmem:[%s20 + $0x8] sm:$0xff]
  %v2513 = vld [vmem:[%s20 + $0x10] sm:$0xff]
  %v2514 = vld [vmem:[%s20 + $0x18] sm:$0xff]
  %v2515 = vpack.c.bf16 %v2510, %v2509
  %v2516 = vpack.c.bf16 %v2512, %v2511
  %v2517 = vpack.c.bf16 %v2514, %v2513
  %v2518 = vld [vmem:[%s21] sm:$0x1]
  %v2520 = vperm.slane %v2518, 0
  %v2523 = vsel %vm167, %v2515, 0
  %2525 = vmatpush.bf16.msra.mxu0 0
  %2526 = vmatpush.bf16.msra.mxu0 0
  %2527 = vmatpush.bf16.msra.mxu0 0
  %2528 = vmatpush.bf16.msra.mxu0 0
  %2529 = vmatpush.bf16.msra.mxu0 0
  %2530 = vmatpush.bf16.msra.mxu0 0
  %2531 = vmatpush.bf16.msra.mxu0 %v2517
  %2532 = vmatpush.bf16.msra.mxu0 %v2516
  %2533 = vmatmul.bf16.gmra.mxu0 %v2523
  %v2534 = vpop.f32.mrf.mxu0
  %v2535 = vadd.f32 %v2520, %v2534
  %v2536 = vpop.f32.mrf.mxu0
  %v2537 = vadd.f32 %v2520, %v2536
  %2538 = vdwg.mxu0
  %v2539 = vmul.f32 %v2535, 0.5
  %v2540 = vmul.f32 %v2537, 0.5
  %v2541 = vmul.f32 %v2535, 0.044715
  %v2542 = vmul.f32 %v2537, 0.044715
  %v2543 = vmul.f32 %v2541, %v2535
  %v2544 = vmul.f32 %v2542, %v2537
  %v2545 = vmul.f32 %v2543, %v2535
  %v2546 = vmul.f32 %v2544, %v2537
  %v2547 = vadd.f32 %v2535, %v2545
  %v2548 = vadd.f32 %v2537, %v2546
  %v2549 = vmul.f32 %v2547, 0.7978846
  %v2550 = vmul.f32 %v2548, 0.7978846
  %v2551 = vtanh.pop %v2549
  %v2552 = vtanh.pop %v2550
  %v2553 = vadd.f32 %v2551, 1.0
  %v2554 = vadd.f32 %v2552, 1.0
  %v2555 = vmul.f32 %v2539, %v2553
  %v2556 = vmul.f32 %v2540, %v2554
  %v2557 = vld [vmem:[%s22] sm:$0x1]
  %v2558 = vld [vmem:[%s23] sm:$0x1]
  %v2559 = vsel %vm167, %v2555, 0.0
  %2560 = vadd.xlane.f32.xlu0 %v2559
  %v2561 = vpop.xlane.xlu0 %2560
  %v2562 = vsel %vm167, %v2556, 0.0
  %2563 = vadd.xlane.f32.xlu0 %v2562
  %v2564 = vpop.xlane.xlu0 %2563
  %v2565 = vmul.f32 %v2561, %v180
  %v2566 = vmul.f32 %v2564, %v180
  %v2567 = vsub.f32 %v2555, %v2565
  %v2568 = vsub.f32 %v2556, %v2566
  %v2569 = vmul.f32 %v2567, %v2567
  %v2570 = vmul.f32 %v2568, %v2568
  %v2571 = vsel %vm167, %v2569, 0.0
  %2572 = vadd.xlane.f32.xlu0 %v2571
  %v2573 = vpop.xlane.xlu0 %2572
  %v2574 = vsel %vm167, %v2570, 0.0
  %2575 = vadd.xlane.f32.xlu0 %v2574
  %v2576 = vpop.xlane.xlu0 %2575
  %v2577 = vmul.f32 %v2573, %v180
  %v2578 = vmul.f32 %v2576, %v180
  %v2579 = vadd.f32 %v2577, 1e-12
  %v2580 = vadd.f32 %v2578, 1e-12
  %v2581 = vrsqrt.pop %v2579
  %v2582 = vmul.f32 %v2581, %v2579
  %v2583 = vmul.f32 %v2582, %v2581
  %v2584 = vmul.f32 0.5, %v2583
  %v2585 = vsub.f32 1.5, %v2584
  %v2586 = vmul.f32 %v2581, %v2585
  %vm2587 = vweird.f32 %v2579
  %vm2588 = vweird.f32 %v2581
  %vm2589 = vmor %vm2587, %vm2588
  %v2590 = vsel %vm2589, %v2581, %v2586
  %v2591 = vrsqrt.pop %v2580
  %v2592 = vmul.f32 %v2591, %v2580
  %v2593 = vmul.f32 %v2592, %v2591
  %v2594 = vmul.f32 0.5, %v2593
  %v2595 = vsub.f32 1.5, %v2594
  %v2596 = vmul.f32 %v2591, %v2595
  %vm2597 = vweird.f32 %v2580
  %vm2598 = vweird.f32 %v2591
  %vm2599 = vmor %vm2597, %vm2598
  %v2600 = vsel %vm2599, %v2591, %v2596
  %v2601 = vmul.f32 %v2567, %v2590
  %v2602 = vmul.f32 %v2568, %v2600
  %v2604 = vperm.slane %v2557, 0
  %v2606 = vmul.f32 %v2601, %v2604
  %v2607 = vmul.f32 %v2602, %v2604
  %v2609 = vperm.slane %v2558, 0
  %v2611 = vadd.f32 %v2606, %v2609
  %v2612 = vadd.f32 %v2607, %v2609
  %v2613 = vpack.c.bf16 %v2612, %v2611
  %v2614 = vld [vmem:[%s3] sm:$0xff]
  %v2615 = vld [vmem:[%s3 + $0x8] sm:$0xff]
  %v2616 = vld [vmem:[%s3 + $0x10] sm:$0xff]
  %v2617 = vld [vmem:[%s3 + $0x18] sm:$0xff]
  %v2618 = vld [vmem:[%s3 + $0x20] sm:$0xff]
  %v2619 = vld [vmem:[%s3 + $0x28] sm:$0xff]
  %v2620 = vld [vmem:[%s3 + $0x30] sm:$0xff]
  %v2621 = vld [vmem:[%s3 + $0x38] sm:$0xff]
  %v2622 = vld [vmem:[%s3 + $0x40] sm:$0xff]
  %v2623 = vld [vmem:[%s3 + $0x48] sm:$0xff]
  %v2624 = vld [vmem:[%s3 + $0x50] sm:$0xff]
  %v2625 = vld [vmem:[%s3 + $0x58] sm:$0xff]
  %v2626 = vld [vmem:[%s3 + $0x60] sm:$0xff]
  %v2627 = vld [vmem:[%s3 + $0x68] sm:$0xff]
  %v2628 = vld [vmem:[%s3 + $0x70] sm:$0xff]
  %v2629 = vld [vmem:[%s3 + $0x78] sm:$0xff]
  %v2630 = vpack.c.bf16 %v2615, %v2614
  %v2631 = vpack.c.bf16 %v2617, %v2616
  %v2632 = vpack.c.bf16 %v2619, %v2618
  %v2633 = vpack.c.bf16 %v2621, %v2620
  %v2634 = vpack.c.bf16 %v2623, %v2622
  %v2635 = vpack.c.bf16 %v2625, %v2624
  %v2636 = vpack.c.bf16 %v2627, %v2626
  %v2637 = vpack.c.bf16 %v2629, %v2628
  %v2638 = vld [vmem:[%s24] sm:$0x1]
  %v2640 = vperm.slane %v2638, 0
  %v2643 = vsel %vm167, %v2613, 0
  %v2646 = vsel %vm167, %v2630, 0
  %v2649 = vsel %vm167, %v2631, 0
  %v2652 = vsel %vm167, %v2632, 0
  %v2655 = vsel %vm167, %v2633, 0
  %v2658 = vsel %vm167, %v2634, 0
  %v2661 = vsel %vm167, %v2635, 0
  %v2664 = vsel %vm167, %v2636, 0
  %v2667 = vsel %vm167, %v2637, 0
  %2669 = vmatpush.bf16.xpose.msra.mxu0 %v2667
  %2670 = vmatpush.bf16.xpose.msra.mxu0 %v2664
  %2671 = vmatpush.bf16.xpose.msra.mxu0 %v2661
  %2672 = vmatpush.bf16.xpose.msra.mxu0 %v2658
  %2673 = vmatpush.bf16.xpose.msra.mxu0 %v2655
  %2674 = vmatpush.bf16.xpose.msra.mxu0 %v2652
  %2675 = vmatpush.bf16.xpose.msra.mxu0 %v2649
  %2676 = vmatpush.bf16.xpose.msra.mxu0 %v2646
  %2677 = vmatmul.bf16.gmra.mxu0 %v2643
  %v2678 = vpop.f32.mrf.mxu0
  %v2679 = vadd.f32 %v2640, %v2678
  %v2680 = vpop.f32.mrf.mxu0
  %v2681 = vadd.f32 %v2640, %v2680
  %2682 = vdwg.mxu0
  %2683 = vmax.xlane.f32.xlu0 %v2679
  %v2684 = vpop.xlane.xlu0 %2683
  %2685 = vmax.xlane.f32.xlu0 %v2681
  %v2686 = vpop.xlane.xlu0 %2685
  %vm2687 = vcmp.eq.f32.partialorder %v2679, %v2684
  %vm2688 = vcmp.eq.f32.partialorder %v2681, %v2686
  %v2689 = vsel %vm2687, %v84, 128
  %v2690 = vsel %vm2688, %v84, 128
  %v2691 = vand.u32 %v2689, 65535
  %v2692 = vshra.s32 %v2689, 16
  %v2693 = vcvt.s32.f32 %v2691
  %v2694 = vcvt.s32.f32 %v2692
  %2695 = vmin.xlane.f32.xlu0 %v2694
  %v2696 = vpop.xlane.xlu0 %2695
  %vm2697 = vcmp.eq.f32.partialorder %v2694, %v2696
  %v2698 = vsel %vm2697, %v2693, inf
  %2699 = vmin.xlane.f32.xlu0 %v2698
  %v2700 = vpop.xlane.xlu0 %2699
  %v2701 = vcvt.f32.s32 %v2700
  %v2702 = vcvt.f32.s32 %v2696
  %v2703 = vshll.u32 %v2702, 16
  %v2704 = vadd.s32 %v2703, %v2701
  %v2705 = vand.u32 %v2690, 65535
  %v2706 = vshra.s32 %v2690, 16
  %v2707 = vcvt.s32.f32 %v2705
  %v2708 = vcvt.s32.f32 %v2706
  %2709 = vmin.xlane.f32.xlu0 %v2708
  %v2710 = vpop.xlane.xlu0 %2709
  %vm2711 = vcmp.eq.f32.partialorder %v2708, %v2710
  %v2712 = vsel %vm2711, %v2707, inf
  %2713 = vmin.xlane.f32.xlu0 %v2712
  %v2714 = vpop.xlane.xlu0 %2713
  %v2715 = vcvt.f32.s32 %v2714
  %v2716 = vcvt.f32.s32 %v2710
  %v2717 = vshll.u32 %v2716, 16
  %v2718 = vadd.s32 %v2717, %v2715
  %vm2719 = vcmask 7168
  %2720 = vst.msk [vmem:[%s25] sm:$0xff] %vm2719, %v2704
  %2721 = vst.msk [vmem:[%s25 + $0x8] sm:$0xff] %vm2719, %v2718
  // Predicated region
  $region102: #{forward.1} parent=0 // pred_check
    _
  $region103: #{forward.1} parent=0 // pred_check_branch
    %2723 = sbr.rel (0) target = $region105
  $region104: #{forward.1} parent=0 // pred_region
    _
  $region105: #{forward.1} parent=0 // pred_fallthru
    _
  // Predicated region
  $region106: #{forward.1} parent=0 // pred_check
    _
  $region107: #{forward.1} parent=0 // pred_check_branch
    %2725 = sbr.rel (0) target = $region109
  $region108: #{forward.1} parent=0 // pred_region
    _
  $region109: #{forward.1} parent=0 // pred_fallthru
    _

</llo_original>
